<compile_context>
chip_gen: v7x
topology: tpu7x:2x2x1
jax: 0.10.0
libtpu: 0.0.40
codegen_flags: <defaults>
</compile_context>

<pallas_src>
import functools

import jax
import jax.numpy as jnp
from jax.experimental import pallas as pl
from jax.experimental.pallas import tpu as pltpu


# ----------------------------------------------------------------------------
# Model dims (scaled-down EfficientNet; see TODO at the bottom of the forward)
# ----------------------------------------------------------------------------
C_IN = 3          # RGB input
C0 = 16           # real stem / MBConv output channels
C0P = 128         # C0 padded to full MXU / lane width
CE = 64           # MBConv expanded channels
CSE = 8           # squeeze-excite hidden width
F = 128           # head channels (= classifier in_features, scaled down)
NCLS = 2          # Linear(in_features, 2)
K_STEM = 9 * C_IN       # 27 im2col columns
K_STEM_P = 32           # padded stem K

# Packed elementwise-parameter slab layout (rows of a (PACK_ROWS, 128) array).
ROW_STEM_S, ROW_STEM_B = 0, 1
ROW_EXP_S, ROW_EXP_B = 2, 3
ROW_DW_S, ROW_DW_B = 4, 5
ROW_SE1_B, ROW_SE2_B = 6, 7
ROW_PROJ_S, ROW_PROJ_B = 8, 9
ROW_HEAD_S, ROW_HEAD_B = 10, 11
ROW_CLS_B = 12
ROW_DW_W = 16           # rows 16..24 hold the 9 depthwise taps
PACK_ROWS = 32


def _silu(y):
    return y * jax.nn.sigmoid(y)


def _dw_compute_dtype():
    """bf16 tap accumulation on v6e/v7x (bf16 VPU); f32 on v5e and older."""
    try:
        kind = jax.devices()[0].device_kind.lower()
    except Exception:
        return jnp.float32
    if ("v6" in kind) or ("v7" in kind) or ("tpu7" in kind):
        return jnp.bfloat16
    return jnp.float32


# ----------------------------------------------------------------------------
# Single fused kernel (one grid step == one batch item):
#   stem conv (im2col matmul) + BN + SiLU
#   -> expansion 1x1 conv + BN + SiLU
#   -> in-kernel halo pad + 3x3 depthwise conv + BN + SiLU
#   -> squeeze-excite (GAP as matmul)
#   -> SE-gated projection 1x1 conv + BN + residual
#   -> head 1x1 conv + BN + SiLU -> GAP (matmul) -> Linear(F, 2)
# All intermediates stay in VMEM; Dropout(0.4) is identity at inference.
# ----------------------------------------------------------------------------
def fused_efficientnet_kernel(patches_ref, pp_ref, stem_w_ref, exp_w_ref,
                              se1_w_ref, se2_w_ref, proj_w_ref, head_w_ref,
                              cls_w_ref, o_ref, epad_ref, *, Ho, Wo, cdtype):
    f32, bf16 = jnp.float32, jnp.bfloat16
    HW = Ho * Wo

    def row(r, n=128):
        return pp_ref[r:r + 1, :n]        # (1, n) static slice of the param slab

    # ---- stem 3x3/s2 conv (im2col matmul, K padded to 32, N padded to 128) ----
    pat = patches_ref[0]                                               # (HW, 32) bf16
    y = jnp.dot(pat, stem_w_ref[...], preferred_element_type=f32)      # (HW, C0P)
    y = _silu(y * row(ROW_STEM_S) + row(ROW_STEM_B))                   # padded chans stay 0

    # ---- expansion 1x1 conv + BN + SiLU ----
    e = jnp.dot(y.astype(bf16), exp_w_ref[...], preferred_element_type=f32)  # (HW, CE)
    e = _silu(e * row(ROW_EXP_S, CE) + row(ROW_EXP_B, CE))

    # ---- in-kernel halo pad + 3x3 depthwise conv + folded BN + SiLU ----
    epad_ref[...] = jnp.zeros_like(epad_ref)                           # zero border
    epad_ref[1:Ho + 1, 1:Wo + 1, :] = e.reshape(Ho, Wo, CE).astype(cdtype)
    wdw = pp_ref[ROW_DW_W:ROW_DW_W + 9, :CE].astype(cdtype)            # (9, CE), loaded once
    acc = None
    for t in range(9):                                                 # static unrolled taps
        dy, dx = divmod(t, 3)
        term = epad_ref[dy:dy + Ho, dx:dx + Wo, :] * wdw[t]            # Ref-view window load
        acc = term if acc is None else acc + term
    d = acc.astype(f32) * row(ROW_DW_S, CE) + row(ROW_DW_B, CE)        # BN hoisted out of loop
    d = _silu(d).reshape(HW, CE)                                       # f32 epilogue

    # ---- squeeze-and-excite (global-average-pool done on the MXU) ----
    ones_row = jnp.full((1, HW), 1.0 / HW, dtype=bf16)
    sq = jnp.dot(ones_row, d.astype(bf16), preferred_element_type=f32)           # (1, CE)
    g = _silu(jnp.dot(sq.astype(bf16), se1_w_ref[...], preferred_element_type=f32)
              + row(ROW_SE1_B, CSE))                                             # (1, CSE)
    gate = jax.nn.sigmoid(
        jnp.dot(g.astype(bf16), se2_w_ref[...], preferred_element_type=f32)
        + row(ROW_SE2_B, CE))                                                    # (1, CE)

    # ---- SE-gated projection 1x1 conv + BN + residual (y is VMEM-resident) ----
    gated = (d * gate).astype(bf16)                                              # (HW, CE)
    p = jnp.dot(gated, proj_w_ref[...], preferred_element_type=f32)              # (HW, C0P)
    yb = p * row(ROW_PROJ_S) + row(ROW_PROJ_B) + y

    # ---- head 1x1 conv + BN + SiLU, GAP (matmul), classifier (Dropout == id) ----
    h = jnp.dot(yb.astype(bf16), head_w_ref[...], preferred_element_type=f32)    # (HW, F)
    h = _silu(h * row(ROW_HEAD_S) + row(ROW_HEAD_B))
    pooled = jnp.dot(ones_row, h.astype(bf16), preferred_element_type=f32)       # (1, F)
    logits = jnp.dot(pooled.astype(bf16), cls_w_ref[...], preferred_element_type=f32)
    o_ref[...] = (logits + row(ROW_CLS_B, NCLS)).reshape(1, 1, NCLS)


# ----------------------------------------------------------------------------
# Wrapper-side layout plumbing: im2col for the strided stem conv.
# ----------------------------------------------------------------------------
def im2col(x, k=3, stride=2, pad=1):
    B, H, W, _ = x.shape
    xp = jnp.pad(x, ((0, 0), (pad, pad), (pad, pad), (0, 0)))
    Ho = (H + 2 * pad - k) // stride + 1
    Wo = (W + 2 * pad - k) // stride + 1
    cols = [xp[:, dy:dy + stride * Ho:stride, dx:dx + stride * Wo:stride, :]
            for dy in range(k) for dx in range(k)]
    return jnp.concatenate(cols, axis=-1), Ho, Wo                      # (B, Ho, Wo, 9*C_IN)


# ----------------------------------------------------------------------------
# Parameters (deterministic synthetic; BN folded into per-channel scale/bias).
# Matmul weights are bf16 MXU operands padded to MXU-friendly widths; all
# elementwise scale/bias + depthwise weights live in one packed f32 slab.
# ----------------------------------------------------------------------------
def init_params(key):
    ks = jax.random.split(key, 13)
    bf16 = jnp.bfloat16

    def rnd(k, shape, scale=0.1):
        return scale * jax.random.normal(k, shape, jnp.float32)

    stem_w = rnd(ks[0], (K_STEM, C0))
    stem_b = rnd(ks[1], (C0,))
    exp_w = rnd(ks[2], (C0, CE))
    exp_b = rnd(ks[3], (CE,))
    dw_w = rnd(ks[4], (9, CE))
    dw_b = rnd(ks[5], (CE,))
    se1_w = rnd(ks[6], (CE, CSE))
    se1_b = rnd(ks[7], (CSE,))
    se2_w = rnd(ks[8], (CSE, CE))
    se2_b = rnd(ks[9], (CE,))
    proj_w = rnd(ks[10], (CE, C0))
    head_w = rnd(ks[11], (C0, F))
    cls_w = rnd(ks[12], (F, NCLS))

    # Zero-pad matmul weights to MXU-friendly widths (padded channels stay 0
    # end-to-end because padded scales are 1 and padded biases are 0).
    stem_w_p = jnp.zeros((K_STEM_P, C0P), jnp.float32).at[:K_STEM, :C0].set(stem_w)
    exp_w_p = jnp.zeros((C0P, CE), jnp.float32).at[:C0, :].set(exp_w)
    proj_w_p = jnp.zeros((CE, C0P), jnp.float32).at[:, :C0].set(proj_w)
    head_w_p = jnp.zeros((C0P, F), jnp.float32).at[:C0, :].set(head_w)

    # Packed elementwise-parameter slab: one (32, 128) f32 input instead of ~12.
    pp = jnp.zeros((PACK_ROWS, 128), jnp.float32)
    pp = pp.at[ROW_STEM_S, :].set(1.0)
    pp = pp.at[ROW_STEM_B, :C0].set(stem_b)
    pp = pp.at[ROW_EXP_S, :CE].set(1.0)
    pp = pp.at[ROW_EXP_B, :CE].set(exp_b)
    pp = pp.at[ROW_DW_S, :CE].set(1.0)
    pp = pp.at[ROW_DW_B, :CE].set(dw_b)
    pp = pp.at[ROW_SE1_B, :CSE].set(se1_b)
    pp = pp.at[ROW_SE2_B, :CE].set(se2_b)
    pp = pp.at[ROW_PROJ_S, :].set(1.0)
    pp = pp.at[ROW_HEAD_S, :].set(1.0)
    pp = pp.at[ROW_DW_W:ROW_DW_W + 9, :CE].set(dw_w)
    # ROW_PROJ_B / ROW_HEAD_B / ROW_CLS_B stay zero.

    return dict(
        pp=pp,
        stem_w=stem_w_p.astype(bf16),
        exp_w=exp_w_p.astype(bf16),
        se1_w=se1_w.astype(bf16),
        se2_w=se2_w.astype(bf16),
        proj_w=proj_w_p.astype(bf16),
        head_w=head_w_p.astype(bf16),
        cls_w=cls_w.astype(bf16),
    )


# ----------------------------------------------------------------------------
# Forward pass (TamperingEfficientNetClassifier.forward, eval mode)
# ----------------------------------------------------------------------------
def tampering_efficientnet_forward(params, x_nchw):
    # NCHW (PyTorch) -> NHWC (channels on the 128-lane axis)
    x = jnp.transpose(x_nchw, (0, 2, 3, 1)).astype(jnp.float32)
    B = x.shape[0]

    # Stem im2col (layout plumbing), K padded 27 -> 32, bf16 MXU operand.
    patches, Ho, Wo = im2col(x, k=3, stride=2, pad=1)
    HW = Ho * Wo
    patches = patches.reshape(B, HW, K_STEM)
    patches = jnp.pad(patches, ((0, 0), (0, 0), (0, K_STEM_P - K_STEM)))
    patches = patches.astype(jnp.bfloat16)

    cdtype = _dw_compute_dtype()
    kernel = functools.partial(fused_efficientnet_kernel, Ho=Ho, Wo=Wo, cdtype=cdtype)

    logits = pl.pallas_call(
        kernel,
        out_shape=jax.ShapeDtypeStruct((B, 1, NCLS), jnp.float32),
        grid=(B,),
        in_specs=[
            pl.BlockSpec((1, HW, K_STEM_P), lambda b: (b, 0, 0)),   # per-batch activations
            pl.BlockSpec((PACK_ROWS, 128), lambda b: (0, 0)),       # packed scale/bias/dw slab
            pl.BlockSpec((K_STEM_P, C0P), lambda b: (0, 0)),
            pl.BlockSpec((C0P, CE), lambda b: (0, 0)),
            pl.BlockSpec((CE, CSE), lambda b: (0, 0)),
            pl.BlockSpec((CSE, CE), lambda b: (0, 0)),
            pl.BlockSpec((CE, C0P), lambda b: (0, 0)),
            pl.BlockSpec((C0P, F), lambda b: (0, 0)),
            pl.BlockSpec((F, NCLS), lambda b: (0, 0)),
        ],
        out_specs=pl.BlockSpec((1, 1, NCLS), lambda b: (b, 0, 0)),
        scratch_shapes=[pltpu.VMEM((Ho + 2, Wo + 2, CE), cdtype)],  # in-kernel halo buffer
        compiler_params=pltpu.CompilerParams(
            dimension_semantics=("parallel",),       # batch items shard across v7x's 2 TCs
            vmem_limit_bytes=32 * 1024 * 1024),
    )(patches, params["pp"], params["stem_w"], params["exp_w"],
      params["se1_w"], params["se2_w"], params["proj_w"],
      params["head_w"], params["cls_w"])

    # TODO(synk): full EfficientNet-B2 backbone (7 MBConv stages, 260x260 input,
    # in_features=1408) is represented by one scaled-down MBConv stage; at real
    # B2 shapes this single fused kernel needs a spatial BlockSpec grid with
    # per-generation tile sizing (64 MiB VMEM on v7x) and an in-kernel direct
    # stem conv instead of the wrapper-side im2col.
    return logits.reshape(B, NCLS)


if __name__ == "__main__":
    key = jax.random.PRNGKey(0)
    params = init_params(key)
    x = jax.random.normal(jax.random.fold_in(key, 1), (2, 3, 32, 32), dtype=jnp.float32)

    fwd = jax.jit(tampering_efficientnet_forward)
    logits = fwd(params, x)
    jax.block_until_ready(logits)

    assert logits.shape == (2, NCLS) and logits.dtype == jnp.float32
    assert bool(jnp.all(jnp.isfinite(logits)))
    print("KERNEL_OK")
</pallas_src>

<mosaic_0001>
module attributes {stable_mosaic.version = 11 : i64} {
  func.func @fused_efficientnet_kernel(%arg0: i32, %arg1: memref<1x256x32xbf16, #tpu.memory_space<vmem>>, %arg2: memref<32x128xf32, #tpu.memory_space<vmem>>, %arg3: memref<32x128xbf16, #tpu.memory_space<vmem>>, %arg4: memref<128x64xbf16, #tpu.memory_space<vmem>>, %arg5: memref<64x8xbf16, #tpu.memory_space<vmem>>, %arg6: memref<8x64xbf16, #tpu.memory_space<vmem>>, %arg7: memref<64x128xbf16, #tpu.memory_space<vmem>>, %arg8: memref<128x128xbf16, #tpu.memory_space<vmem>>, %arg9: memref<128x2xbf16, #tpu.memory_space<vmem>>, %arg10: memref<1x1x2xf32, #tpu.memory_space<vmem>>, %arg11: memref<18x18x64xf32, #tpu.memory_space<vmem>>) attributes {dimension_semantics = [#tpu.dimension_semantics<parallel>], iteration_bounds = array<i64: 2>, scalar_prefetch = 0 : i64, scratch_operands = 1 : i64, tpu.core_type = #tpu.core_type<tc>, window_params = [{transform_indices = @transform_0, window_bounds = array<i64: 1, 256, 32>}, {pipeline_mode = #tpu.pipeline_mode<synchronous>, transform_indices = @transform_1, window_bounds = array<i64: 32, 128>}, {pipeline_mode = #tpu.pipeline_mode<synchronous>, transform_indices = @transform_2, window_bounds = array<i64: 32, 128>}, {pipeline_mode = #tpu.pipeline_mode<synchronous>, transform_indices = @transform_3, window_bounds = array<i64: 128, 64>}, {pipeline_mode = #tpu.pipeline_mode<synchronous>, transform_indices = @transform_4, window_bounds = array<i64: 64, 8>}, {pipeline_mode = #tpu.pipeline_mode<synchronous>, transform_indices = @transform_5, window_bounds = array<i64: 8, 64>}, {pipeline_mode = #tpu.pipeline_mode<synchronous>, transform_indices = @transform_6, window_bounds = array<i64: 64, 128>}, {pipeline_mode = #tpu.pipeline_mode<synchronous>, transform_indices = @transform_7, window_bounds = array<i64: 128, 128>}, {pipeline_mode = #tpu.pipeline_mode<synchronous>, transform_indices = @transform_8, window_bounds = array<i64: 128, 2>}, {transform_indices = @transform_9, window_bounds = array<i64: 1, 1, 2>}]} {
    %c0 = arith.constant 0 : index
    %c0_0 = arith.constant 0 : index
    %c0_1 = arith.constant 0 : index
    %0 = vector.load %arg1[%c0, %c0_0, %c0_1] : memref<1x256x32xbf16, #tpu.memory_space<vmem>>, vector<1x256x32xbf16>
    %1 = vector.shape_cast %0 : vector<1x256x32xbf16> to vector<256x32xbf16>
    %c0_2 = arith.constant 0 : index
    %c0_3 = arith.constant 0 : index
    %2 = vector.load %arg3[%c0_2, %c0_3] : memref<32x128xbf16, #tpu.memory_space<vmem>>, vector<32x128xbf16>
    %cst = arith.constant dense<0.000000e+00> : vector<256x128xf32>
    %3 = tpu.matmul %1, %2, %cst {dimension_numbers = #tpu.dot_dimension_numbers<[1], [0], [0], [1], [0, 0, 1, 1], [], []>} : vector<256x32xbf16>, vector<32x128xbf16>, vector<256x128xf32> -> vector<256x128xf32>
    %c0_4 = arith.constant 0 : index
    %c0_5 = arith.constant 0 : index
    %4 = vector.load %arg2[%c0_4, %c0_5] : memref<32x128xf32, #tpu.memory_space<vmem>>, vector<1x128xf32>
    %5 = vector.broadcast %4 : vector<1x128xf32> to vector<256x128xf32>
    %6 = arith.mulf %3, %5 : vector<256x128xf32>
    %c1 = arith.constant 1 : index
    %c0_6 = arith.constant 0 : index
    %7 = vector.load %arg2[%c1, %c0_6] : memref<32x128xf32, #tpu.memory_space<vmem>>, vector<1x128xf32>
    %8 = vector.broadcast %7 : vector<1x128xf32> to vector<256x128xf32>
    %9 = arith.addf %6, %8 : vector<256x128xf32>
    %10 = arith.negf %9 : vector<256x128xf32>
    %11 = math.exp %10 : vector<256x128xf32>
    %cst_7 = arith.constant 1.000000e+00 : f32
    %12 = vector.broadcast %cst_7 : f32 to vector<256x128xf32>
    %13 = arith.addf %12, %11 : vector<256x128xf32>
    %14 = arith.divf %12, %13 : vector<256x128xf32>
    %15 = arith.mulf %9, %14 : vector<256x128xf32>
    %16 = arith.truncf %15 : vector<256x128xf32> to vector<256x128xbf16>
    %c0_8 = arith.constant 0 : index
    %c0_9 = arith.constant 0 : index
    %17 = vector.load %arg4[%c0_8, %c0_9] : memref<128x64xbf16, #tpu.memory_space<vmem>>, vector<128x64xbf16>
    %cst_10 = arith.constant dense<0.000000e+00> : vector<256x64xf32>
    %18 = tpu.matmul %16, %17, %cst_10 {dimension_numbers = #tpu.dot_dimension_numbers<[1], [0], [0], [1], [0, 0, 1, 1], [], []>} : vector<256x128xbf16>, vector<128x64xbf16>, vector<256x64xf32> -> vector<256x64xf32>
    %c2 = arith.constant 2 : index
    %c0_11 = arith.constant 0 : index
    %19 = vector.load %arg2[%c2, %c0_11] : memref<32x128xf32, #tpu.memory_space<vmem>>, vector<1x64xf32>
    %20 = vector.broadcast %19 : vector<1x64xf32> to vector<256x64xf32>
    %21 = arith.mulf %18, %20 : vector<256x64xf32>
    %c3 = arith.constant 3 : index
    %c0_12 = arith.constant 0 : index
    %22 = vector.load %arg2[%c3, %c0_12] : memref<32x128xf32, #tpu.memory_space<vmem>>, vector<1x64xf32>
    %23 = vector.broadcast %22 : vector<1x64xf32> to vector<256x64xf32>
    %24 = arith.addf %21, %23 : vector<256x64xf32>
    %25 = arith.negf %24 : vector<256x64xf32>
    %26 = math.exp %25 : vector<256x64xf32>
    %cst_13 = arith.constant 1.000000e+00 : f32
    %27 = vector.broadcast %cst_13 : f32 to vector<256x64xf32>
    %28 = arith.addf %27, %26 : vector<256x64xf32>
    %29 = arith.divf %27, %28 : vector<256x64xf32>
    %30 = arith.mulf %24, %29 : vector<256x64xf32>
    %cst_14 = arith.constant 0.000000e+00 : f32
    %31 = vector.broadcast %cst_14 : f32 to vector<18x18x64xf32>
    %c0_15 = arith.constant 0 : index
    %c0_16 = arith.constant 0 : index
    %c0_17 = arith.constant 0 : index
    %32 = vector.load %arg11[%c0_15, %c0_16, %c0_17] : memref<18x18x64xf32, #tpu.memory_space<vmem>>, vector<18x18x64xf32>
    tpu.vector_store %arg11[%c0_15, %c0_16, %c0_17], %31 {strides = array<i32>} : memref<18x18x64xf32, #tpu.memory_space<vmem>>, vector<18x18x64xf32>,
    %33 = vector.shape_cast %30 : vector<256x64xf32> to vector<16x16x64xf32>
    %c1_18 = arith.constant 1 : index
    %c1_19 = arith.constant 1 : index
    %c0_20 = arith.constant 0 : index
    %34 = vector.load %arg11[%c1_18, %c1_19, %c0_20] : memref<18x18x64xf32, #tpu.memory_space<vmem>>, vector<16x16x64xf32>
    tpu.vector_store %arg11[%c1_18, %c1_19, %c0_20], %33 {strides = array<i32>} : memref<18x18x64xf32, #tpu.memory_space<vmem>>, vector<16x16x64xf32>,
    %c16 = arith.constant 16 : index
    %c0_21 = arith.constant 0 : index
    %35 = vector.load %arg2[%c16, %c0_21] : memref<32x128xf32, #tpu.memory_space<vmem>>, vector<9x64xf32>
    %c0_22 = arith.constant 0 : index
    %c0_23 = arith.constant 0 : index
    %c0_24 = arith.constant 0 : index
    %36 = vector.load %arg11[%c0_22, %c0_23, %c0_24] : memref<18x18x64xf32, #tpu.memory_space<vmem>>, vector<16x16x64xf32>
    %37 = vector.extract_strided_slice %35 {offsets = [0, 0], sizes = [1, 64], strides = [1, 1]} : vector<9x64xf32> to vector<1x64xf32>
    %38 = vector.shape_cast %37 : vector<1x64xf32> to vector<64xf32>
    %39 = vector.shape_cast %38 : vector<64xf32> to vector<1x1x64xf32>
    %40 = vector.broadcast %39 : vector<1x1x64xf32> to vector<16x16x64xf32>
    %41 = arith.mulf %36, %40 : vector<16x16x64xf32>
    %c0_25 = arith.constant 0 : index
    %c1_26 = arith.constant 1 : index
    %c0_27 = arith.constant 0 : index
    %42 = vector.load %arg11[%c0_25, %c1_26, %c0_27] : memref<18x18x64xf32, #tpu.memory_space<vmem>>, vector<16x16x64xf32>
    %43 = vector.extract_strided_slice %35 {offsets = [1, 0], sizes = [1, 64], strides = [1, 1]} : vector<9x64xf32> to vector<1x64xf32>
    %44 = vector.shape_cast %43 : vector<1x64xf32> to vector<64xf32>
    %45 = vector.shape_cast %44 : vector<64xf32> to vector<1x1x64xf32>
    %46 = vector.broadcast %45 : vector<1x1x64xf32> to vector<16x16x64xf32>
    %47 = arith.mulf %42, %46 : vector<16x16x64xf32>
    %48 = arith.addf %41, %47 : vector<16x16x64xf32>
    %c0_28 = arith.constant 0 : index
    %c2_29 = arith.constant 2 : index
    %c0_30 = arith.constant 0 : index
    %49 = vector.load %arg11[%c0_28, %c2_29, %c0_30] : memref<18x18x64xf32, #tpu.memory_space<vmem>>, vector<16x16x64xf32>
    %50 = vector.extract_strided_slice %35 {offsets = [2, 0], sizes = [1, 64], strides = [1, 1]} : vector<9x64xf32> to vector<1x64xf32>
    %51 = vector.shape_cast %50 : vector<1x64xf32> to vector<64xf32>
    %52 = vector.shape_cast %51 : vector<64xf32> to vector<1x1x64xf32>
    %53 = vector.broadcast %52 : vector<1x1x64xf32> to vector<16x16x64xf32>
    %54 = arith.mulf %49, %53 : vector<16x16x64xf32>
    %55 = arith.addf %48, %54 : vector<16x16x64xf32>
    %c1_31 = arith.constant 1 : index
    %c0_32 = arith.constant 0 : index
    %c0_33 = arith.constant 0 : index
    %56 = vector.load %arg11[%c1_31, %c0_32, %c0_33] : memref<18x18x64xf32, #tpu.memory_space<vmem>>, vector<16x16x64xf32>
    %57 = vector.extract_strided_slice %35 {offsets = [3, 0], sizes = [1, 64], strides = [1, 1]} : vector<9x64xf32> to vector<1x64xf32>
    %58 = vector.shape_cast %57 : vector<1x64xf32> to vector<64xf32>
    %59 = vector.shape_cast %58 : vector<64xf32> to vector<1x1x64xf32>
    %60 = vector.broadcast %59 : vector<1x1x64xf32> to vector<16x16x64xf32>
    %61 = arith.mulf %56, %60 : vector<16x16x64xf32>
    %62 = arith.addf %55, %61 : vector<16x16x64xf32>
    %c1_34 = arith.constant 1 : index
    %c1_35 = arith.constant 1 : index
    %c0_36 = arith.constant 0 : index
    %63 = vector.load %arg11[%c1_34, %c1_35, %c0_36] : memref<18x18x64xf32, #tpu.memory_space<vmem>>, vector<16x16x64xf32>
    %64 = vector.extract_strided_slice %35 {offsets = [4, 0], sizes = [1, 64], strides = [1, 1]} : vector<9x64xf32> to vector<1x64xf32>
    %65 = vector.shape_cast %64 : vector<1x64xf32> to vector<64xf32>
    %66 = vector.shape_cast %65 : vector<64xf32> to vector<1x1x64xf32>
    %67 = vector.broadcast %66 : vector<1x1x64xf32> to vector<16x16x64xf32>
    %68 = arith.mulf %63, %67 : vector<16x16x64xf32>
    %69 = arith.addf %62, %68 : vector<16x16x64xf32>
    %c1_37 = arith.constant 1 : index
    %c2_38 = arith.constant 2 : index
    %c0_39 = arith.constant 0 : index
    %70 = vector.load %arg11[%c1_37, %c2_38, %c0_39] : memref<18x18x64xf32, #tpu.memory_space<vmem>>, vector<16x16x64xf32>
    %71 = vector.extract_strided_slice %35 {offsets = [5, 0], sizes = [1, 64], strides = [1, 1]} : vector<9x64xf32> to vector<1x64xf32>
    %72 = vector.shape_cast %71 : vector<1x64xf32> to vector<64xf32>
    %73 = vector.shape_cast %72 : vector<64xf32> to vector<1x1x64xf32>
    %74 = vector.broadcast %73 : vector<1x1x64xf32> to vector<16x16x64xf32>
    %75 = arith.mulf %70, %74 : vector<16x16x64xf32>
    %76 = arith.addf %69, %75 : vector<16x16x64xf32>
    %c2_40 = arith.constant 2 : index
    %c0_41 = arith.constant 0 : index
    %c0_42 = arith.constant 0 : index
    %77 = vector.load %arg11[%c2_40, %c0_41, %c0_42] : memref<18x18x64xf32, #tpu.memory_space<vmem>>, vector<16x16x64xf32>
    %78 = vector.extract_strided_slice %35 {offsets = [6, 0], sizes = [1, 64], strides = [1, 1]} : vector<9x64xf32> to vector<1x64xf32>
    %79 = vector.shape_cast %78 : vector<1x64xf32> to vector<64xf32>
    %80 = vector.shape_cast %79 : vector<64xf32> to vector<1x1x64xf32>
    %81 = vector.broadcast %80 : vector<1x1x64xf32> to vector<16x16x64xf32>
    %82 = arith.mulf %77, %81 : vector<16x16x64xf32>
    %83 = arith.addf %76, %82 : vector<16x16x64xf32>
    %c2_43 = arith.constant 2 : index
    %c1_44 = arith.constant 1 : index
    %c0_45 = arith.constant 0 : index
    %84 = vector.load %arg11[%c2_43, %c1_44, %c0_45] : memref<18x18x64xf32, #tpu.memory_space<vmem>>, vector<16x16x64xf32>
    %85 = vector.extract_strided_slice %35 {offsets = [7, 0], sizes = [1, 64], strides = [1, 1]} : vector<9x64xf32> to vector<1x64xf32>
    %86 = vector.shape_cast %85 : vector<1x64xf32> to vector<64xf32>
    %87 = vector.shape_cast %86 : vector<64xf32> to vector<1x1x64xf32>
    %88 = vector.broadcast %87 : vector<1x1x64xf32> to vector<16x16x64xf32>
    %89 = arith.mulf %84, %88 : vector<16x16x64xf32>
    %90 = arith.addf %83, %89 : vector<16x16x64xf32>
    %c2_46 = arith.constant 2 : index
    %c2_47 = arith.constant 2 : index
    %c0_48 = arith.constant 0 : index
    %91 = vector.load %arg11[%c2_46, %c2_47, %c0_48] : memref<18x18x64xf32, #tpu.memory_space<vmem>>, vector<16x16x64xf32>
    %92 = vector.extract_strided_slice %35 {offsets = [8, 0], sizes = [1, 64], strides = [1, 1]} : vector<9x64xf32> to vector<1x64xf32>
    %93 = vector.shape_cast %92 : vector<1x64xf32> to vector<64xf32>
    %94 = vector.shape_cast %93 : vector<64xf32> to vector<1x1x64xf32>
    %95 = vector.broadcast %94 : vector<1x1x64xf32> to vector<16x16x64xf32>
    %96 = arith.mulf %91, %95 : vector<16x16x64xf32>
    %97 = arith.addf %90, %96 : vector<16x16x64xf32>
    %c4 = arith.constant 4 : index
    %c0_49 = arith.constant 0 : index
    %98 = vector.load %arg2[%c4, %c0_49] : memref<32x128xf32, #tpu.memory_space<vmem>>, vector<1x64xf32>
    %99 = vector.shape_cast %98 : vector<1x64xf32> to vector<1x1x64xf32>
    %100 = vector.broadcast %99 : vector<1x1x64xf32> to vector<16x16x64xf32>
    %101 = arith.mulf %97, %100 : vector<16x16x64xf32>
    %c5 = arith.constant 5 : index
    %c0_50 = arith.constant 0 : index
    %102 = vector.load %arg2[%c5, %c0_50] : memref<32x128xf32, #tpu.memory_space<vmem>>, vector<1x64xf32>
    %103 = vector.shape_cast %102 : vector<1x64xf32> to vector<1x1x64xf32>
    %104 = vector.broadcast %103 : vector<1x1x64xf32> to vector<16x16x64xf32>
    %105 = arith.addf %101, %104 : vector<16x16x64xf32>
    %106 = arith.negf %105 : vector<16x16x64xf32>
    %107 = math.exp %106 : vector<16x16x64xf32>
    %cst_51 = arith.constant 1.000000e+00 : f32
    %108 = vector.broadcast %cst_51 : f32 to vector<16x16x64xf32>
    %109 = arith.addf %108, %107 : vector<16x16x64xf32>
    %110 = arith.divf %108, %109 : vector<16x16x64xf32>
    %111 = arith.mulf %105, %110 : vector<16x16x64xf32>
    %112 = vector.shape_cast %111 : vector<16x16x64xf32> to vector<256x64xf32>
    %cst_52 = arith.constant 3.906250e-03 : bf16
    %113 = vector.broadcast %cst_52 : bf16 to vector<1x256xbf16>
    %114 = arith.truncf %112 : vector<256x64xf32> to vector<256x64xbf16>
    %cst_53 = arith.constant dense<0.000000e+00> : vector<1x64xf32>
    %115 = tpu.matmul %113, %114, %cst_53 {dimension_numbers = #tpu.dot_dimension_numbers<[1], [0], [0], [1], [0, 0, 1, 1], [], []>} : vector<1x256xbf16>, vector<256x64xbf16>, vector<1x64xf32> -> vector<1x64xf32>
    %116 = arith.truncf %115 : vector<1x64xf32> to vector<1x64xbf16>
    %c0_54 = arith.constant 0 : index
    %c0_55 = arith.constant 0 : index
    %117 = vector.load %arg5[%c0_54, %c0_55] : memref<64x8xbf16, #tpu.memory_space<vmem>>, vector<64x8xbf16>
    %cst_56 = arith.constant dense<0.000000e+00> : vector<1x8xf32>
    %118 = tpu.matmul %116, %117, %cst_56 {dimension_numbers = #tpu.dot_dimension_numbers<[1], [0], [0], [1], [0, 0, 1, 1], [], []>} : vector<1x64xbf16>, vector<64x8xbf16>, vector<1x8xf32> -> vector<1x8xf32>
    %c6 = arith.constant 6 : index
    %c0_57 = arith.constant 0 : index
    %119 = vector.load %arg2[%c6, %c0_57] : memref<32x128xf32, #tpu.memory_space<vmem>>, vector<1x8xf32>
    %120 = arith.addf %118, %119 : vector<1x8xf32>
    %121 = arith.negf %120 : vector<1x8xf32>
    %122 = math.exp %121 : vector<1x8xf32>
    %cst_58 = arith.constant 1.000000e+00 : f32
    %123 = vector.broadcast %cst_58 : f32 to vector<1x8xf32>
    %124 = arith.addf %123, %122 : vector<1x8xf32>
    %125 = arith.divf %123, %124 : vector<1x8xf32>
    %126 = arith.mulf %120, %125 : vector<1x8xf32>
    %127 = arith.truncf %126 : vector<1x8xf32> to vector<1x8xbf16>
    %c0_59 = arith.constant 0 : index
    %c0_60 = arith.constant 0 : index
    %128 = vector.load %arg6[%c0_59, %c0_60] : memref<8x64xbf16, #tpu.memory_space<vmem>>, vector<8x64xbf16>
    %cst_61 = arith.constant dense<0.000000e+00> : vector<1x64xf32>
    %129 = tpu.matmul %127, %128, %cst_61 {dimension_numbers = #tpu.dot_dimension_numbers<[1], [0], [0], [1], [0, 0, 1, 1], [], []>} : vector<1x8xbf16>, vector<8x64xbf16>, vector<1x64xf32> -> vector<1x64xf32>
    %c7 = arith.constant 7 : index
    %c0_62 = arith.constant 0 : index
    %130 = vector.load %arg2[%c7, %c0_62] : memref<32x128xf32, #tpu.memory_space<vmem>>, vector<1x64xf32>
    %131 = arith.addf %129, %130 : vector<1x64xf32>
    %132 = arith.negf %131 : vector<1x64xf32>
    %133 = math.exp %132 : vector<1x64xf32>
    %cst_63 = arith.constant 1.000000e+00 : f32
    %134 = vector.broadcast %cst_63 : f32 to vector<1x64xf32>
    %135 = arith.addf %134, %133 : vector<1x64xf32>
    %136 = arith.divf %134, %135 : vector<1x64xf32>
    %137 = vector.broadcast %136 : vector<1x64xf32> to vector<256x64xf32>
    %138 = arith.mulf %112, %137 : vector<256x64xf32>
    %139 = arith.truncf %138 : vector<256x64xf32> to vector<256x64xbf16>
    %c0_64 = arith.constant 0 : index
    %c0_65 = arith.constant 0 : index
    %140 = vector.load %arg7[%c0_64, %c0_65] : memref<64x128xbf16, #tpu.memory_space<vmem>>, vector<64x128xbf16>
    %cst_66 = arith.constant dense<0.000000e+00> : vector<256x128xf32>
    %141 = tpu.matmul %139, %140, %cst_66 {dimension_numbers = #tpu.dot_dimension_numbers<[1], [0], [0], [1], [0, 0, 1, 1], [], []>} : vector<256x64xbf16>, vector<64x128xbf16>, vector<256x128xf32> -> vector<256x128xf32>
    %c8 = arith.constant 8 : index
    %c0_67 = arith.constant 0 : index
    %142 = vector.load %arg2[%c8, %c0_67] : memref<32x128xf32, #tpu.memory_space<vmem>>, vector<1x128xf32>
    %143 = vector.broadcast %142 : vector<1x128xf32> to vector<256x128xf32>
    %144 = arith.mulf %141, %143 : vector<256x128xf32>
    %c9 = arith.constant 9 : index
    %c0_68 = arith.constant 0 : index
    %145 = vector.load %arg2[%c9, %c0_68] : memref<32x128xf32, #tpu.memory_space<vmem>>, vector<1x128xf32>
    %146 = vector.broadcast %145 : vector<1x128xf32> to vector<256x128xf32>
    %147 = arith.addf %144, %146 : vector<256x128xf32>
    %148 = arith.addf %147, %15 : vector<256x128xf32>
    %149 = arith.truncf %148 : vector<256x128xf32> to vector<256x128xbf16>
    %c0_69 = arith.constant 0 : index
    %c0_70 = arith.constant 0 : index
    %150 = vector.load %arg8[%c0_69, %c0_70] : memref<128x128xbf16, #tpu.memory_space<vmem>>, vector<128x128xbf16>
    %cst_71 = arith.constant dense<0.000000e+00> : vector<256x128xf32>
    %151 = tpu.matmul %149, %150, %cst_71 {dimension_numbers = #tpu.dot_dimension_numbers<[1], [0], [0], [1], [0, 0, 1, 1], [], []>} : vector<256x128xbf16>, vector<128x128xbf16>, vector<256x128xf32> -> vector<256x128xf32>
    %c10 = arith.constant 10 : index
    %c0_72 = arith.constant 0 : index
    %152 = vector.load %arg2[%c10, %c0_72] : memref<32x128xf32, #tpu.memory_space<vmem>>, vector<1x128xf32>
    %153 = vector.broadcast %152 : vector<1x128xf32> to vector<256x128xf32>
    %154 = arith.mulf %151, %153 : vector<256x128xf32>
    %c11 = arith.constant 11 : index
    %c0_73 = arith.constant 0 : index
    %155 = vector.load %arg2[%c11, %c0_73] : memref<32x128xf32, #tpu.memory_space<vmem>>, vector<1x128xf32>
    %156 = vector.broadcast %155 : vector<1x128xf32> to vector<256x128xf32>
    %157 = arith.addf %154, %156 : vector<256x128xf32>
    %158 = arith.negf %157 : vector<256x128xf32>
    %159 = math.exp %158 : vector<256x128xf32>
    %cst_74 = arith.constant 1.000000e+00 : f32
    %160 = vector.broadcast %cst_74 : f32 to vector<256x128xf32>
    %161 = arith.addf %160, %159 : vector<256x128xf32>
    %162 = arith.divf %160, %161 : vector<256x128xf32>
    %163 = arith.mulf %157, %162 : vector<256x128xf32>
    %164 = arith.truncf %163 : vector<256x128xf32> to vector<256x128xbf16>
    %cst_75 = arith.constant dense<0.000000e+00> : vector<1x128xf32>
    %165 = tpu.matmul %113, %164, %cst_75 {dimension_numbers = #tpu.dot_dimension_numbers<[1], [0], [0], [1], [0, 0, 1, 1], [], []>} : vector<1x256xbf16>, vector<256x128xbf16>, vector<1x128xf32> -> vector<1x128xf32>
    %166 = arith.truncf %165 : vector<1x128xf32> to vector<1x128xbf16>
    %c0_76 = arith.constant 0 : index
    %c0_77 = arith.constant 0 : index
    %167 = vector.load %arg9[%c0_76, %c0_77] : memref<128x2xbf16, #tpu.memory_space<vmem>>, vector<128x2xbf16>
    %cst_78 = arith.constant dense<0.000000e+00> : vector<1x2xf32>
    %168 = tpu.matmul %166, %167, %cst_78 {dimension_numbers = #tpu.dot_dimension_numbers<[1], [0], [0], [1], [0, 0, 1, 1], [], []>} : vector<1x128xbf16>, vector<128x2xbf16>, vector<1x2xf32> -> vector<1x2xf32>
    %c12 = arith.constant 12 : index
    %c0_79 = arith.constant 0 : index
    %169 = vector.load %arg2[%c12, %c0_79] : memref<32x128xf32, #tpu.memory_space<vmem>>, vector<1x2xf32>
    %170 = arith.addf %168, %169 : vector<1x2xf32>
    %171 = vector.shape_cast %170 : vector<1x2xf32> to vector<1x1x2xf32>
    %c0_80 = arith.constant 0 : index
    %c0_81 = arith.constant 0 : index
    %c0_82 = arith.constant 0 : index
    %172 = vector.load %arg10[%c0_80, %c0_81, %c0_82] : memref<1x1x2xf32, #tpu.memory_space<vmem>>, vector<1x1x2xf32>
    tpu.vector_store %arg10[%c0_80, %c0_81, %c0_82], %171 {strides = array<i32>} : memref<1x1x2xf32, #tpu.memory_space<vmem>>, vector<1x1x2xf32>,
    return
  }
  func.func @transform_0(%arg0: i32) -> (i32, i32, i32) {
    %c0_i32 = arith.constant 0 : i32
    %c0_i32_0 = arith.constant 0 : i32
    %c0_i32_1 = arith.constant 0 : i32
    return %arg0, %c0_i32, %c0_i32_0 : i32, i32, i32
  }
  func.func @transform_1(%arg0: i32) -> (i32, i32) {
    %c0_i32 = arith.constant 0 : i32
    %c0_i32_0 = arith.constant 0 : i32
    %c0_i32_1 = arith.constant 0 : i32
    return %c0_i32, %c0_i32_0 : i32, i32
  }
  func.func @transform_2(%arg0: i32) -> (i32, i32) {
    %c0_i32 = arith.constant 0 : i32
    %c0_i32_0 = arith.constant 0 : i32
    %c0_i32_1 = arith.constant 0 : i32
    return %c0_i32, %c0_i32_0 : i32, i32
  }
  func.func @transform_3(%arg0: i32) -> (i32, i32) {
    %c0_i32 = arith.constant 0 : i32
    %c0_i32_0 = arith.constant 0 : i32
    %c0_i32_1 = arith.constant 0 : i32
    return %c0_i32, %c0_i32_0 : i32, i32
  }
  func.func @transform_4(%arg0: i32) -> (i32, i32) {
    %c0_i32 = arith.constant 0 : i32
    %c0_i32_0 = arith.constant 0 : i32
    %c0_i32_1 = arith.constant 0 : i32
    return %c0_i32, %c0_i32_0 : i32, i32
  }
  func.func @transform_5(%arg0: i32) -> (i32, i32) {
    %c0_i32 = arith.constant 0 : i32
    %c0_i32_0 = arith.constant 0 : i32
    %c0_i32_1 = arith.constant 0 : i32
    return %c0_i32, %c0_i32_0 : i32, i32
  }
  func.func @transform_6(%arg0: i32) -> (i32, i32) {
    %c0_i32 = arith.constant 0 : i32
    %c0_i32_0 = arith.constant 0 : i32
    %c0_i32_1 = arith.constant 0 : i32
    return %c0_i32, %c0_i32_0 : i32, i32
  }
  func.func @transform_7(%arg0: i32) -> (i32, i32) {
    %c0_i32 = arith.constant 0 : i32
    %c0_i32_0 = arith.constant 0 : i32
    %c0_i32_1 = arith.constant 0 : i32
    return %c0_i32, %c0_i32_0 : i32, i32
  }
  func.func @transform_8(%arg0: i32) -> (i32, i32) {
    %c0_i32 = arith.constant 0 : i32
    %c0_i32_0 = arith.constant 0 : i32
    %c0_i32_1 = arith.constant 0 : i32
    return %c0_i32, %c0_i32_0 : i32, i32
  }
  func.func @transform_9(%arg0: i32) -> (i32, i32, i32) {
    %c0_i32 = arith.constant 0 : i32
    %c0_i32_0 = arith.constant 0 : i32
    %c0_i32_1 = arith.constant 0 : i32
    return %arg0, %c0_i32, %c0_i32_0 : i32, i32, i32
  }
}

</mosaic_0001>

<llo_original>
// kernel: tampering_efficientnet_forward.1
$region0: #{tampering_efficientnet_forward.1}
  #allocation0 [shape = 'u32[]', space=smem, size = 0x4, offset = 0x4, fixed_abs, tag = 'smem constant byte address 0x4 - core index']
  #allocation1 [shape = 'u32[144,128]{1,0:T(1,128)}', space=vmem, size = 0x12000, scoped, tag = 'internal scratch']
  #allocation2 [shape = 'f32[18,18,64]{2,1,0:T(8,128)}', space=vmem, size = 0x36000, scoped, tag = 'scratch operand']
  %s0 = inlined_call_operand.vmem [shape: bf16[2,256,32], index: 0, kind: input, shape index: {}]
  %s1 = inlined_call_operand.vmem [shape: f32[32,128], index: 1, kind: input, shape index: {}]
  %s2 = inlined_call_operand.vmem [shape: bf16[32,128], index: 2, kind: input, shape index: {}]
  %s3 = inlined_call_operand.vmem [shape: bf16[128,64], index: 3, kind: input, shape index: {}]
  %s4 = inlined_call_operand.vmem [shape: bf16[64,8], index: 4, kind: input, shape index: {}]
  %s5 = inlined_call_operand.vmem [shape: bf16[8,64], index: 5, kind: input, shape index: {}]
  %s6 = inlined_call_operand.vmem [shape: bf16[64,128], index: 6, kind: input, shape index: {}]
  %s7 = inlined_call_operand.vmem [shape: bf16[128,128], index: 7, kind: input, shape index: {}]
  %s8 = inlined_call_operand.vmem [shape: bf16[128,2], index: 8, kind: input, shape index: {}]
  %s9 = inlined_call_operand.hbm [shape: f32[2,1,2], index: 9, kind: output, shape index: {}]
  %s10 = sld [smem:[#allocation0]]
  $region69: #{tampering_efficientnet_forward.1} parent=0
    _
  %s12 = ssub.s32 1, %s10
  %s13 = scalar_select 0, %s12, %s10
  $region1: #{tampering_efficientnet_forward.1} parent=0
    #allocation3 [shape = 'u8[1024]{0}', space=vmem, size = 0x400, scoped, tag = 'output window, operand 0']
    #allocation4 [shape = 's32[2]{0}', space=sflag, size = 0x8, scoped, tag = 'scoped memory for tampering_efficientnet_forward.1']
    %14 = vsyncpa [#allocation4], 0
    %s15 = scalar_lea.sflag [#allocation4], 1
    %16 = vsyncpa %s15, 0
    loop: start=0, step=1, limit=4
    $region2: #{tampering_efficientnet_forward.1} parent=1 // loop_pre_header
      _
    $region3: #{tampering_efficientnet_forward.1} parent=1 // loop_header
      %s18 = sphi 0, %s22
      %p19 = scmp.ge.s32.totalorder %s18, 4
      %s28 = sphi 0, %s30
      %s31 = sphi 0, %s28
      %s32 = sphi 0, %s31
      %s48 = sphi 0, %s32
      %s52 = sphi 0, %s52
      %s54 = sphi 0, %s52
      %s55 = sphi 0, %s54
      %s69 = sphi 0, %s55
      %s73 = sphi 0, %s73
      %s75 = sphi 0, %s73
      %s76 = sphi 0, %s75
      %s90 = sphi 0, %s76
      %s94 = sphi 0, %s94
      %s96 = sphi 0, %s94
      %s97 = sphi 0, %s96
      %s111 = sphi 0, %s97
      %s115 = sphi 0, %s115
      %s117 = sphi 0, %s115
      %s118 = sphi 0, %s117
      %s132 = sphi 0, %s118
      %s136 = sphi 0, %s136
      %s138 = sphi 0, %s136
      %s139 = sphi 0, %s138
      %s153 = sphi 0, %s139
      %s157 = sphi 0, %s157
      %s159 = sphi 0, %s157
      %s160 = sphi 0, %s159
      %s174 = sphi 0, %s160
      %s178 = sphi 0, %s178
      %s180 = sphi 0, %s178
      %s181 = sphi 0, %s180
      %s195 = sphi 0, %s181
      %s199 = sphi 0, %s199
      %s201 = sphi 0, %s199
      %s202 = sphi 0, %s201
      %s216 = sphi 0, %s202
      %s222 = sphi 0, %s224
      %s225 = sphi 0, %s222
      %s226 = sphi 0, %s225
      %s242 = sphi 0, %s226
    $region4: #{tampering_efficientnet_forward.1} parent=1 // loop_header_branch
      %21 = sbr.rel (%p19) target = $region8
    $region5: #{tampering_efficientnet_forward.1} parent=1 // loop_body
      %s23 = ssub.s32 %s18, 1
      %s24 = ssub.s32 %s18, 2
      %s25 = sadd.s32 %s18, 1
      %s26 = ssub.s32 %s18, %s25
      %p27 = scmp.eq.s32.totalorder %s26, 0
      %s29 = sadd.s32 %s28, 1
      %s30 = scalar_select %p27, %s28, %s29
      %p33 = pneg %p27
      %p34 = scmp.eq.s32.totalorder %s18, 1
      %p35 = por %p33, %p34
      %p36 = scmp.ne.s32.totalorder %s28, %s31
      %p37 = scmp.eq.s32.totalorder %s18, 0
      %p38 = por %p36, %p37
      %p39 = scmp.ne.s32.totalorder %s28, %s31
      %p40 = scmp.eq.s32.totalorder %s23, 1
      %p41 = por %p39, %p40
      %p42 = scmp.ne.s32.totalorder %s31, %s32
      %p43 = scmp.eq.s32.totalorder %s23, 0
      %p44 = por %p42, %p43
      %p45 = scmp.ne.s32.totalorder %s31, %s32
      %p46 = scmp.eq.s32.totalorder %s24, 1
      %p47 = por %p45, %p46
      %p49 = scmp.ne.s32.totalorder %s32, %s48
      %p50 = scmp.eq.s32.totalorder %s24, 0
      %p51 = por %p49, %p50
      %s53 = sadd.s32 %s52, 1
      %p56 = scmp.eq.s32.totalorder %s18, 1
      %p57 = scmp.ne.s32.totalorder %s52, %s54
      %p58 = scmp.eq.s32.totalorder %s18, 0
      %p59 = por %p57, %p58
      %p60 = scmp.ne.s32.totalorder %s52, %s54
      %p61 = scmp.eq.s32.totalorder %s23, 1
      %p62 = por %p60, %p61
      %p63 = scmp.ne.s32.totalorder %s54, %s55
      %p64 = scmp.eq.s32.totalorder %s23, 0
      %p65 = por %p63, %p64
      %p66 = scmp.ne.s32.totalorder %s54, %s55
      %p67 = scmp.eq.s32.totalorder %s24, 1
      %p68 = por %p66, %p67
      %p70 = scmp.ne.s32.totalorder %s55, %s69
      %p71 = scmp.eq.s32.totalorder %s24, 0
      %p72 = por %p70, %p71
      %s74 = sadd.s32 %s73, 1
      %p77 = scmp.eq.s32.totalorder %s18, 1
      %p78 = scmp.ne.s32.totalorder %s73, %s75
      %p79 = scmp.eq.s32.totalorder %s18, 0
      %p80 = por %p78, %p79
      %p81 = scmp.ne.s32.totalorder %s73, %s75
      %p82 = scmp.eq.s32.totalorder %s23, 1
      %p83 = por %p81, %p82
      %p84 = scmp.ne.s32.totalorder %s75, %s76
      %p85 = scmp.eq.s32.totalorder %s23, 0
      %p86 = por %p84, %p85
      %p87 = scmp.ne.s32.totalorder %s75, %s76
      %p88 = scmp.eq.s32.totalorder %s24, 1
      %p89 = por %p87, %p88
      %p91 = scmp.ne.s32.totalorder %s76, %s90
      %p92 = scmp.eq.s32.totalorder %s24, 0
      %p93 = por %p91, %p92
      %s95 = sadd.s32 %s94, 1
      %p98 = scmp.eq.s32.totalorder %s18, 1
      %p99 = scmp.ne.s32.totalorder %s94, %s96
      %p100 = scmp.eq.s32.totalorder %s18, 0
      %p101 = por %p99, %p100
      %p102 = scmp.ne.s32.totalorder %s94, %s96
      %p103 = scmp.eq.s32.totalorder %s23, 1
      %p104 = por %p102, %p103
      %p105 = scmp.ne.s32.totalorder %s96, %s97
      %p106 = scmp.eq.s32.totalorder %s23, 0
      %p107 = por %p105, %p106
      %p108 = scmp.ne.s32.totalorder %s96, %s97
      %p109 = scmp.eq.s32.totalorder %s24, 1
      %p110 = por %p108, %p109
      %p112 = scmp.ne.s32.totalorder %s97, %s111
      %p113 = scmp.eq.s32.totalorder %s24, 0
      %p114 = por %p112, %p113
      %s116 = sadd.s32 %s115, 1
      %p119 = scmp.eq.s32.totalorder %s18, 1
      %p120 = scmp.ne.s32.totalorder %s115, %s117
      %p121 = scmp.eq.s32.totalorder %s18, 0
      %p122 = por %p120, %p121
      %p123 = scmp.ne.s32.totalorder %s115, %s117
      %p124 = scmp.eq.s32.totalorder %s23, 1
      %p125 = por %p123, %p124
      %p126 = scmp.ne.s32.totalorder %s117, %s118
      %p127 = scmp.eq.s32.totalorder %s23, 0
      %p128 = por %p126, %p127
      %p129 = scmp.ne.s32.totalorder %s117, %s118
      %p130 = scmp.eq.s32.totalorder %s24, 1
      %p131 = por %p129, %p130
      %p133 = scmp.ne.s32.totalorder %s118, %s132
      %p134 = scmp.eq.s32.totalorder %s24, 0
      %p135 = por %p133, %p134
      %s137 = sadd.s32 %s136, 1
      %p140 = scmp.eq.s32.totalorder %s18, 1
      %p141 = scmp.ne.s32.totalorder %s136, %s138
      %p142 = scmp.eq.s32.totalorder %s18, 0
      %p143 = por %p141, %p142
      %p144 = scmp.ne.s32.totalorder %s136, %s138
      %p145 = scmp.eq.s32.totalorder %s23, 1
      %p146 = por %p144, %p145
      %p147 = scmp.ne.s32.totalorder %s138, %s139
      %p148 = scmp.eq.s32.totalorder %s23, 0
      %p149 = por %p147, %p148
      %p150 = scmp.ne.s32.totalorder %s138, %s139
      %p151 = scmp.eq.s32.totalorder %s24, 1
      %p152 = por %p150, %p151
      %p154 = scmp.ne.s32.totalorder %s139, %s153
      %p155 = scmp.eq.s32.totalorder %s24, 0
      %p156 = por %p154, %p155
      %s158 = sadd.s32 %s157, 1
      %p161 = scmp.eq.s32.totalorder %s18, 1
      %p162 = scmp.ne.s32.totalorder %s157, %s159
      %p163 = scmp.eq.s32.totalorder %s18, 0
      %p164 = por %p162, %p163
      %p165 = scmp.ne.s32.totalorder %s157, %s159
      %p166 = scmp.eq.s32.totalorder %s23, 1
      %p167 = por %p165, %p166
      %p168 = scmp.ne.s32.totalorder %s159, %s160
      %p169 = scmp.eq.s32.totalorder %s23, 0
      %p170 = por %p168, %p169
      %p171 = scmp.ne.s32.totalorder %s159, %s160
      %p172 = scmp.eq.s32.totalorder %s24, 1
      %p173 = por %p171, %p172
      %p175 = scmp.ne.s32.totalorder %s160, %s174
      %p176 = scmp.eq.s32.totalorder %s24, 0
      %p177 = por %p175, %p176
      %s179 = sadd.s32 %s178, 1
      %p182 = scmp.eq.s32.totalorder %s18, 1
      %p183 = scmp.ne.s32.totalorder %s178, %s180
      %p184 = scmp.eq.s32.totalorder %s18, 0
      %p185 = por %p183, %p184
      %p186 = scmp.ne.s32.totalorder %s178, %s180
      %p187 = scmp.eq.s32.totalorder %s23, 1
      %p188 = por %p186, %p187
      %p189 = scmp.ne.s32.totalorder %s180, %s181
      %p190 = scmp.eq.s32.totalorder %s23, 0
      %p191 = por %p189, %p190
      %p192 = scmp.ne.s32.totalorder %s180, %s181
      %p193 = scmp.eq.s32.totalorder %s24, 1
      %p194 = por %p192, %p193
      %p196 = scmp.ne.s32.totalorder %s181, %s195
      %p197 = scmp.eq.s32.totalorder %s24, 0
      %p198 = por %p196, %p197
      %s200 = sadd.s32 %s199, 1
      %p203 = scmp.eq.s32.totalorder %s18, 1
      %p204 = scmp.ne.s32.totalorder %s199, %s201
      %p205 = scmp.eq.s32.totalorder %s18, 0
      %p206 = por %p204, %p205
      %p207 = scmp.ne.s32.totalorder %s199, %s201
      %p208 = scmp.eq.s32.totalorder %s23, 1
      %p209 = por %p207, %p208
      %p210 = scmp.ne.s32.totalorder %s201, %s202
      %p211 = scmp.eq.s32.totalorder %s23, 0
      %p212 = por %p210, %p211
      %p213 = scmp.ne.s32.totalorder %s201, %s202
      %p214 = scmp.eq.s32.totalorder %s24, 1
      %p215 = por %p213, %p214
      %p217 = scmp.ne.s32.totalorder %s202, %s216
      %p218 = scmp.eq.s32.totalorder %s24, 0
      %p219 = por %p217, %p218
      %s220 = ssub.s32 %s18, %s25
      %p221 = scmp.eq.s32.totalorder %s220, 0
      %s223 = sadd.s32 %s222, 1
      %s224 = scalar_select %p221, %s222, %s223
      %p227 = pneg %p221
      %p228 = scmp.eq.s32.totalorder %s18, 1
      %p229 = por %p227, %p228
      %p230 = scmp.ne.s32.totalorder %s222, %s225
      %p231 = scmp.eq.s32.totalorder %s18, 0
      %p232 = por %p230, %p231
      %p233 = scmp.ne.s32.totalorder %s222, %s225
      %p234 = scmp.eq.s32.totalorder %s23, 1
      %p235 = por %p233, %p234
      %p236 = scmp.ne.s32.totalorder %s225, %s226
      %p237 = scmp.eq.s32.totalorder %s23, 0
      %p238 = por %p236, %p237
      %p239 = scmp.ne.s32.totalorder %s225, %s226
      %p240 = scmp.eq.s32.totalorder %s24, 1
      %p241 = por %p239, %p240
      %p243 = scmp.ne.s32.totalorder %s226, %s242
      %p244 = scmp.eq.s32.totalorder %s24, 0
      %p245 = por %p243, %p244
      %p246 = scmp.le.s32.totalorder 1, %s18
      %p247 = scmp.lt.s32.totalorder %s18, 3
      %p248 = pnand %p246, %p247
      %p249 = pneg %p248
      // Predicated region
      $region9: #{tampering_efficientnet_forward.1} parent=5 // pred_check
        _
      $region10: #{tampering_efficientnet_forward.1} parent=5 // pred_check_branch
        %251 = sbr.rel (%p248) target = $region12
      $region11: #{tampering_efficientnet_forward.1} parent=5 // pred_region
        %s252 = ssub.s32 %s18, 1
        // Predicated region
        $region13: #{tampering_efficientnet_forward.1} parent=11 // pred_check
          %p253 = pneg %p65
        $region14: #{tampering_efficientnet_forward.1} parent=11 // pred_check_branch
          %255 = sbr.rel (%p253) target = $region16
        $region15: #{tampering_efficientnet_forward.1} parent=11 // pred_region
          _
        $region16: #{tampering_efficientnet_forward.1} parent=11 // pred_fallthru
          _
        // Predicated region
        $region17: #{tampering_efficientnet_forward.1} parent=11 // pred_check
          %p256 = pneg %p86
        $region18: #{tampering_efficientnet_forward.1} parent=11 // pred_check_branch
          %258 = sbr.rel (%p256) target = $region20
        $region19: #{tampering_efficientnet_forward.1} parent=11 // pred_region
          _
        $region20: #{tampering_efficientnet_forward.1} parent=11 // pred_fallthru
          _
        // Predicated region
        $region21: #{tampering_efficientnet_forward.1} parent=11 // pred_check
          %p259 = pneg %p107
        $region22: #{tampering_efficientnet_forward.1} parent=11 // pred_check_branch
          %261 = sbr.rel (%p259) target = $region24
        $region23: #{tampering_efficientnet_forward.1} parent=11 // pred_region
          _
        $region24: #{tampering_efficientnet_forward.1} parent=11 // pred_fallthru
          _
        // Predicated region
        $region25: #{tampering_efficientnet_forward.1} parent=11 // pred_check
          %p262 = pneg %p128
        $region26: #{tampering_efficientnet_forward.1} parent=11 // pred_check_branch
          %264 = sbr.rel (%p262) target = $region28
        $region27: #{tampering_efficientnet_forward.1} parent=11 // pred_region
          _
        $region28: #{tampering_efficientnet_forward.1} parent=11 // pred_fallthru
          _
        // Predicated region
        $region29: #{tampering_efficientnet_forward.1} parent=11 // pred_check
          %p265 = pneg %p149
        $region30: #{tampering_efficientnet_forward.1} parent=11 // pred_check_branch
          %267 = sbr.rel (%p265) target = $region32
        $region31: #{tampering_efficientnet_forward.1} parent=11 // pred_region
          _
        $region32: #{tampering_efficientnet_forward.1} parent=11 // pred_fallthru
          _
        // Predicated region
        $region33: #{tampering_efficientnet_forward.1} parent=11 // pred_check
          %p268 = pneg %p170
        $region34: #{tampering_efficientnet_forward.1} parent=11 // pred_check_branch
          %270 = sbr.rel (%p268) target = $region36
        $region35: #{tampering_efficientnet_forward.1} parent=11 // pred_region
          _
        $region36: #{tampering_efficientnet_forward.1} parent=11 // pred_fallthru
          _
        // Predicated region
        $region37: #{tampering_efficientnet_forward.1} parent=11 // pred_check
          %p271 = pneg %p191
        $region38: #{tampering_efficientnet_forward.1} parent=11 // pred_check_branch
          %273 = sbr.rel (%p271) target = $region40
        $region39: #{tampering_efficientnet_forward.1} parent=11 // pred_region
          _
        $region40: #{tampering_efficientnet_forward.1} parent=11 // pred_fallthru
          _
        // Predicated region
        $region41: #{tampering_efficientnet_forward.1} parent=11 // pred_check
          %p274 = pneg %p212
        $region42: #{tampering_efficientnet_forward.1} parent=11 // pred_check_branch
          %276 = sbr.rel (%p274) target = $region44
        $region43: #{tampering_efficientnet_forward.1} parent=11 // pred_region
          _
        $region44: #{tampering_efficientnet_forward.1} parent=11 // pred_fallthru
          _
      $region12: #{tampering_efficientnet_forward.1} parent=5 // pred_fallthru
        _
      %p277 = scmp.lt.s32.totalorder %s18, 2
      // Predicated region
      $region45: #{tampering_efficientnet_forward.1} parent=5 // pred_check
        %p278 = pneg %p277
      $region46: #{tampering_efficientnet_forward.1} parent=5 // pred_check_branch
        %280 = sbr.rel (%p278) target = $region48
      $region47: #{tampering_efficientnet_forward.1} parent=5 // pred_region
        // Predicated region
        $region49: #{tampering_efficientnet_forward.1} parent=47 // pred_check
          %p281 = pneg %p38
        $region50: #{tampering_efficientnet_forward.1} parent=47 // pred_check_branch
          %283 = sbr.rel (%p281) target = $region52
        $region51: #{tampering_efficientnet_forward.1} parent=47 // pred_region
          %p284 = scmp.lt.s32.totalorder %s18, 1
          %s285 = scalar_select %p284, %s18, 1
          %s286 = smul.addr %s285, 32
          %s287 = smul.addr %s286, 4
          %s288 = scalar_lea.vmem %s0, %s287
        $region52: #{tampering_efficientnet_forward.1} parent=47 // pred_fallthru
          _
      $region48: #{tampering_efficientnet_forward.1} parent=5 // pred_fallthru
        _
      %p289 = scmp.le.s32.totalorder 1, %s18
      %p290 = scmp.lt.s32.totalorder %s18, 3
      %p291 = pnand %p289, %p290
      %p292 = pneg %p291
      // Predicated region
      $region53: #{tampering_efficientnet_forward.1} parent=5 // pred_check
        _
      $region54: #{tampering_efficientnet_forward.1} parent=5 // pred_check_branch
        %294 = sbr.rel (%p291) target = $region56
      $region55: #{tampering_efficientnet_forward.1} parent=5 // pred_region
        %s295 = ssub.s32 %s18, 1
        %p296 = scmp.lt.s32.totalorder %s23, 1
        %s297 = scalar_select %p296, %s23, 1
        %s298 = smul.addr %s297, 32
        %s299 = smul.addr %s298, 4
        %s300 = scalar_lea.vmem %s0, %s299
        %p301 = pneg %p44
        %p302 = pneg %p41
        %p303 = pneg %p65
        %p304 = pneg %p62
        %p305 = pneg %p86
        %p306 = pneg %p83
        %p307 = pneg %p107
        %p308 = pneg %p104
        %p309 = pneg %p128
        %p310 = pneg %p125
        %p311 = pneg %p149
        %p312 = pneg %p146
        %p313 = pneg %p170
        %p314 = pneg %p167
        %p315 = pneg %p191
        %p316 = pneg %p188
        %p317 = pneg %p212
        %p318 = pneg %p209
        %p319 = pneg %p238
        %p320 = pneg %p235
        %s321 = sand.u32 %s225, 1
        %s322 = scalar_lea.sflag [#allocation4], %s321
        %s323 = sand.u32 %s225, 1
        %s324 = scalar_lea.vmem [#allocation3], %s323
        %p325 = scmp.lt.s32.totalorder %s23, 1
        %s326 = scalar_select %p325, %s23, 1
        %s327 = smul.addr %s326, 32
        %s328 = smul.addr %s327, 4
        %s329 = scalar_lea.vmem %s0, %s328
        %v332 = vld [vmem:[%s329] sm:$0xf]
        %v333 = vld [vmem:[%s329 + $0x4] sm:$0xf]
        %v334 = vld [vmem:[%s329 + $0x8] sm:$0xf]
        %v335 = vld [vmem:[%s329 + $0xc] sm:$0xf]
        %v336 = vld [vmem:[%s329 + $0x10] sm:$0xf]
        %v337 = vld [vmem:[%s329 + $0x14] sm:$0xf]
        %v338 = vld [vmem:[%s329 + $0x18] sm:$0xf]
        %v339 = vld [vmem:[%s329 + $0x1c] sm:$0xf]
        %v340 = vld [vmem:[%s329 + $0x20] sm:$0xf]
        %v341 = vld [vmem:[%s329 + $0x24] sm:$0xf]
        %v342 = vld [vmem:[%s329 + $0x28] sm:$0xf]
        %v343 = vld [vmem:[%s329 + $0x2c] sm:$0xf]
        %v344 = vld [vmem:[%s329 + $0x30] sm:$0xf]
        %v345 = vld [vmem:[%s329 + $0x34] sm:$0xf]
        %v346 = vld [vmem:[%s329 + $0x38] sm:$0xf]
        %v347 = vld [vmem:[%s329 + $0x3c] sm:$0xf]
        %v348 = vld [vmem:[%s329 + $0x40] sm:$0xf]
        %v349 = vld [vmem:[%s329 + $0x44] sm:$0xf]
        %v350 = vld [vmem:[%s329 + $0x48] sm:$0xf]
        %v351 = vld [vmem:[%s329 + $0x4c] sm:$0xf]
        %v352 = vld [vmem:[%s329 + $0x50] sm:$0xf]
        %v353 = vld [vmem:[%s329 + $0x54] sm:$0xf]
        %v354 = vld [vmem:[%s329 + $0x58] sm:$0xf]
        %v355 = vld [vmem:[%s329 + $0x5c] sm:$0xf]
        %v356 = vld [vmem:[%s329 + $0x60] sm:$0xf]
        %v357 = vld [vmem:[%s329 + $0x64] sm:$0xf]
        %v358 = vld [vmem:[%s329 + $0x68] sm:$0xf]
        %v359 = vld [vmem:[%s329 + $0x6c] sm:$0xf]
        %v360 = vld [vmem:[%s329 + $0x70] sm:$0xf]
        %v361 = vld [vmem:[%s329 + $0x74] sm:$0xf]
        %v362 = vld [vmem:[%s329 + $0x78] sm:$0xf]
        %v363 = vld [vmem:[%s329 + $0x7c] sm:$0xf]
        %v364 = vld [vmem:[%s2] sm:$0xf]
        %v365 = vld [vmem:[%s2 + $0x4] sm:$0xf]
        %v366 = vld [vmem:[%s2 + $0x8] sm:$0xf]
        %v367 = vld [vmem:[%s2 + $0xc] sm:$0xf]
        %v400 = vunpack.c.l.b16 %v332
        %v401 = vunpack.c.l.b16 %v333
        %v402 = vunpack.c.l.b16 %v334
        %v403 = vunpack.c.l.b16 %v335
        %v404 = vunpack.c.l.b16 %v336
        %v405 = vunpack.c.l.b16 %v337
        %v406 = vunpack.c.l.b16 %v338
        %v407 = vunpack.c.l.b16 %v339
        %v408 = vunpack.c.l.b16 %v340
        %v409 = vunpack.c.l.b16 %v341
        %v410 = vunpack.c.l.b16 %v342
        %v411 = vunpack.c.l.b16 %v343
        %v412 = vunpack.c.l.b16 %v344
        %v413 = vunpack.c.l.b16 %v345
        %v414 = vunpack.c.l.b16 %v346
        %v415 = vunpack.c.l.b16 %v347
        %v416 = vunpack.c.l.b16 %v348
        %v417 = vunpack.c.l.b16 %v349
        %v418 = vunpack.c.l.b16 %v350
        %v419 = vunpack.c.l.b16 %v351
        %v420 = vunpack.c.l.b16 %v352
        %v421 = vunpack.c.l.b16 %v353
        %v422 = vunpack.c.l.b16 %v354
        %v423 = vunpack.c.l.b16 %v355
        %v424 = vunpack.c.l.b16 %v356
        %v425 = vunpack.c.l.b16 %v357
        %v426 = vunpack.c.l.b16 %v358
        %v427 = vunpack.c.l.b16 %v359
        %v428 = vunpack.c.l.b16 %v360
        %v429 = vunpack.c.l.b16 %v361
        %v430 = vunpack.c.l.b16 %v362
        %v431 = vunpack.c.l.b16 %v363
        %v432 = vpack.c.b16 %v401, %v400
        %v433 = vpack.c.b16 %v403, %v402
        %v434 = vpack.c.b16 %v405, %v404
        %v435 = vpack.c.b16 %v407, %v406
        %v436 = vpack.c.b16 %v409, %v408
        %v437 = vpack.c.b16 %v411, %v410
        %v438 = vpack.c.b16 %v413, %v412
        %v439 = vpack.c.b16 %v415, %v414
        %v440 = vpack.c.b16 %v417, %v416
        %v441 = vpack.c.b16 %v419, %v418
        %v442 = vpack.c.b16 %v421, %v420
        %v443 = vpack.c.b16 %v423, %v422
        %v444 = vpack.c.b16 %v425, %v424
        %v445 = vpack.c.b16 %v427, %v426
        %v446 = vpack.c.b16 %v429, %v428
        %v447 = vpack.c.b16 %v431, %v430
        %v452 = vunpack.c.l.b16 %v364
        %v453 = vunpack.c.l.b16 %v365
        %v454 = vunpack.c.l.b16 %v366
        %v455 = vunpack.c.l.b16 %v367
        %v456 = vpack.c.b16 %v453, %v452
        %v457 = vpack.c.b16 %v455, %v454
        %vm460 = vcmask 261120
        %v462 = vsel %vm460, %v432, 0
        %v465 = vsel %vm460, %v433, 0
        %v468 = vsel %vm460, %v434, 0
        %v471 = vsel %vm460, %v435, 0
        %v474 = vsel %vm460, %v436, 0
        %v477 = vsel %vm460, %v437, 0
        %v480 = vsel %vm460, %v438, 0
        %v483 = vsel %vm460, %v439, 0
        %v486 = vsel %vm460, %v440, 0
        %v489 = vsel %vm460, %v441, 0
        %v492 = vsel %vm460, %v442, 0
        %v495 = vsel %vm460, %v443, 0
        %v498 = vsel %vm460, %v444, 0
        %v501 = vsel %vm460, %v445, 0
        %v504 = vsel %vm460, %v446, 0
        %v507 = vsel %vm460, %v447, 0
        %509 = vmatprep.subr.bf16.mxu0 0
        %510 = vmatpush1.bf16.msra.mxu0 %v456
        %511 = vmatprep.subr.bf16.mxu0 0
        %512 = vmatpush1.bf16.msra.mxu0 %v457
        %513 = vmatprep.subr.bf16.mxu0 0
        %514 = vmatpush1.bf16.msra.mxu0 0
        %515 = vmatprep.subr.bf16.mxu0 0
        %516 = vmatpush1.bf16.msra.mxu0 0
        %517 = vmatprep.subr.bf16.mxu0 0
        %518 = vmatpush1.bf16.msra.mxu0 0
        %519 = vmatprep.subr.bf16.mxu0 0
        %520 = vmatpush1.bf16.msra.mxu0 0
        %521 = vmatprep.subr.bf16.mxu0 0
        %522 = vmatpush1.bf16.msra.mxu0 0
        %523 = vmatprep.subr.bf16.mxu0 0
        %524 = vmatpush1.bf16.msra.mxu0 0
        %525 = vmatprep.subr.bf16.mxu0 0
        %526 = vmatpush1.bf16.msra.mxu0 0
        %527 = vmatprep.subr.bf16.mxu0 0
        %528 = vmatpush1.bf16.msra.mxu0 0
        %529 = vmatprep.subr.bf16.mxu0 0
        %530 = vmatpush1.bf16.msra.mxu0 0
        %531 = vmatprep.subr.bf16.mxu0 0
        %532 = vmatpush1.bf16.msra.mxu0 0
        %533 = vmatprep.subr.bf16.mxu0 0
        %534 = vmatpush1.bf16.msra.mxu0 0
        %535 = vmatprep.subr.bf16.mxu0 0
        %536 = vmatpush1.bf16.msra.mxu0 0
        %537 = vmatprep.subr.bf16.mxu0 0
        %538 = vmatpush1.bf16.msra.mxu0 0
        %539 = vmatprep.subr.bf16.mxu0 0
        %540 = vmatpush1.bf16.msra.mxu0 0
        %541 = vmatprep.mubr.bf16.mxu0 0
        %542 = vmatmul.mubr.bf16.gmra.mrb[0].mxu0 %v462
        %v543 = vpop.f32.mrb[0].mxu0
        %v544 = vadd.f32 0.0, %v543
        %v545 = vpop.f32.mrb[0].mxu0
        %v546 = vpop.f32.mrb[0].mxu0
        %v547 = vadd.f32 0.0, %v546
        %v548 = vpop.f32.mrb[0].mxu0
        %549 = vmatprep.mubr.bf16.mxu0 0
        %550 = vmatmul.mubr.bf16.gmra.mrb[0].mxu0 %v465
        %v551 = vpop.f32.mrb[0].mxu0
        %v552 = vadd.f32 0.0, %v551
        %v553 = vpop.f32.mrb[0].mxu0
        %v554 = vpop.f32.mrb[0].mxu0
        %v555 = vadd.f32 0.0, %v554
        %v556 = vpop.f32.mrb[0].mxu0
        %557 = vmatprep.mubr.bf16.mxu0 0
        %558 = vmatmul.mubr.bf16.gmra.mrb[0].mxu0 %v468
        %v559 = vpop.f32.mrb[0].mxu0
        %v560 = vadd.f32 0.0, %v559
        %v561 = vpop.f32.mrb[0].mxu0
        %v562 = vpop.f32.mrb[0].mxu0
        %v563 = vadd.f32 0.0, %v562
        %v564 = vpop.f32.mrb[0].mxu0
        %565 = vmatprep.mubr.bf16.mxu0 0
        %566 = vmatmul.mubr.bf16.gmra.mrb[0].mxu0 %v471
        %v567 = vpop.f32.mrb[0].mxu0
        %v568 = vadd.f32 0.0, %v567
        %v569 = vpop.f32.mrb[0].mxu0
        %v570 = vpop.f32.mrb[0].mxu0
        %v571 = vadd.f32 0.0, %v570
        %v572 = vpop.f32.mrb[0].mxu0
        %573 = vmatprep.mubr.bf16.mxu0 0
        %574 = vmatmul.mubr.bf16.gmra.mrb[0].mxu0 %v474
        %v575 = vpop.f32.mrb[0].mxu0
        %v576 = vadd.f32 0.0, %v575
        %v577 = vpop.f32.mrb[0].mxu0
        %v578 = vpop.f32.mrb[0].mxu0
        %v579 = vadd.f32 0.0, %v578
        %v580 = vpop.f32.mrb[0].mxu0
        %581 = vmatprep.mubr.bf16.mxu0 0
        %582 = vmatmul.mubr.bf16.gmra.mrb[0].mxu0 %v477
        %v583 = vpop.f32.mrb[0].mxu0
        %v584 = vadd.f32 0.0, %v583
        %v585 = vpop.f32.mrb[0].mxu0
        %v586 = vpop.f32.mrb[0].mxu0
        %v587 = vadd.f32 0.0, %v586
        %v588 = vpop.f32.mrb[0].mxu0
        %589 = vmatprep.mubr.bf16.mxu0 0
        %590 = vmatmul.mubr.bf16.gmra.mrb[0].mxu0 %v480
        %v591 = vpop.f32.mrb[0].mxu0
        %v592 = vadd.f32 0.0, %v591
        %v593 = vpop.f32.mrb[0].mxu0
        %v594 = vpop.f32.mrb[0].mxu0
        %v595 = vadd.f32 0.0, %v594
        %v596 = vpop.f32.mrb[0].mxu0
        %597 = vmatprep.mubr.bf16.mxu0 0
        %598 = vmatmul.mubr.bf16.gmra.mrb[0].mxu0 %v483
        %v599 = vpop.f32.mrb[0].mxu0
        %v600 = vadd.f32 0.0, %v599
        %v601 = vpop.f32.mrb[0].mxu0
        %v602 = vpop.f32.mrb[0].mxu0
        %v603 = vadd.f32 0.0, %v602
        %v604 = vpop.f32.mrb[0].mxu0
        %605 = vmatprep.mubr.bf16.mxu0 0
        %606 = vmatmul.mubr.bf16.gmra.mrb[0].mxu0 %v486
        %v607 = vpop.f32.mrb[0].mxu0
        %v608 = vadd.f32 0.0, %v607
        %v609 = vpop.f32.mrb[0].mxu0
        %v610 = vpop.f32.mrb[0].mxu0
        %v611 = vadd.f32 0.0, %v610
        %v612 = vpop.f32.mrb[0].mxu0
        %613 = vmatprep.mubr.bf16.mxu0 0
        %614 = vmatmul.mubr.bf16.gmra.mrb[0].mxu0 %v489
        %v615 = vpop.f32.mrb[0].mxu0
        %v616 = vadd.f32 0.0, %v615
        %v617 = vpop.f32.mrb[0].mxu0
        %v618 = vpop.f32.mrb[0].mxu0
        %v619 = vadd.f32 0.0, %v618
        %v620 = vpop.f32.mrb[0].mxu0
        %621 = vmatprep.mubr.bf16.mxu0 0
        %622 = vmatmul.mubr.bf16.gmra.mrb[0].mxu0 %v492
        %v623 = vpop.f32.mrb[0].mxu0
        %v624 = vadd.f32 0.0, %v623
        %v625 = vpop.f32.mrb[0].mxu0
        %v626 = vpop.f32.mrb[0].mxu0
        %v627 = vadd.f32 0.0, %v626
        %v628 = vpop.f32.mrb[0].mxu0
        %629 = vmatprep.mubr.bf16.mxu0 0
        %630 = vmatmul.mubr.bf16.gmra.mrb[0].mxu0 %v495
        %v631 = vpop.f32.mrb[0].mxu0
        %v632 = vadd.f32 0.0, %v631
        %v633 = vpop.f32.mrb[0].mxu0
        %v634 = vpop.f32.mrb[0].mxu0
        %v635 = vadd.f32 0.0, %v634
        %v636 = vpop.f32.mrb[0].mxu0
        %637 = vmatprep.mubr.bf16.mxu0 0
        %638 = vmatmul.mubr.bf16.gmra.mrb[0].mxu0 %v498
        %v639 = vpop.f32.mrb[0].mxu0
        %v640 = vadd.f32 0.0, %v639
        %v641 = vpop.f32.mrb[0].mxu0
        %v642 = vpop.f32.mrb[0].mxu0
        %v643 = vadd.f32 0.0, %v642
        %v644 = vpop.f32.mrb[0].mxu0
        %645 = vmatprep.mubr.bf16.mxu0 0
        %646 = vmatmul.mubr.bf16.gmra.mrb[0].mxu0 %v501
        %v647 = vpop.f32.mrb[0].mxu0
        %v648 = vadd.f32 0.0, %v647
        %v649 = vpop.f32.mrb[0].mxu0
        %v650 = vpop.f32.mrb[0].mxu0
        %v651 = vadd.f32 0.0, %v650
        %v652 = vpop.f32.mrb[0].mxu0
        %653 = vmatprep.mubr.bf16.mxu0 0
        %654 = vmatmul.mubr.bf16.gmra.mrb[0].mxu0 %v504
        %v655 = vpop.f32.mrb[0].mxu0
        %v656 = vadd.f32 0.0, %v655
        %v657 = vpop.f32.mrb[0].mxu0
        %v658 = vpop.f32.mrb[0].mxu0
        %v659 = vadd.f32 0.0, %v658
        %v660 = vpop.f32.mrb[0].mxu0
        %661 = vmatprep.mubr.bf16.mxu0 0
        %662 = vmatmul.mubr.bf16.gmra.mrb[0].mxu0 %v507
        %v663 = vpop.f32.mrb[0].mxu0
        %v664 = vadd.f32 0.0, %v663
        %v665 = vpop.f32.mrb[0].mxu0
        %v666 = vpop.f32.mrb[0].mxu0
        %v667 = vadd.f32 0.0, %v666
        %v668 = vpop.f32.mrb[0].mxu0
        %669 = vdwg.mxu0
        %v670 = vld [vmem:[%s1] sm:$0x1]
        %v671 = vlaneseq
        %v672 = vshrl.u32 %v671, 7
        %v673 = vsub.s32 0, %v672
        %v674 = vrot.slane %v670, %v673
        %v675 = vmul.f32 %v544, %v674
        %v676 = vmul.f32 %v547, %v674
        %v677 = vmul.f32 %v552, %v674
        %v678 = vmul.f32 %v555, %v674
        %v679 = vmul.f32 %v560, %v674
        %v680 = vmul.f32 %v563, %v674
        %v681 = vmul.f32 %v568, %v674
        %v682 = vmul.f32 %v571, %v674
        %v683 = vmul.f32 %v576, %v674
        %v684 = vmul.f32 %v579, %v674
        %v685 = vmul.f32 %v584, %v674
        %v686 = vmul.f32 %v587, %v674
        %v687 = vmul.f32 %v592, %v674
        %v688 = vmul.f32 %v595, %v674
        %v689 = vmul.f32 %v600, %v674
        %v690 = vmul.f32 %v603, %v674
        %v691 = vmul.f32 %v608, %v674
        %v692 = vmul.f32 %v611, %v674
        %v693 = vmul.f32 %v616, %v674
        %v694 = vmul.f32 %v619, %v674
        %v695 = vmul.f32 %v624, %v674
        %v696 = vmul.f32 %v627, %v674
        %v697 = vmul.f32 %v632, %v674
        %v698 = vmul.f32 %v635, %v674
        %v699 = vmul.f32 %v640, %v674
        %v700 = vmul.f32 %v643, %v674
        %v701 = vmul.f32 %v648, %v674
        %v702 = vmul.f32 %v651, %v674
        %v703 = vmul.f32 %v656, %v674
        %v704 = vmul.f32 %v659, %v674
        %v705 = vmul.f32 %v664, %v674
        %v706 = vmul.f32 %v667, %v674
        %v707 = vld [vmem:[%s1 + $0x1] sm:$0x1]
        %v708 = vlaneseq
        %v709 = vshrl.u32 %v708, 7
        %v710 = vsub.s32 0, %v709
        %v711 = vrot.slane %v707, %v710
        %v712 = vadd.f32 %v675, %v711
        %v713 = vadd.f32 %v676, %v711
        %v714 = vadd.f32 %v677, %v711
        %v715 = vadd.f32 %v678, %v711
        %v716 = vadd.f32 %v679, %v711
        %v717 = vadd.f32 %v680, %v711
        %v718 = vadd.f32 %v681, %v711
        %v719 = vadd.f32 %v682, %v711
        %v720 = vadd.f32 %v683, %v711
        %v721 = vadd.f32 %v684, %v711
        %v722 = vadd.f32 %v685, %v711
        %v723 = vadd.f32 %v686, %v711
        %v724 = vadd.f32 %v687, %v711
        %v725 = vadd.f32 %v688, %v711
        %v726 = vadd.f32 %v689, %v711
        %v727 = vadd.f32 %v690, %v711
        %v728 = vadd.f32 %v691, %v711
        %v729 = vadd.f32 %v692, %v711
        %v730 = vadd.f32 %v693, %v711
        %v731 = vadd.f32 %v694, %v711
        %v732 = vadd.f32 %v695, %v711
        %v733 = vadd.f32 %v696, %v711
        %v734 = vadd.f32 %v697, %v711
        %v735 = vadd.f32 %v698, %v711
        %v736 = vadd.f32 %v699, %v711
        %v737 = vadd.f32 %v700, %v711
        %v738 = vadd.f32 %v701, %v711
        %v739 = vadd.f32 %v702, %v711
        %v740 = vadd.f32 %v703, %v711
        %v741 = vadd.f32 %v704, %v711
        %v742 = vadd.f32 %v705, %v711
        %v743 = vadd.f32 %v706, %v711
        %v744 = vxor.u32 %v712, 2147483648
        %v745 = vxor.u32 %v713, 2147483648
        %v746 = vxor.u32 %v714, 2147483648
        %v747 = vxor.u32 %v715, 2147483648
        %v748 = vxor.u32 %v716, 2147483648
        %v749 = vxor.u32 %v717, 2147483648
        %v750 = vxor.u32 %v718, 2147483648
        %v751 = vxor.u32 %v719, 2147483648
        %v752 = vxor.u32 %v720, 2147483648
        %v753 = vxor.u32 %v721, 2147483648
        %v754 = vxor.u32 %v722, 2147483648
        %v755 = vxor.u32 %v723, 2147483648
        %v756 = vxor.u32 %v724, 2147483648
        %v757 = vxor.u32 %v725, 2147483648
        %v758 = vxor.u32 %v726, 2147483648
        %v759 = vxor.u32 %v727, 2147483648
        %v760 = vxor.u32 %v728, 2147483648
        %v761 = vxor.u32 %v729, 2147483648
        %v762 = vxor.u32 %v730, 2147483648
        %v763 = vxor.u32 %v731, 2147483648
        %v764 = vxor.u32 %v732, 2147483648
        %v765 = vxor.u32 %v733, 2147483648
        %v766 = vxor.u32 %v734, 2147483648
        %v767 = vxor.u32 %v735, 2147483648
        %v768 = vxor.u32 %v736, 2147483648
        %v769 = vxor.u32 %v737, 2147483648
        %v770 = vxor.u32 %v738, 2147483648
        %v771 = vxor.u32 %v739, 2147483648
        %v772 = vxor.u32 %v740, 2147483648
        %v773 = vxor.u32 %v741, 2147483648
        %v774 = vxor.u32 %v742, 2147483648
        %v775 = vxor.u32 %v743, 2147483648
        %v776 = vmul.f32 %v744, 1.442695
        %v777 = vpow.pop %v776
        %v778 = vmul.f32 %v745, 1.442695
        %v779 = vpow.pop %v778
        %v780 = vmul.f32 %v746, 1.442695
        %v781 = vpow.pop %v780
        %v782 = vmul.f32 %v747, 1.442695
        %v783 = vpow.pop %v782
        %v784 = vmul.f32 %v748, 1.442695
        %v785 = vpow.pop %v784
        %v786 = vmul.f32 %v749, 1.442695
        %v787 = vpow.pop %v786
        %v788 = vmul.f32 %v750, 1.442695
        %v789 = vpow.pop %v788
        %v790 = vmul.f32 %v751, 1.442695
        %v791 = vpow.pop %v790
        %v792 = vmul.f32 %v752, 1.442695
        %v793 = vpow.pop %v792
        %v794 = vmul.f32 %v753, 1.442695
        %v795 = vpow.pop %v794
        %v796 = vmul.f32 %v754, 1.442695
        %v797 = vpow.pop %v796
        %v798 = vmul.f32 %v755, 1.442695
        %v799 = vpow.pop %v798
        %v800 = vmul.f32 %v756, 1.442695
        %v801 = vpow.pop %v800
        %v802 = vmul.f32 %v757, 1.442695
        %v803 = vpow.pop %v802
        %v804 = vmul.f32 %v758, 1.442695
        %v805 = vpow.pop %v804
        %v806 = vmul.f32 %v759, 1.442695
        %v807 = vpow.pop %v806
        %v808 = vmul.f32 %v760, 1.442695
        %v809 = vpow.pop %v808
        %v810 = vmul.f32 %v761, 1.442695
        %v811 = vpow.pop %v810
        %v812 = vmul.f32 %v762, 1.442695
        %v813 = vpow.pop %v812
        %v814 = vmul.f32 %v763, 1.442695
        %v815 = vpow.pop %v814
        %v816 = vmul.f32 %v764, 1.442695
        %v817 = vpow.pop %v816
        %v818 = vmul.f32 %v765, 1.442695
        %v819 = vpow.pop %v818
        %v820 = vmul.f32 %v766, 1.442695
        %v821 = vpow.pop %v820
        %v822 = vmul.f32 %v767, 1.442695
        %v823 = vpow.pop %v822
        %v824 = vmul.f32 %v768, 1.442695
        %v825 = vpow.pop %v824
        %v826 = vmul.f32 %v769, 1.442695
        %v827 = vpow.pop %v826
        %v828 = vmul.f32 %v770, 1.442695
        %v829 = vpow.pop %v828
        %v830 = vmul.f32 %v771, 1.442695
        %v831 = vpow.pop %v830
        %v832 = vmul.f32 %v772, 1.442695
        %v833 = vpow.pop %v832
        %v834 = vmul.f32 %v773, 1.442695
        %v835 = vpow.pop %v834
        %v836 = vmul.f32 %v774, 1.442695
        %v837 = vpow.pop %v836
        %v838 = vmul.f32 %v775, 1.442695
        %v839 = vpow.pop %v838
        %v840 = vadd.f32 %v777, 1.0
        %v841 = vadd.f32 %v779, 1.0
        %v842 = vadd.f32 %v781, 1.0
        %v843 = vadd.f32 %v783, 1.0
        %v844 = vadd.f32 %v785, 1.0
        %v845 = vadd.f32 %v787, 1.0
        %v846 = vadd.f32 %v789, 1.0
        %v847 = vadd.f32 %v791, 1.0
        %v848 = vadd.f32 %v793, 1.0
        %v849 = vadd.f32 %v795, 1.0
        %v850 = vadd.f32 %v797, 1.0
        %v851 = vadd.f32 %v799, 1.0
        %v852 = vadd.f32 %v801, 1.0
        %v853 = vadd.f32 %v803, 1.0
        %v854 = vadd.f32 %v805, 1.0
        %v855 = vadd.f32 %v807, 1.0
        %v856 = vadd.f32 %v809, 1.0
        %v857 = vadd.f32 %v811, 1.0
        %v858 = vadd.f32 %v813, 1.0
        %v859 = vadd.f32 %v815, 1.0
        %v860 = vadd.f32 %v817, 1.0
        %v861 = vadd.f32 %v819, 1.0
        %v862 = vadd.f32 %v821, 1.0
        %v863 = vadd.f32 %v823, 1.0
        %v864 = vadd.f32 %v825, 1.0
        %v865 = vadd.f32 %v827, 1.0
        %v866 = vadd.f32 %v829, 1.0
        %v867 = vadd.f32 %v831, 1.0
        %v868 = vadd.f32 %v833, 1.0
        %v869 = vadd.f32 %v835, 1.0
        %v870 = vadd.f32 %v837, 1.0
        %v871 = vadd.f32 %v839, 1.0
        %v872 = vrcp.pop %v840
        %v873 = vmul.f32 1.0, %v872
        %v874 = vrcp.pop %v841
        %v875 = vmul.f32 1.0, %v874
        %v876 = vrcp.pop %v842
        %v877 = vmul.f32 1.0, %v876
        %v878 = vrcp.pop %v843
        %v879 = vmul.f32 1.0, %v878
        %v880 = vrcp.pop %v844
        %v881 = vmul.f32 1.0, %v880
        %v882 = vrcp.pop %v845
        %v883 = vmul.f32 1.0, %v882
        %v884 = vrcp.pop %v846
        %v885 = vmul.f32 1.0, %v884
        %v886 = vrcp.pop %v847
        %v887 = vmul.f32 1.0, %v886
        %v888 = vrcp.pop %v848
        %v889 = vmul.f32 1.0, %v888
        %v890 = vrcp.pop %v849
        %v891 = vmul.f32 1.0, %v890
        %v892 = vrcp.pop %v850
        %v893 = vmul.f32 1.0, %v892
        %v894 = vrcp.pop %v851
        %v895 = vmul.f32 1.0, %v894
        %v896 = vrcp.pop %v852
        %v897 = vmul.f32 1.0, %v896
        %v898 = vrcp.pop %v853
        %v899 = vmul.f32 1.0, %v898
        %v900 = vrcp.pop %v854
        %v901 = vmul.f32 1.0, %v900
        %v902 = vrcp.pop %v855
        %v903 = vmul.f32 1.0, %v902
        %v904 = vrcp.pop %v856
        %v905 = vmul.f32 1.0, %v904
        %v906 = vrcp.pop %v857
        %v907 = vmul.f32 1.0, %v906
        %v908 = vrcp.pop %v858
        %v909 = vmul.f32 1.0, %v908
        %v910 = vrcp.pop %v859
        %v911 = vmul.f32 1.0, %v910
        %v912 = vrcp.pop %v860
        %v913 = vmul.f32 1.0, %v912
        %v914 = vrcp.pop %v861
        %v915 = vmul.f32 1.0, %v914
        %v916 = vrcp.pop %v862
        %v917 = vmul.f32 1.0, %v916
        %v918 = vrcp.pop %v863
        %v919 = vmul.f32 1.0, %v918
        %v920 = vrcp.pop %v864
        %v921 = vmul.f32 1.0, %v920
        %v922 = vrcp.pop %v865
        %v923 = vmul.f32 1.0, %v922
        %v924 = vrcp.pop %v866
        %v925 = vmul.f32 1.0, %v924
        %v926 = vrcp.pop %v867
        %v927 = vmul.f32 1.0, %v926
        %v928 = vrcp.pop %v868
        %v929 = vmul.f32 1.0, %v928
        %v930 = vrcp.pop %v869
        %v931 = vmul.f32 1.0, %v930
        %v932 = vrcp.pop %v870
        %v933 = vmul.f32 1.0, %v932
        %v934 = vrcp.pop %v871
        %v935 = vmul.f32 1.0, %v934
        %v936 = vmul.f32 %v712, %v873
        %v937 = vmul.f32 %v713, %v875
        %v938 = vmul.f32 %v714, %v877
        %v939 = vmul.f32 %v715, %v879
        %v940 = vmul.f32 %v716, %v881
        %v941 = vmul.f32 %v717, %v883
        %v942 = vmul.f32 %v718, %v885
        %v943 = vmul.f32 %v719, %v887
        %v944 = vmul.f32 %v720, %v889
        %v945 = vmul.f32 %v721, %v891
        %v946 = vmul.f32 %v722, %v893
        %v947 = vmul.f32 %v723, %v895
        %v948 = vmul.f32 %v724, %v897
        %v949 = vmul.f32 %v725, %v899
        %v950 = vmul.f32 %v726, %v901
        %v951 = vmul.f32 %v727, %v903
        %v952 = vmul.f32 %v728, %v905
        %v953 = vmul.f32 %v729, %v907
        %v954 = vmul.f32 %v730, %v909
        %v955 = vmul.f32 %v731, %v911
        %v956 = vmul.f32 %v732, %v913
        %v957 = vmul.f32 %v733, %v915
        %v958 = vmul.f32 %v734, %v917
        %v959 = vmul.f32 %v735, %v919
        %v960 = vmul.f32 %v736, %v921
        %v961 = vmul.f32 %v737, %v923
        %v962 = vmul.f32 %v738, %v925
        %v963 = vmul.f32 %v739, %v927
        %v964 = vmul.f32 %v740, %v929
        %v965 = vmul.f32 %v741, %v931
        %v966 = vmul.f32 %v742, %v933
        %v967 = vmul.f32 %v743, %v935
        %v968 = vpack.c.bf16 %v937, %v936
        %v969 = vpack.c.bf16 %v939, %v938
        %v970 = vpack.c.bf16 %v941, %v940
        %v971 = vpack.c.bf16 %v943, %v942
        %v972 = vpack.c.bf16 %v945, %v944
        %v973 = vpack.c.bf16 %v947, %v946
        %v974 = vpack.c.bf16 %v949, %v948
        %v975 = vpack.c.bf16 %v951, %v950
        %v976 = vpack.c.bf16 %v953, %v952
        %v977 = vpack.c.bf16 %v955, %v954
        %v978 = vpack.c.bf16 %v957, %v956
        %v979 = vpack.c.bf16 %v959, %v958
        %v980 = vpack.c.bf16 %v961, %v960
        %v981 = vpack.c.bf16 %v963, %v962
        %v982 = vpack.c.bf16 %v965, %v964
        %v983 = vpack.c.bf16 %v967, %v966
        %v984 = vld [vmem:[%s3] sm:$0xf]
        %v985 = vld [vmem:[%s3 + $0x4] sm:$0xf]
        %v986 = vld [vmem:[%s3 + $0x8] sm:$0xf]
        %v987 = vld [vmem:[%s3 + $0xc] sm:$0xf]
        %v988 = vld [vmem:[%s3 + $0x10] sm:$0xf]
        %v989 = vld [vmem:[%s3 + $0x14] sm:$0xf]
        %v990 = vld [vmem:[%s3 + $0x18] sm:$0xf]
        %v991 = vld [vmem:[%s3 + $0x1c] sm:$0xf]
        %v992 = vld [vmem:[%s3 + $0x20] sm:$0xf]
        %v993 = vld [vmem:[%s3 + $0x24] sm:$0xf]
        %v994 = vld [vmem:[%s3 + $0x28] sm:$0xf]
        %v995 = vld [vmem:[%s3 + $0x2c] sm:$0xf]
        %v996 = vld [vmem:[%s3 + $0x30] sm:$0xf]
        %v997 = vld [vmem:[%s3 + $0x34] sm:$0xf]
        %v998 = vld [vmem:[%s3 + $0x38] sm:$0xf]
        %v999 = vld [vmem:[%s3 + $0x3c] sm:$0xf]
        %v1016 = vunpack.c.l.b16 %v984
        %v1017 = vunpack.c.l.b16 %v985
        %v1018 = vunpack.c.l.b16 %v986
        %v1019 = vunpack.c.l.b16 %v987
        %v1020 = vunpack.c.l.b16 %v988
        %v1021 = vunpack.c.l.b16 %v989
        %v1022 = vunpack.c.l.b16 %v990
        %v1023 = vunpack.c.l.b16 %v991
        %v1024 = vunpack.c.l.b16 %v992
        %v1025 = vunpack.c.l.b16 %v993
        %v1026 = vunpack.c.l.b16 %v994
        %v1027 = vunpack.c.l.b16 %v995
        %v1028 = vunpack.c.l.b16 %v996
        %v1029 = vunpack.c.l.b16 %v997
        %v1030 = vunpack.c.l.b16 %v998
        %v1031 = vunpack.c.l.b16 %v999
        %v1032 = vpack.c.b16 %v1017, %v1016
        %v1033 = vpack.c.b16 %v1019, %v1018
        %v1034 = vpack.c.b16 %v1021, %v1020
        %v1035 = vpack.c.b16 %v1023, %v1022
        %v1036 = vpack.c.b16 %v1025, %v1024
        %v1037 = vpack.c.b16 %v1027, %v1026
        %v1038 = vpack.c.b16 %v1029, %v1028
        %v1039 = vpack.c.b16 %v1031, %v1030
        %1048 = vmatprep.subr.bf16.mxu0 0
        %1049 = vmatpush1.bf16.msra.mxu0 %v1032
        %1050 = vmatprep.subr.bf16.mxu0 0
        %1051 = vmatpush1.bf16.msra.mxu0 %v1033
        %1052 = vmatprep.subr.bf16.mxu0 0
        %1053 = vmatpush1.bf16.msra.mxu0 %v1034
        %1054 = vmatprep.subr.bf16.mxu0 0
        %1055 = vmatpush1.bf16.msra.mxu0 %v1035
        %1056 = vmatprep.subr.bf16.mxu0 0
        %1057 = vmatpush1.bf16.msra.mxu0 %v1036
        %1058 = vmatprep.subr.bf16.mxu0 0
        %1059 = vmatpush1.bf16.msra.mxu0 %v1037
        %1060 = vmatprep.subr.bf16.mxu0 0
        %1061 = vmatpush1.bf16.msra.mxu0 %v1038
        %1062 = vmatprep.subr.bf16.mxu0 0
        %1063 = vmatpush1.bf16.msra.mxu0 %v1039
        %1064 = vmatprep.subr.bf16.mxu0 0
        %1065 = vmatpush1.bf16.msra.mxu0 0
        %1066 = vmatprep.subr.bf16.mxu0 0
        %1067 = vmatpush1.bf16.msra.mxu0 0
        %1068 = vmatprep.subr.bf16.mxu0 0
        %1069 = vmatpush1.bf16.msra.mxu0 0
        %1070 = vmatprep.subr.bf16.mxu0 0
        %1071 = vmatpush1.bf16.msra.mxu0 0
        %1072 = vmatprep.subr.bf16.mxu0 0
        %1073 = vmatpush1.bf16.msra.mxu0 0
        %1074 = vmatprep.subr.bf16.mxu0 0
        %1075 = vmatpush1.bf16.msra.mxu0 0
        %1076 = vmatprep.subr.bf16.mxu0 0
        %1077 = vmatpush1.bf16.msra.mxu0 0
        %1078 = vmatprep.subr.bf16.mxu0 0
        %1079 = vmatpush1.bf16.msra.mxu0 0
        %1080 = vmatprep.mubr.bf16.mxu0 0
        %1081 = vmatmul.mubr.bf16.gmra.mrb[0].mxu0 %v968
        %v1082 = vpop.f32.mrb[0].mxu0
        %v1083 = vadd.f32 0.0, %v1082
        %v1084 = vpop.f32.mrb[0].mxu0
        %v1085 = vpop.f32.mrb[0].mxu0
        %v1086 = vadd.f32 0.0, %v1085
        %v1087 = vpop.f32.mrb[0].mxu0
        %1088 = vmatprep.mubr.bf16.mxu0 0
        %1089 = vmatmul.mubr.bf16.gmra.mrb[0].mxu0 %v969
        %v1090 = vpop.f32.mrb[0].mxu0
        %v1091 = vadd.f32 0.0, %v1090
        %v1092 = vpop.f32.mrb[0].mxu0
        %v1093 = vpop.f32.mrb[0].mxu0
        %v1094 = vadd.f32 0.0, %v1093
        %v1095 = vpop.f32.mrb[0].mxu0
        %1096 = vmatprep.mubr.bf16.mxu0 0
        %1097 = vmatmul.mubr.bf16.gmra.mrb[0].mxu0 %v970
        %v1098 = vpop.f32.mrb[0].mxu0
        %v1099 = vadd.f32 0.0, %v1098
        %v1100 = vpop.f32.mrb[0].mxu0
        %v1101 = vpop.f32.mrb[0].mxu0
        %v1102 = vadd.f32 0.0, %v1101
        %v1103 = vpop.f32.mrb[0].mxu0
        %1104 = vmatprep.mubr.bf16.mxu0 0
        %1105 = vmatmul.mubr.bf16.gmra.mrb[0].mxu0 %v971
        %v1106 = vpop.f32.mrb[0].mxu0
        %v1107 = vadd.f32 0.0, %v1106
        %v1108 = vpop.f32.mrb[0].mxu0
        %v1109 = vpop.f32.mrb[0].mxu0
        %v1110 = vadd.f32 0.0, %v1109
        %v1111 = vpop.f32.mrb[0].mxu0
        %1112 = vmatprep.mubr.bf16.mxu0 0
        %1113 = vmatmul.mubr.bf16.gmra.mrb[0].mxu0 %v972
        %v1114 = vpop.f32.mrb[0].mxu0
        %v1115 = vadd.f32 0.0, %v1114
        %v1116 = vpop.f32.mrb[0].mxu0
        %v1117 = vpop.f32.mrb[0].mxu0
        %v1118 = vadd.f32 0.0, %v1117
        %v1119 = vpop.f32.mrb[0].mxu0
        %1120 = vmatprep.mubr.bf16.mxu0 0
        %1121 = vmatmul.mubr.bf16.gmra.mrb[0].mxu0 %v973
        %v1122 = vpop.f32.mrb[0].mxu0
        %v1123 = vadd.f32 0.0, %v1122
        %v1124 = vpop.f32.mrb[0].mxu0
        %v1125 = vpop.f32.mrb[0].mxu0
        %v1126 = vadd.f32 0.0, %v1125
        %v1127 = vpop.f32.mrb[0].mxu0
        %1128 = vmatprep.mubr.bf16.mxu0 0
        %1129 = vmatmul.mubr.bf16.gmra.mrb[0].mxu0 %v974
        %v1130 = vpop.f32.mrb[0].mxu0
        %v1131 = vadd.f32 0.0, %v1130
        %v1132 = vpop.f32.mrb[0].mxu0
        %v1133 = vpop.f32.mrb[0].mxu0
        %v1134 = vadd.f32 0.0, %v1133
        %v1135 = vpop.f32.mrb[0].mxu0
        %1136 = vmatprep.mubr.bf16.mxu0 0
        %1137 = vmatmul.mubr.bf16.gmra.mrb[0].mxu0 %v975
        %v1138 = vpop.f32.mrb[0].mxu0
        %v1139 = vadd.f32 0.0, %v1138
        %v1140 = vpop.f32.mrb[0].mxu0
        %v1141 = vpop.f32.mrb[0].mxu0
        %v1142 = vadd.f32 0.0, %v1141
        %v1143 = vpop.f32.mrb[0].mxu0
        %1144 = vmatprep.mubr.bf16.mxu0 0
        %1145 = vmatmul.mubr.bf16.gmra.mrb[0].mxu0 %v976
        %v1146 = vpop.f32.mrb[0].mxu0
        %v1147 = vadd.f32 0.0, %v1146
        %v1148 = vpop.f32.mrb[0].mxu0
        %v1149 = vpop.f32.mrb[0].mxu0
        %v1150 = vadd.f32 0.0, %v1149
        %v1151 = vpop.f32.mrb[0].mxu0
        %1152 = vmatprep.mubr.bf16.mxu0 0
        %1153 = vmatmul.mubr.bf16.gmra.mrb[0].mxu0 %v977
        %v1154 = vpop.f32.mrb[0].mxu0
        %v1155 = vadd.f32 0.0, %v1154
        %v1156 = vpop.f32.mrb[0].mxu0
        %v1157 = vpop.f32.mrb[0].mxu0
        %v1158 = vadd.f32 0.0, %v1157
        %v1159 = vpop.f32.mrb[0].mxu0
        %1160 = vmatprep.mubr.bf16.mxu0 0
        %1161 = vmatmul.mubr.bf16.gmra.mrb[0].mxu0 %v978
        %v1162 = vpop.f32.mrb[0].mxu0
        %v1163 = vadd.f32 0.0, %v1162
        %v1164 = vpop.f32.mrb[0].mxu0
        %v1165 = vpop.f32.mrb[0].mxu0
        %v1166 = vadd.f32 0.0, %v1165
        %v1167 = vpop.f32.mrb[0].mxu0
        %1168 = vmatprep.mubr.bf16.mxu0 0
        %1169 = vmatmul.mubr.bf16.gmra.mrb[0].mxu0 %v979
        %v1170 = vpop.f32.mrb[0].mxu0
        %v1171 = vadd.f32 0.0, %v1170
        %v1172 = vpop.f32.mrb[0].mxu0
        %v1173 = vpop.f32.mrb[0].mxu0
        %v1174 = vadd.f32 0.0, %v1173
        %v1175 = vpop.f32.mrb[0].mxu0
        %1176 = vmatprep.mubr.bf16.mxu0 0
        %1177 = vmatmul.mubr.bf16.gmra.mrb[0].mxu0 %v980
        %v1178 = vpop.f32.mrb[0].mxu0
        %v1179 = vadd.f32 0.0, %v1178
        %v1180 = vpop.f32.mrb[0].mxu0
        %v1181 = vpop.f32.mrb[0].mxu0
        %v1182 = vadd.f32 0.0, %v1181
        %v1183 = vpop.f32.mrb[0].mxu0
        %1184 = vmatprep.mubr.bf16.mxu0 0
        %1185 = vmatmul.mubr.bf16.gmra.mrb[0].mxu0 %v981
        %v1186 = vpop.f32.mrb[0].mxu0
        %v1187 = vadd.f32 0.0, %v1186
        %v1188 = vpop.f32.mrb[0].mxu0
        %v1189 = vpop.f32.mrb[0].mxu0
        %v1190 = vadd.f32 0.0, %v1189
        %v1191 = vpop.f32.mrb[0].mxu0
        %1192 = vmatprep.mubr.bf16.mxu0 0
        %1193 = vmatmul.mubr.bf16.gmra.mrb[0].mxu0 %v982
        %v1194 = vpop.f32.mrb[0].mxu0
        %v1195 = vadd.f32 0.0, %v1194
        %v1196 = vpop.f32.mrb[0].mxu0
        %v1197 = vpop.f32.mrb[0].mxu0
        %v1198 = vadd.f32 0.0, %v1197
        %v1199 = vpop.f32.mrb[0].mxu0
        %1200 = vmatprep.mubr.bf16.mxu0 0
        %1201 = vmatmul.mubr.bf16.gmra.mrb[0].mxu0 %v983
        %v1202 = vpop.f32.mrb[0].mxu0
        %v1203 = vadd.f32 0.0, %v1202
        %v1204 = vpop.f32.mrb[0].mxu0
        %v1205 = vpop.f32.mrb[0].mxu0
        %v1206 = vadd.f32 0.0, %v1205
        %v1207 = vpop.f32.mrb[0].mxu0
        %1208 = vdwg.mxu0
        %v1209 = vld [vmem:[%s1 + $0x2] sm:$0x1]
        %v1210 = vlaneseq
        %v1211 = vshrl.u32 %v1210, 7
        %v1212 = vsub.s32 0, %v1211
        %v1213 = vrot.slane %v1209, %v1212
        %v1214 = vmul.f32 %v1083, %v1213
        %v1215 = vmul.f32 %v1086, %v1213
        %v1216 = vmul.f32 %v1091, %v1213
        %v1217 = vmul.f32 %v1094, %v1213
        %v1218 = vmul.f32 %v1099, %v1213
        %v1219 = vmul.f32 %v1102, %v1213
        %v1220 = vmul.f32 %v1107, %v1213
        %v1221 = vmul.f32 %v1110, %v1213
        %v1222 = vmul.f32 %v1115, %v1213
        %v1223 = vmul.f32 %v1118, %v1213
        %v1224 = vmul.f32 %v1123, %v1213
        %v1225 = vmul.f32 %v1126, %v1213
        %v1226 = vmul.f32 %v1131, %v1213
        %v1227 = vmul.f32 %v1134, %v1213
        %v1228 = vmul.f32 %v1139, %v1213
        %v1229 = vmul.f32 %v1142, %v1213
        %v1230 = vmul.f32 %v1147, %v1213
        %v1231 = vmul.f32 %v1150, %v1213
        %v1232 = vmul.f32 %v1155, %v1213
        %v1233 = vmul.f32 %v1158, %v1213
        %v1234 = vmul.f32 %v1163, %v1213
        %v1235 = vmul.f32 %v1166, %v1213
        %v1236 = vmul.f32 %v1171, %v1213
        %v1237 = vmul.f32 %v1174, %v1213
        %v1238 = vmul.f32 %v1179, %v1213
        %v1239 = vmul.f32 %v1182, %v1213
        %v1240 = vmul.f32 %v1187, %v1213
        %v1241 = vmul.f32 %v1190, %v1213
        %v1242 = vmul.f32 %v1195, %v1213
        %v1243 = vmul.f32 %v1198, %v1213
        %v1244 = vmul.f32 %v1203, %v1213
        %v1245 = vmul.f32 %v1206, %v1213
        %v1246 = vld [vmem:[%s1 + $0x3] sm:$0x1]
        %v1247 = vlaneseq
        %v1248 = vshrl.u32 %v1247, 7
        %v1249 = vsub.s32 0, %v1248
        %v1250 = vrot.slane %v1246, %v1249
        %v1251 = vadd.f32 %v1214, %v1250
        %v1252 = vadd.f32 %v1215, %v1250
        %v1253 = vadd.f32 %v1216, %v1250
        %v1254 = vadd.f32 %v1217, %v1250
        %v1255 = vadd.f32 %v1218, %v1250
        %v1256 = vadd.f32 %v1219, %v1250
        %v1257 = vadd.f32 %v1220, %v1250
        %v1258 = vadd.f32 %v1221, %v1250
        %v1259 = vadd.f32 %v1222, %v1250
        %v1260 = vadd.f32 %v1223, %v1250
        %v1261 = vadd.f32 %v1224, %v1250
        %v1262 = vadd.f32 %v1225, %v1250
        %v1263 = vadd.f32 %v1226, %v1250
        %v1264 = vadd.f32 %v1227, %v1250
        %v1265 = vadd.f32 %v1228, %v1250
        %v1266 = vadd.f32 %v1229, %v1250
        %v1267 = vadd.f32 %v1230, %v1250
        %v1268 = vadd.f32 %v1231, %v1250
        %v1269 = vadd.f32 %v1232, %v1250
        %v1270 = vadd.f32 %v1233, %v1250
        %v1271 = vadd.f32 %v1234, %v1250
        %v1272 = vadd.f32 %v1235, %v1250
        %v1273 = vadd.f32 %v1236, %v1250
        %v1274 = vadd.f32 %v1237, %v1250
        %v1275 = vadd.f32 %v1238, %v1250
        %v1276 = vadd.f32 %v1239, %v1250
        %v1277 = vadd.f32 %v1240, %v1250
        %v1278 = vadd.f32 %v1241, %v1250
        %v1279 = vadd.f32 %v1242, %v1250
        %v1280 = vadd.f32 %v1243, %v1250
        %v1281 = vadd.f32 %v1244, %v1250
        %v1282 = vadd.f32 %v1245, %v1250
        %v1283 = vxor.u32 %v1251, 2147483648
        %v1284 = vxor.u32 %v1252, 2147483648
        %v1285 = vxor.u32 %v1253, 2147483648
        %v1286 = vxor.u32 %v1254, 2147483648
        %v1287 = vxor.u32 %v1255, 2147483648
        %v1288 = vxor.u32 %v1256, 2147483648
        %v1289 = vxor.u32 %v1257, 2147483648
        %v1290 = vxor.u32 %v1258, 2147483648
        %v1291 = vxor.u32 %v1259, 2147483648
        %v1292 = vxor.u32 %v1260, 2147483648
        %v1293 = vxor.u32 %v1261, 2147483648
        %v1294 = vxor.u32 %v1262, 2147483648
        %v1295 = vxor.u32 %v1263, 2147483648
        %v1296 = vxor.u32 %v1264, 2147483648
        %v1297 = vxor.u32 %v1265, 2147483648
        %v1298 = vxor.u32 %v1266, 2147483648
        %v1299 = vxor.u32 %v1267, 2147483648
        %v1300 = vxor.u32 %v1268, 2147483648
        %v1301 = vxor.u32 %v1269, 2147483648
        %v1302 = vxor.u32 %v1270, 2147483648
        %v1303 = vxor.u32 %v1271, 2147483648
        %v1304 = vxor.u32 %v1272, 2147483648
        %v1305 = vxor.u32 %v1273, 2147483648
        %v1306 = vxor.u32 %v1274, 2147483648
        %v1307 = vxor.u32 %v1275, 2147483648
        %v1308 = vxor.u32 %v1276, 2147483648
        %v1309 = vxor.u32 %v1277, 2147483648
        %v1310 = vxor.u32 %v1278, 2147483648
        %v1311 = vxor.u32 %v1279, 2147483648
        %v1312 = vxor.u32 %v1280, 2147483648
        %v1313 = vxor.u32 %v1281, 2147483648
        %v1314 = vxor.u32 %v1282, 2147483648
        %v1315 = vmul.f32 %v1283, 1.442695
        %v1316 = vpow.pop %v1315
        %v1317 = vmul.f32 %v1284, 1.442695
        %v1318 = vpow.pop %v1317
        %v1319 = vmul.f32 %v1285, 1.442695
        %v1320 = vpow.pop %v1319
        %v1321 = vmul.f32 %v1286, 1.442695
        %v1322 = vpow.pop %v1321
        %v1323 = vmul.f32 %v1287, 1.442695
        %v1324 = vpow.pop %v1323
        %v1325 = vmul.f32 %v1288, 1.442695
        %v1326 = vpow.pop %v1325
        %v1327 = vmul.f32 %v1289, 1.442695
        %v1328 = vpow.pop %v1327
        %v1329 = vmul.f32 %v1290, 1.442695
        %v1330 = vpow.pop %v1329
        %v1331 = vmul.f32 %v1291, 1.442695
        %v1332 = vpow.pop %v1331
        %v1333 = vmul.f32 %v1292, 1.442695
        %v1334 = vpow.pop %v1333
        %v1335 = vmul.f32 %v1293, 1.442695
        %v1336 = vpow.pop %v1335
        %v1337 = vmul.f32 %v1294, 1.442695
        %v1338 = vpow.pop %v1337
        %v1339 = vmul.f32 %v1295, 1.442695
        %v1340 = vpow.pop %v1339
        %v1341 = vmul.f32 %v1296, 1.442695
        %v1342 = vpow.pop %v1341
        %v1343 = vmul.f32 %v1297, 1.442695
        %v1344 = vpow.pop %v1343
        %v1345 = vmul.f32 %v1298, 1.442695
        %v1346 = vpow.pop %v1345
        %v1347 = vmul.f32 %v1299, 1.442695
        %v1348 = vpow.pop %v1347
        %v1349 = vmul.f32 %v1300, 1.442695
        %v1350 = vpow.pop %v1349
        %v1351 = vmul.f32 %v1301, 1.442695
        %v1352 = vpow.pop %v1351
        %v1353 = vmul.f32 %v1302, 1.442695
        %v1354 = vpow.pop %v1353
        %v1355 = vmul.f32 %v1303, 1.442695
        %v1356 = vpow.pop %v1355
        %v1357 = vmul.f32 %v1304, 1.442695
        %v1358 = vpow.pop %v1357
        %v1359 = vmul.f32 %v1305, 1.442695
        %v1360 = vpow.pop %v1359
        %v1361 = vmul.f32 %v1306, 1.442695
        %v1362 = vpow.pop %v1361
        %v1363 = vmul.f32 %v1307, 1.442695
        %v1364 = vpow.pop %v1363
        %v1365 = vmul.f32 %v1308, 1.442695
        %v1366 = vpow.pop %v1365
        %v1367 = vmul.f32 %v1309, 1.442695
        %v1368 = vpow.pop %v1367
        %v1369 = vmul.f32 %v1310, 1.442695
        %v1370 = vpow.pop %v1369
        %v1371 = vmul.f32 %v1311, 1.442695
        %v1372 = vpow.pop %v1371
        %v1373 = vmul.f32 %v1312, 1.442695
        %v1374 = vpow.pop %v1373
        %v1375 = vmul.f32 %v1313, 1.442695
        %v1376 = vpow.pop %v1375
        %v1377 = vmul.f32 %v1314, 1.442695
        %v1378 = vpow.pop %v1377
        %v1379 = vadd.f32 %v1316, 1.0
        %v1380 = vadd.f32 %v1318, 1.0
        %v1381 = vadd.f32 %v1320, 1.0
        %v1382 = vadd.f32 %v1322, 1.0
        %v1383 = vadd.f32 %v1324, 1.0
        %v1384 = vadd.f32 %v1326, 1.0
        %v1385 = vadd.f32 %v1328, 1.0
        %v1386 = vadd.f32 %v1330, 1.0
        %v1387 = vadd.f32 %v1332, 1.0
        %v1388 = vadd.f32 %v1334, 1.0
        %v1389 = vadd.f32 %v1336, 1.0
        %v1390 = vadd.f32 %v1338, 1.0
        %v1391 = vadd.f32 %v1340, 1.0
        %v1392 = vadd.f32 %v1342, 1.0
        %v1393 = vadd.f32 %v1344, 1.0
        %v1394 = vadd.f32 %v1346, 1.0
        %v1395 = vadd.f32 %v1348, 1.0
        %v1396 = vadd.f32 %v1350, 1.0
        %v1397 = vadd.f32 %v1352, 1.0
        %v1398 = vadd.f32 %v1354, 1.0
        %v1399 = vadd.f32 %v1356, 1.0
        %v1400 = vadd.f32 %v1358, 1.0
        %v1401 = vadd.f32 %v1360, 1.0
        %v1402 = vadd.f32 %v1362, 1.0
        %v1403 = vadd.f32 %v1364, 1.0
        %v1404 = vadd.f32 %v1366, 1.0
        %v1405 = vadd.f32 %v1368, 1.0
        %v1406 = vadd.f32 %v1370, 1.0
        %v1407 = vadd.f32 %v1372, 1.0
        %v1408 = vadd.f32 %v1374, 1.0
        %v1409 = vadd.f32 %v1376, 1.0
        %v1410 = vadd.f32 %v1378, 1.0
        %v1411 = vrcp.pop %v1379
        %v1412 = vmul.f32 1.0, %v1411
        %v1413 = vrcp.pop %v1380
        %v1414 = vmul.f32 1.0, %v1413
        %v1415 = vrcp.pop %v1381
        %v1416 = vmul.f32 1.0, %v1415
        %v1417 = vrcp.pop %v1382
        %v1418 = vmul.f32 1.0, %v1417
        %v1419 = vrcp.pop %v1383
        %v1420 = vmul.f32 1.0, %v1419
        %v1421 = vrcp.pop %v1384
        %v1422 = vmul.f32 1.0, %v1421
        %v1423 = vrcp.pop %v1385
        %v1424 = vmul.f32 1.0, %v1423
        %v1425 = vrcp.pop %v1386
        %v1426 = vmul.f32 1.0, %v1425
        %v1427 = vrcp.pop %v1387
        %v1428 = vmul.f32 1.0, %v1427
        %v1429 = vrcp.pop %v1388
        %v1430 = vmul.f32 1.0, %v1429
        %v1431 = vrcp.pop %v1389
        %v1432 = vmul.f32 1.0, %v1431
        %v1433 = vrcp.pop %v1390
        %v1434 = vmul.f32 1.0, %v1433
        %v1435 = vrcp.pop %v1391
        %v1436 = vmul.f32 1.0, %v1435
        %v1437 = vrcp.pop %v1392
        %v1438 = vmul.f32 1.0, %v1437
        %v1439 = vrcp.pop %v1393
        %v1440 = vmul.f32 1.0, %v1439
        %v1441 = vrcp.pop %v1394
        %v1442 = vmul.f32 1.0, %v1441
        %v1443 = vrcp.pop %v1395
        %v1444 = vmul.f32 1.0, %v1443
        %v1445 = vrcp.pop %v1396
        %v1446 = vmul.f32 1.0, %v1445
        %v1447 = vrcp.pop %v1397
        %v1448 = vmul.f32 1.0, %v1447
        %v1449 = vrcp.pop %v1398
        %v1450 = vmul.f32 1.0, %v1449
        %v1451 = vrcp.pop %v1399
        %v1452 = vmul.f32 1.0, %v1451
        %v1453 = vrcp.pop %v1400
        %v1454 = vmul.f32 1.0, %v1453
        %v1455 = vrcp.pop %v1401
        %v1456 = vmul.f32 1.0, %v1455
        %v1457 = vrcp.pop %v1402
        %v1458 = vmul.f32 1.0, %v1457
        %v1459 = vrcp.pop %v1403
        %v1460 = vmul.f32 1.0, %v1459
        %v1461 = vrcp.pop %v1404
        %v1462 = vmul.f32 1.0, %v1461
        %v1463 = vrcp.pop %v1405
        %v1464 = vmul.f32 1.0, %v1463
        %v1465 = vrcp.pop %v1406
        %v1466 = vmul.f32 1.0, %v1465
        %v1467 = vrcp.pop %v1407
        %v1468 = vmul.f32 1.0, %v1467
        %v1469 = vrcp.pop %v1408
        %v1470 = vmul.f32 1.0, %v1469
        %v1471 = vrcp.pop %v1409
        %v1472 = vmul.f32 1.0, %v1471
        %v1473 = vrcp.pop %v1410
        %v1474 = vmul.f32 1.0, %v1473
        %v1475 = vmul.f32 %v1251, %v1412
        %v1476 = vmul.f32 %v1252, %v1414
        %v1477 = vmul.f32 %v1253, %v1416
        %v1478 = vmul.f32 %v1254, %v1418
        %v1479 = vmul.f32 %v1255, %v1420
        %v1480 = vmul.f32 %v1256, %v1422
        %v1481 = vmul.f32 %v1257, %v1424
        %v1482 = vmul.f32 %v1258, %v1426
        %v1483 = vmul.f32 %v1259, %v1428
        %v1484 = vmul.f32 %v1260, %v1430
        %v1485 = vmul.f32 %v1261, %v1432
        %v1486 = vmul.f32 %v1262, %v1434
        %v1487 = vmul.f32 %v1263, %v1436
        %v1488 = vmul.f32 %v1264, %v1438
        %v1489 = vmul.f32 %v1265, %v1440
        %v1490 = vmul.f32 %v1266, %v1442
        %v1491 = vmul.f32 %v1267, %v1444
        %v1492 = vmul.f32 %v1268, %v1446
        %v1493 = vmul.f32 %v1269, %v1448
        %v1494 = vmul.f32 %v1270, %v1450
        %v1495 = vmul.f32 %v1271, %v1452
        %v1496 = vmul.f32 %v1272, %v1454
        %v1497 = vmul.f32 %v1273, %v1456
        %v1498 = vmul.f32 %v1274, %v1458
        %v1499 = vmul.f32 %v1275, %v1460
        %v1500 = vmul.f32 %v1276, %v1462
        %v1501 = vmul.f32 %v1277, %v1464
        %v1502 = vmul.f32 %v1278, %v1466
        %v1503 = vmul.f32 %v1279, %v1468
        %v1504 = vmul.f32 %v1280, %v1470
        %v1505 = vmul.f32 %v1281, %v1472
        %v1506 = vmul.f32 %v1282, %v1474
        %vm1507 = vcmask 523264
        %1508 = vst.msk [vmem:[#allocation2] sm:$0xff] %vm1507, 0.0
        %1509 = vst.msk [vmem:[#allocation2 + $0x8] sm:$0xff] %vm1507, 0.0
        %vm1510 = vcmask 517120
        %1511 = vst.msk [vmem:[#allocation2 + $0x10] sm:$0x3] %vm1510, 0.0
        %1512 = vst.msk [vmem:[#allocation2 + $0x18] sm:$0xff] %vm1507, 0.0
        %1513 = vst.msk [vmem:[#allocation2 + $0x20] sm:$0xff] %vm1507, 0.0
        %1514 = vst.msk [vmem:[#allocation2 + $0x28] sm:$0x3] %vm1510, 0.0
        %1515 = vst.msk [vmem:[#allocation2 + $0x30] sm:$0xff] %vm1507, 0.0
        %1516 = vst.msk [vmem:[#allocation2 + $0x38] sm:$0xff] %vm1507, 0.0
        %1517 = vst.msk [vmem:[#allocation2 + $0x40] sm:$0x3] %vm1510, 0.0
        %1518 = vst.msk [vmem:[#allocation2 + $0x48] sm:$0xff] %vm1507, 0.0
        %1519 = vst.msk [vmem:[#allocation2 + $0x50] sm:$0xff] %vm1507, 0.0
        %1520 = vst.msk [vmem:[#allocation2 + $0x58] sm:$0x3] %vm1510, 0.0
        %1521 = vst.msk [vmem:[#allocation2 + $0x60] sm:$0xff] %vm1507, 0.0
        %1522 = vst.msk [vmem:[#allocation2 + $0x68] sm:$0xff] %vm1507, 0.0
        %1523 = vst.msk [vmem:[#allocation2 + $0x70] sm:$0x3] %vm1510, 0.0
        %1524 = vst.msk [vmem:[#allocation2 + $0x78] sm:$0xff] %vm1507, 0.0
        %1525 = vst.msk [vmem:[#allocation2 + $0x80] sm:$0xff] %vm1507, 0.0
        %1526 = vst.msk [vmem:[#allocation2 + $0x88] sm:$0x3] %vm1510, 0.0
        %1527 = vst.msk [vmem:[#allocation2 + $0x90] sm:$0xff] %vm1507, 0.0
        %1528 = vst.msk [vmem:[#allocation2 + $0x98] sm:$0xff] %vm1507, 0.0
        %1529 = vst.msk [vmem:[#allocation2 + $0xa0] sm:$0x3] %vm1510, 0.0
        %1530 = vst.msk [vmem:[#allocation2 + $0xa8] sm:$0xff] %vm1507, 0.0
        %1531 = vst.msk [vmem:[#allocation2 + $0xb0] sm:$0xff] %vm1507, 0.0
        %1532 = vst.msk [vmem:[#allocation2 + $0xb8] sm:$0x3] %vm1510, 0.0
        %1533 = vst.msk [vmem:[#allocation2 + $0xc0] sm:$0xff] %vm1507, 0.0
        %1534 = vst.msk [vmem:[#allocation2 + $0xc8] sm:$0xff] %vm1507, 0.0
        %1535 = vst.msk [vmem:[#allocation2 + $0xd0] sm:$0x3] %vm1510, 0.0
        %1536 = vst.msk [vmem:[#allocation2 + $0xd8] sm:$0xff] %vm1507, 0.0
        %1537 = vst.msk [vmem:[#allocation2 + $0xe0] sm:$0xff] %vm1507, 0.0
        %1538 = vst.msk [vmem:[#allocation2 + $0xe8] sm:$0x3] %vm1510, 0.0
        %1539 = vst.msk [vmem:[#allocation2 + $0xf0] sm:$0xff] %vm1507, 0.0
        %1540 = vst.msk [vmem:[#allocation2 + $0xf8] sm:$0xff] %vm1507, 0.0
        %1541 = vst.msk [vmem:[#allocation2 + $0x100] sm:$0x3] %vm1510, 0.0
        %1542 = vst.msk [vmem:[#allocation2 + $0x108] sm:$0xff] %vm1507, 0.0
        %1543 = vst.msk [vmem:[#allocation2 + $0x110] sm:$0xff] %vm1507, 0.0
        %1544 = vst.msk [vmem:[#allocation2 + $0x118] sm:$0x3] %vm1510, 0.0
        %1545 = vst.msk [vmem:[#allocation2 + $0x120] sm:$0xff] %vm1507, 0.0
        %1546 = vst.msk [vmem:[#allocation2 + $0x128] sm:$0xff] %vm1507, 0.0
        %1547 = vst.msk [vmem:[#allocation2 + $0x130] sm:$0x3] %vm1510, 0.0
        %1548 = vst.msk [vmem:[#allocation2 + $0x138] sm:$0xff] %vm1507, 0.0
        %1549 = vst.msk [vmem:[#allocation2 + $0x140] sm:$0xff] %vm1507, 0.0
        %1550 = vst.msk [vmem:[#allocation2 + $0x148] sm:$0x3] %vm1510, 0.0
        %1551 = vst.msk [vmem:[#allocation2 + $0x150] sm:$0xff] %vm1507, 0.0
        %1552 = vst.msk [vmem:[#allocation2 + $0x158] sm:$0xff] %vm1507, 0.0
        %1553 = vst.msk [vmem:[#allocation2 + $0x160] sm:$0x3] %vm1510, 0.0
        %1554 = vst.msk [vmem:[#allocation2 + $0x168] sm:$0xff] %vm1507, 0.0
        %1555 = vst.msk [vmem:[#allocation2 + $0x170] sm:$0xff] %vm1507, 0.0
        %1556 = vst.msk [vmem:[#allocation2 + $0x178] sm:$0x3] %vm1510, 0.0
        %1557 = vst.msk [vmem:[#allocation2 + $0x180] sm:$0xff] %vm1507, 0.0
        %1558 = vst.msk [vmem:[#allocation2 + $0x188] sm:$0xff] %vm1507, 0.0
        %1559 = vst.msk [vmem:[#allocation2 + $0x190] sm:$0x3] %vm1510, 0.0
        %1560 = vst.msk [vmem:[#allocation2 + $0x198] sm:$0xff] %vm1507, 0.0
        %1561 = vst.msk [vmem:[#allocation2 + $0x1a0] sm:$0xff] %vm1507, 0.0
        %1562 = vst.msk [vmem:[#allocation2 + $0x1a8] sm:$0x3] %vm1510, 0.0
        %s1563 = scalar_lea.vmem [#allocation2], 24
        %1564 = vst.msk [vmem:[%s1563 + $0x1] sm:$0xff] %vm1507, %v1475
        %1565 = vst.msk [vmem:[%s1563 + $0x9] sm:$0xff] %vm1507, %v1476
        %1566 = vst.msk [vmem:[%s1563 + $0x19] sm:$0xff] %vm1507, %v1477
        %1567 = vst.msk [vmem:[%s1563 + $0x21] sm:$0xff] %vm1507, %v1478
        %1568 = vst.msk [vmem:[%s1563 + $0x31] sm:$0xff] %vm1507, %v1479
        %1569 = vst.msk [vmem:[%s1563 + $0x39] sm:$0xff] %vm1507, %v1480
        %1570 = vst.msk [vmem:[%s1563 + $0x49] sm:$0xff] %vm1507, %v1481
        %1571 = vst.msk [vmem:[%s1563 + $0x51] sm:$0xff] %vm1507, %v1482
        %1572 = vst.msk [vmem:[%s1563 + $0x61] sm:$0xff] %vm1507, %v1483
        %1573 = vst.msk [vmem:[%s1563 + $0x69] sm:$0xff] %vm1507, %v1484
        %1574 = vst.msk [vmem:[%s1563 + $0x79] sm:$0xff] %vm1507, %v1485
        %1575 = vst.msk [vmem:[%s1563 + $0x81] sm:$0xff] %vm1507, %v1486
        %1576 = vst.msk [vmem:[%s1563 + $0x91] sm:$0xff] %vm1507, %v1487
        %1577 = vst.msk [vmem:[%s1563 + $0x99] sm:$0xff] %vm1507, %v1488
        %1578 = vst.msk [vmem:[%s1563 + $0xa9] sm:$0xff] %vm1507, %v1489
        %1579 = vst.msk [vmem:[%s1563 + $0xb1] sm:$0xff] %vm1507, %v1490
        %1580 = vst.msk [vmem:[%s1563 + $0xc1] sm:$0xff] %vm1507, %v1491
        %1581 = vst.msk [vmem:[%s1563 + $0xc9] sm:$0xff] %vm1507, %v1492
        %1582 = vst.msk [vmem:[%s1563 + $0xd9] sm:$0xff] %vm1507, %v1493
        %1583 = vst.msk [vmem:[%s1563 + $0xe1] sm:$0xff] %vm1507, %v1494
        %1584 = vst.msk [vmem:[%s1563 + $0xf1] sm:$0xff] %vm1507, %v1495
        %1585 = vst.msk [vmem:[%s1563 + $0xf9] sm:$0xff] %vm1507, %v1496
        %1586 = vst.msk [vmem:[%s1563 + $0x109] sm:$0xff] %vm1507, %v1497
        %1587 = vst.msk [vmem:[%s1563 + $0x111] sm:$0xff] %vm1507, %v1498
        %1588 = vst.msk [vmem:[%s1563 + $0x121] sm:$0xff] %vm1507, %v1499
        %1589 = vst.msk [vmem:[%s1563 + $0x129] sm:$0xff] %vm1507, %v1500
        %1590 = vst.msk [vmem:[%s1563 + $0x139] sm:$0xff] %vm1507, %v1501
        %1591 = vst.msk [vmem:[%s1563 + $0x141] sm:$0xff] %vm1507, %v1502
        %1592 = vst.msk [vmem:[%s1563 + $0x151] sm:$0xff] %vm1507, %v1503
        %1593 = vst.msk [vmem:[%s1563 + $0x159] sm:$0xff] %vm1507, %v1504
        %1594 = vst.msk [vmem:[%s1563 + $0x169] sm:$0xff] %vm1507, %v1505
        %1595 = vst.msk [vmem:[%s1563 + $0x171] sm:$0xff] %vm1507, %v1506
        %v1596 = vld [vmem:[%s1 + $0x10] sm:$0xff]
        %v1597 = vld [vmem:[%s1 + $0x18] sm:$0x1]
        %v1598 = vld [vmem:[#allocation2] sm:$0xff]
        %v1599 = vld [vmem:[#allocation2 + $0x8] sm:$0xff]
        %v1600 = vld [vmem:[#allocation2 + $0x18] sm:$0xff]
        %v1601 = vld [vmem:[#allocation2 + $0x20] sm:$0xff]
        %v1602 = vld [vmem:[#allocation2 + $0x30] sm:$0xff]
        %v1603 = vld [vmem:[#allocation2 + $0x38] sm:$0xff]
        %v1604 = vld [vmem:[#allocation2 + $0x48] sm:$0xff]
        %v1605 = vld [vmem:[#allocation2 + $0x50] sm:$0xff]
        %v1606 = vld [vmem:[#allocation2 + $0x60] sm:$0xff]
        %v1607 = vld [vmem:[#allocation2 + $0x68] sm:$0xff]
        %v1608 = vld [vmem:[#allocation2 + $0x78] sm:$0xff]
        %v1609 = vld [vmem:[#allocation2 + $0x80] sm:$0xff]
        %v1610 = vld [vmem:[#allocation2 + $0x90] sm:$0xff]
        %v1611 = vld [vmem:[#allocation2 + $0x98] sm:$0xff]
        %v1612 = vld [vmem:[#allocation2 + $0xa8] sm:$0xff]
        %v1613 = vld [vmem:[#allocation2 + $0xb0] sm:$0xff]
        %v1614 = vld [vmem:[#allocation2 + $0xc0] sm:$0xff]
        %v1615 = vld [vmem:[#allocation2 + $0xc8] sm:$0xff]
        %v1616 = vld [vmem:[#allocation2 + $0xd8] sm:$0xff]
        %v1617 = vld [vmem:[#allocation2 + $0xe0] sm:$0xff]
        %v1618 = vld [vmem:[#allocation2 + $0xf0] sm:$0xff]
        %v1619 = vld [vmem:[#allocation2 + $0xf8] sm:$0xff]
        %v1620 = vld [vmem:[#allocation2 + $0x108] sm:$0xff]
        %v1621 = vld [vmem:[#allocation2 + $0x110] sm:$0xff]
        %v1622 = vld [vmem:[#allocation2 + $0x120] sm:$0xff]
        %v1623 = vld [vmem:[#allocation2 + $0x128] sm:$0xff]
        %v1624 = vld [vmem:[#allocation2 + $0x138] sm:$0xff]
        %v1625 = vld [vmem:[#allocation2 + $0x140] sm:$0xff]
        %v1626 = vld [vmem:[#allocation2 + $0x150] sm:$0xff]
        %v1627 = vld [vmem:[#allocation2 + $0x158] sm:$0xff]
        %v1628 = vld [vmem:[#allocation2 + $0x168] sm:$0xff]
        %v1629 = vld [vmem:[#allocation2 + $0x170] sm:$0xff]
        %v1630 = vlaneseq
        %v1631 = vshrl.u32 %v1630, 7
        %v1632 = vsub.s32 0, %v1631
        %v1633 = vrot.slane %v1596, %v1632
        %v1634 = vmul.f32 %v1598, %v1633
        %v1635 = vmul.f32 %v1599, %v1633
        %v1636 = vmul.f32 %v1600, %v1633
        %v1637 = vmul.f32 %v1601, %v1633
        %v1638 = vmul.f32 %v1602, %v1633
        %v1639 = vmul.f32 %v1603, %v1633
        %v1640 = vmul.f32 %v1604, %v1633
        %v1641 = vmul.f32 %v1605, %v1633
        %v1642 = vmul.f32 %v1606, %v1633
        %v1643 = vmul.f32 %v1607, %v1633
        %v1644 = vmul.f32 %v1608, %v1633
        %v1645 = vmul.f32 %v1609, %v1633
        %v1646 = vmul.f32 %v1610, %v1633
        %v1647 = vmul.f32 %v1611, %v1633
        %v1648 = vmul.f32 %v1612, %v1633
        %v1649 = vmul.f32 %v1613, %v1633
        %v1650 = vmul.f32 %v1614, %v1633
        %v1651 = vmul.f32 %v1615, %v1633
        %v1652 = vmul.f32 %v1616, %v1633
        %v1653 = vmul.f32 %v1617, %v1633
        %v1654 = vmul.f32 %v1618, %v1633
        %v1655 = vmul.f32 %v1619, %v1633
        %v1656 = vmul.f32 %v1620, %v1633
        %v1657 = vmul.f32 %v1621, %v1633
        %v1658 = vmul.f32 %v1622, %v1633
        %v1659 = vmul.f32 %v1623, %v1633
        %v1660 = vmul.f32 %v1624, %v1633
        %v1661 = vmul.f32 %v1625, %v1633
        %v1662 = vmul.f32 %v1626, %v1633
        %v1663 = vmul.f32 %v1627, %v1633
        %v1664 = vmul.f32 %v1628, %v1633
        %v1665 = vmul.f32 %v1629, %v1633
        %v1666 = vld [vmem:[#allocation2 + $0x1] sm:$0xff]
        %v1667 = vld [vmem:[#allocation2 + $0x9] sm:$0xff]
        %v1668 = vld [vmem:[#allocation2 + $0x19] sm:$0xff]
        %v1669 = vld [vmem:[#allocation2 + $0x21] sm:$0xff]
        %v1670 = vld [vmem:[#allocation2 + $0x31] sm:$0xff]
        %v1671 = vld [vmem:[#allocation2 + $0x39] sm:$0xff]
        %v1672 = vld [vmem:[#allocation2 + $0x49] sm:$0xff]
        %v1673 = vld [vmem:[#allocation2 + $0x51] sm:$0xff]
        %v1674 = vld [vmem:[#allocation2 + $0x61] sm:$0xff]
        %v1675 = vld [vmem:[#allocation2 + $0x69] sm:$0xff]
        %v1676 = vld [vmem:[#allocation2 + $0x79] sm:$0xff]
        %v1677 = vld [vmem:[#allocation2 + $0x81] sm:$0xff]
        %v1678 = vld [vmem:[#allocation2 + $0x91] sm:$0xff]
        %v1679 = vld [vmem:[#allocation2 + $0x99] sm:$0xff]
        %v1680 = vld [vmem:[#allocation2 + $0xa9] sm:$0xff]
        %v1681 = vld [vmem:[#allocation2 + $0xb1] sm:$0xff]
        %v1682 = vld [vmem:[#allocation2 + $0xc1] sm:$0xff]
        %v1683 = vld [vmem:[#allocation2 + $0xc9] sm:$0xff]
        %v1684 = vld [vmem:[#allocation2 + $0xd9] sm:$0xff]
        %v1685 = vld [vmem:[#allocation2 + $0xe1] sm:$0xff]
        %v1686 = vld [vmem:[#allocation2 + $0xf1] sm:$0xff]
        %v1687 = vld [vmem:[#allocation2 + $0xf9] sm:$0xff]
        %v1688 = vld [vmem:[#allocation2 + $0x109] sm:$0xff]
        %v1689 = vld [vmem:[#allocation2 + $0x111] sm:$0xff]
        %v1690 = vld [vmem:[#allocation2 + $0x121] sm:$0xff]
        %v1691 = vld [vmem:[#allocation2 + $0x129] sm:$0xff]
        %v1692 = vld [vmem:[#allocation2 + $0x139] sm:$0xff]
        %v1693 = vld [vmem:[#allocation2 + $0x141] sm:$0xff]
        %v1694 = vld [vmem:[#allocation2 + $0x151] sm:$0xff]
        %v1695 = vld [vmem:[#allocation2 + $0x159] sm:$0xff]
        %v1696 = vld [vmem:[#allocation2 + $0x169] sm:$0xff]
        %v1697 = vld [vmem:[#allocation2 + $0x171] sm:$0xff]
        %v1698 = vlaneseq
        %v1699 = vshrl.u32 %v1698, 7
        %v1700 = vsub.s32 1, %v1699
        %v1701 = vrot.slane %v1596, %v1700
        %v1702 = vmul.f32 %v1666, %v1701
        %v1703 = vmul.f32 %v1667, %v1701
        %v1704 = vmul.f32 %v1668, %v1701
        %v1705 = vmul.f32 %v1669, %v1701
        %v1706 = vmul.f32 %v1670, %v1701
        %v1707 = vmul.f32 %v1671, %v1701
        %v1708 = vmul.f32 %v1672, %v1701
        %v1709 = vmul.f32 %v1673, %v1701
        %v1710 = vmul.f32 %v1674, %v1701
        %v1711 = vmul.f32 %v1675, %v1701
        %v1712 = vmul.f32 %v1676, %v1701
        %v1713 = vmul.f32 %v1677, %v1701
        %v1714 = vmul.f32 %v1678, %v1701
        %v1715 = vmul.f32 %v1679, %v1701
        %v1716 = vmul.f32 %v1680, %v1701
        %v1717 = vmul.f32 %v1681, %v1701
        %v1718 = vmul.f32 %v1682, %v1701
        %v1719 = vmul.f32 %v1683, %v1701
        %v1720 = vmul.f32 %v1684, %v1701
        %v1721 = vmul.f32 %v1685, %v1701
        %v1722 = vmul.f32 %v1686, %v1701
        %v1723 = vmul.f32 %v1687, %v1701
        %v1724 = vmul.f32 %v1688, %v1701
        %v1725 = vmul.f32 %v1689, %v1701
        %v1726 = vmul.f32 %v1690, %v1701
        %v1727 = vmul.f32 %v1691, %v1701
        %v1728 = vmul.f32 %v1692, %v1701
        %v1729 = vmul.f32 %v1693, %v1701
        %v1730 = vmul.f32 %v1694, %v1701
        %v1731 = vmul.f32 %v1695, %v1701
        %v1732 = vmul.f32 %v1696, %v1701
        %v1733 = vmul.f32 %v1697, %v1701
        %v1734 = vadd.f32 %v1634, %v1702
        %v1735 = vadd.f32 %v1635, %v1703
        %v1736 = vadd.f32 %v1636, %v1704
        %v1737 = vadd.f32 %v1637, %v1705
        %v1738 = vadd.f32 %v1638, %v1706
        %v1739 = vadd.f32 %v1639, %v1707
        %v1740 = vadd.f32 %v1640, %v1708
        %v1741 = vadd.f32 %v1641, %v1709
        %v1742 = vadd.f32 %v1642, %v1710
        %v1743 = vadd.f32 %v1643, %v1711
        %v1744 = vadd.f32 %v1644, %v1712
        %v1745 = vadd.f32 %v1645, %v1713
        %v1746 = vadd.f32 %v1646, %v1714
        %v1747 = vadd.f32 %v1647, %v1715
        %v1748 = vadd.f32 %v1648, %v1716
        %v1749 = vadd.f32 %v1649, %v1717
        %v1750 = vadd.f32 %v1650, %v1718
        %v1751 = vadd.f32 %v1651, %v1719
        %v1752 = vadd.f32 %v1652, %v1720
        %v1753 = vadd.f32 %v1653, %v1721
        %v1754 = vadd.f32 %v1654, %v1722
        %v1755 = vadd.f32 %v1655, %v1723
        %v1756 = vadd.f32 %v1656, %v1724
        %v1757 = vadd.f32 %v1657, %v1725
        %v1758 = vadd.f32 %v1658, %v1726
        %v1759 = vadd.f32 %v1659, %v1727
        %v1760 = vadd.f32 %v1660, %v1728
        %v1761 = vadd.f32 %v1661, %v1729
        %v1762 = vadd.f32 %v1662, %v1730
        %v1763 = vadd.f32 %v1663, %v1731
        %v1764 = vadd.f32 %v1664, %v1732
        %v1765 = vadd.f32 %v1665, %v1733
        %v1766 = vld [vmem:[#allocation2 + $0x2] sm:$0xff]
        %v1767 = vld [vmem:[#allocation2 + $0xa] sm:$0xff]
        %v1768 = vld [vmem:[#allocation2 + $0x1a] sm:$0xff]
        %v1769 = vld [vmem:[#allocation2 + $0x22] sm:$0xff]
        %v1770 = vld [vmem:[#allocation2 + $0x32] sm:$0xff]
        %v1771 = vld [vmem:[#allocation2 + $0x3a] sm:$0xff]
        %v1772 = vld [vmem:[#allocation2 + $0x4a] sm:$0xff]
        %v1773 = vld [vmem:[#allocation2 + $0x52] sm:$0xff]
        %v1774 = vld [vmem:[#allocation2 + $0x62] sm:$0xff]
        %v1775 = vld [vmem:[#allocation2 + $0x6a] sm:$0xff]
        %v1776 = vld [vmem:[#allocation2 + $0x7a] sm:$0xff]
        %v1777 = vld [vmem:[#allocation2 + $0x82] sm:$0xff]
        %v1778 = vld [vmem:[#allocation2 + $0x92] sm:$0xff]
        %v1779 = vld [vmem:[#allocation2 + $0x9a] sm:$0xff]
        %v1780 = vld [vmem:[#allocation2 + $0xaa] sm:$0xff]
        %v1781 = vld [vmem:[#allocation2 + $0xb2] sm:$0xff]
        %v1782 = vld [vmem:[#allocation2 + $0xc2] sm:$0xff]
        %v1783 = vld [vmem:[#allocation2 + $0xca] sm:$0xff]
        %v1784 = vld [vmem:[#allocation2 + $0xda] sm:$0xff]
        %v1785 = vld [vmem:[#allocation2 + $0xe2] sm:$0xff]
        %v1786 = vld [vmem:[#allocation2 + $0xf2] sm:$0xff]
        %v1787 = vld [vmem:[#allocation2 + $0xfa] sm:$0xff]
        %v1788 = vld [vmem:[#allocation2 + $0x10a] sm:$0xff]
        %v1789 = vld [vmem:[#allocation2 + $0x112] sm:$0xff]
        %v1790 = vld [vmem:[#allocation2 + $0x122] sm:$0xff]
        %v1791 = vld [vmem:[#allocation2 + $0x12a] sm:$0xff]
        %v1792 = vld [vmem:[#allocation2 + $0x13a] sm:$0xff]
        %v1793 = vld [vmem:[#allocation2 + $0x142] sm:$0xff]
        %v1794 = vld [vmem:[#allocation2 + $0x152] sm:$0xff]
        %v1795 = vld [vmem:[#allocation2 + $0x15a] sm:$0xff]
        %v1796 = vld [vmem:[#allocation2 + $0x16a] sm:$0xff]
        %v1797 = vld [vmem:[#allocation2 + $0x172] sm:$0xff]
        %v1798 = vlaneseq
        %v1799 = vshrl.u32 %v1798, 7
        %v1800 = vsub.s32 2, %v1799
        %v1801 = vrot.slane %v1596, %v1800
        %v1802 = vmul.f32 %v1766, %v1801
        %v1803 = vmul.f32 %v1767, %v1801
        %v1804 = vmul.f32 %v1768, %v1801
        %v1805 = vmul.f32 %v1769, %v1801
        %v1806 = vmul.f32 %v1770, %v1801
        %v1807 = vmul.f32 %v1771, %v1801
        %v1808 = vmul.f32 %v1772, %v1801
        %v1809 = vmul.f32 %v1773, %v1801
        %v1810 = vmul.f32 %v1774, %v1801
        %v1811 = vmul.f32 %v1775, %v1801
        %v1812 = vmul.f32 %v1776, %v1801
        %v1813 = vmul.f32 %v1777, %v1801
        %v1814 = vmul.f32 %v1778, %v1801
        %v1815 = vmul.f32 %v1779, %v1801
        %v1816 = vmul.f32 %v1780, %v1801
        %v1817 = vmul.f32 %v1781, %v1801
        %v1818 = vmul.f32 %v1782, %v1801
        %v1819 = vmul.f32 %v1783, %v1801
        %v1820 = vmul.f32 %v1784, %v1801
        %v1821 = vmul.f32 %v1785, %v1801
        %v1822 = vmul.f32 %v1786, %v1801
        %v1823 = vmul.f32 %v1787, %v1801
        %v1824 = vmul.f32 %v1788, %v1801
        %v1825 = vmul.f32 %v1789, %v1801
        %v1826 = vmul.f32 %v1790, %v1801
        %v1827 = vmul.f32 %v1791, %v1801
        %v1828 = vmul.f32 %v1792, %v1801
        %v1829 = vmul.f32 %v1793, %v1801
        %v1830 = vmul.f32 %v1794, %v1801
        %v1831 = vmul.f32 %v1795, %v1801
        %v1832 = vmul.f32 %v1796, %v1801
        %v1833 = vmul.f32 %v1797, %v1801
        %v1834 = vadd.f32 %v1734, %v1802
        %v1835 = vadd.f32 %v1735, %v1803
        %v1836 = vadd.f32 %v1736, %v1804
        %v1837 = vadd.f32 %v1737, %v1805
        %v1838 = vadd.f32 %v1738, %v1806
        %v1839 = vadd.f32 %v1739, %v1807
        %v1840 = vadd.f32 %v1740, %v1808
        %v1841 = vadd.f32 %v1741, %v1809
        %v1842 = vadd.f32 %v1742, %v1810
        %v1843 = vadd.f32 %v1743, %v1811
        %v1844 = vadd.f32 %v1744, %v1812
        %v1845 = vadd.f32 %v1745, %v1813
        %v1846 = vadd.f32 %v1746, %v1814
        %v1847 = vadd.f32 %v1747, %v1815
        %v1848 = vadd.f32 %v1748, %v1816
        %v1849 = vadd.f32 %v1749, %v1817
        %v1850 = vadd.f32 %v1750, %v1818
        %v1851 = vadd.f32 %v1751, %v1819
        %v1852 = vadd.f32 %v1752, %v1820
        %v1853 = vadd.f32 %v1753, %v1821
        %v1854 = vadd.f32 %v1754, %v1822
        %v1855 = vadd.f32 %v1755, %v1823
        %v1856 = vadd.f32 %v1756, %v1824
        %v1857 = vadd.f32 %v1757, %v1825
        %v1858 = vadd.f32 %v1758, %v1826
        %v1859 = vadd.f32 %v1759, %v1827
        %v1860 = vadd.f32 %v1760, %v1828
        %v1861 = vadd.f32 %v1761, %v1829
        %v1862 = vadd.f32 %v1762, %v1830
        %v1863 = vadd.f32 %v1763, %v1831
        %v1864 = vadd.f32 %v1764, %v1832
        %v1865 = vadd.f32 %v1765, %v1833
        %v1866 = vld [vmem:[%s1563] sm:$0xff]
        %v1867 = vld [vmem:[%s1563 + $0x8] sm:$0xff]
        %v1868 = vld [vmem:[%s1563 + $0x18] sm:$0xff]
        %v1869 = vld [vmem:[%s1563 + $0x20] sm:$0xff]
        %v1870 = vld [vmem:[%s1563 + $0x30] sm:$0xff]
        %v1871 = vld [vmem:[%s1563 + $0x38] sm:$0xff]
        %v1872 = vld [vmem:[%s1563 + $0x48] sm:$0xff]
        %v1873 = vld [vmem:[%s1563 + $0x50] sm:$0xff]
        %v1874 = vld [vmem:[%s1563 + $0x60] sm:$0xff]
        %v1875 = vld [vmem:[%s1563 + $0x68] sm:$0xff]
        %v1876 = vld [vmem:[%s1563 + $0x78] sm:$0xff]
        %v1877 = vld [vmem:[%s1563 + $0x80] sm:$0xff]
        %v1878 = vld [vmem:[%s1563 + $0x90] sm:$0xff]
        %v1879 = vld [vmem:[%s1563 + $0x98] sm:$0xff]
        %v1880 = vld [vmem:[%s1563 + $0xa8] sm:$0xff]
        %v1881 = vld [vmem:[%s1563 + $0xb0] sm:$0xff]
        %v1882 = vld [vmem:[%s1563 + $0xc0] sm:$0xff]
        %v1883 = vld [vmem:[%s1563 + $0xc8] sm:$0xff]
        %v1884 = vld [vmem:[%s1563 + $0xd8] sm:$0xff]
        %v1885 = vld [vmem:[%s1563 + $0xe0] sm:$0xff]
        %v1886 = vld [vmem:[%s1563 + $0xf0] sm:$0xff]
        %v1887 = vld [vmem:[%s1563 + $0xf8] sm:$0xff]
        %v1888 = vld [vmem:[%s1563 + $0x108] sm:$0xff]
        %v1889 = vld [vmem:[%s1563 + $0x110] sm:$0xff]
        %v1890 = vld [vmem:[%s1563 + $0x120] sm:$0xff]
        %v1891 = vld [vmem:[%s1563 + $0x128] sm:$0xff]
        %v1892 = vld [vmem:[%s1563 + $0x138] sm:$0xff]
        %v1893 = vld [vmem:[%s1563 + $0x140] sm:$0xff]
        %v1894 = vld [vmem:[%s1563 + $0x150] sm:$0xff]
        %v1895 = vld [vmem:[%s1563 + $0x158] sm:$0xff]
        %v1896 = vld [vmem:[%s1563 + $0x168] sm:$0xff]
        %v1897 = vld [vmem:[%s1563 + $0x170] sm:$0xff]
        %v1898 = vlaneseq
        %v1899 = vshrl.u32 %v1898, 7
        %v1900 = vsub.s32 3, %v1899
        %v1901 = vrot.slane %v1596, %v1900
        %v1902 = vmul.f32 %v1866, %v1901
        %v1903 = vmul.f32 %v1867, %v1901
        %v1904 = vmul.f32 %v1868, %v1901
        %v1905 = vmul.f32 %v1869, %v1901
        %v1906 = vmul.f32 %v1870, %v1901
        %v1907 = vmul.f32 %v1871, %v1901
        %v1908 = vmul.f32 %v1872, %v1901
        %v1909 = vmul.f32 %v1873, %v1901
        %v1910 = vmul.f32 %v1874, %v1901
        %v1911 = vmul.f32 %v1875, %v1901
        %v1912 = vmul.f32 %v1876, %v1901
        %v1913 = vmul.f32 %v1877, %v1901
        %v1914 = vmul.f32 %v1878, %v1901
        %v1915 = vmul.f32 %v1879, %v1901
        %v1916 = vmul.f32 %v1880, %v1901
        %v1917 = vmul.f32 %v1881, %v1901
        %v1918 = vmul.f32 %v1882, %v1901
        %v1919 = vmul.f32 %v1883, %v1901
        %v1920 = vmul.f32 %v1884, %v1901
        %v1921 = vmul.f32 %v1885, %v1901
        %v1922 = vmul.f32 %v1886, %v1901
        %v1923 = vmul.f32 %v1887, %v1901
        %v1924 = vmul.f32 %v1888, %v1901
        %v1925 = vmul.f32 %v1889, %v1901
        %v1926 = vmul.f32 %v1890, %v1901
        %v1927 = vmul.f32 %v1891, %v1901
        %v1928 = vmul.f32 %v1892, %v1901
        %v1929 = vmul.f32 %v1893, %v1901
        %v1930 = vmul.f32 %v1894, %v1901
        %v1931 = vmul.f32 %v1895, %v1901
        %v1932 = vmul.f32 %v1896, %v1901
        %v1933 = vmul.f32 %v1897, %v1901
        %v1934 = vadd.f32 %v1834, %v1902
        %v1935 = vadd.f32 %v1835, %v1903
        %v1936 = vadd.f32 %v1836, %v1904
        %v1937 = vadd.f32 %v1837, %v1905
        %v1938 = vadd.f32 %v1838, %v1906
        %v1939 = vadd.f32 %v1839, %v1907
        %v1940 = vadd.f32 %v1840, %v1908
        %v1941 = vadd.f32 %v1841, %v1909
        %v1942 = vadd.f32 %v1842, %v1910
        %v1943 = vadd.f32 %v1843, %v1911
        %v1944 = vadd.f32 %v1844, %v1912
        %v1945 = vadd.f32 %v1845, %v1913
        %v1946 = vadd.f32 %v1846, %v1914
        %v1947 = vadd.f32 %v1847, %v1915
        %v1948 = vadd.f32 %v1848, %v1916
        %v1949 = vadd.f32 %v1849, %v1917
        %v1950 = vadd.f32 %v1850, %v1918
        %v1951 = vadd.f32 %v1851, %v1919
        %v1952 = vadd.f32 %v1852, %v1920
        %v1953 = vadd.f32 %v1853, %v1921
        %v1954 = vadd.f32 %v1854, %v1922
        %v1955 = vadd.f32 %v1855, %v1923
        %v1956 = vadd.f32 %v1856, %v1924
        %v1957 = vadd.f32 %v1857, %v1925
        %v1958 = vadd.f32 %v1858, %v1926
        %v1959 = vadd.f32 %v1859, %v1927
        %v1960 = vadd.f32 %v1860, %v1928
        %v1961 = vadd.f32 %v1861, %v1929
        %v1962 = vadd.f32 %v1862, %v1930
        %v1963 = vadd.f32 %v1863, %v1931
        %v1964 = vadd.f32 %v1864, %v1932
        %v1965 = vadd.f32 %v1865, %v1933
        %v1966 = vld [vmem:[%s1563 + $0x1] sm:$0xff]
        %v1967 = vld [vmem:[%s1563 + $0x9] sm:$0xff]
        %v1968 = vld [vmem:[%s1563 + $0x19] sm:$0xff]
        %v1969 = vld [vmem:[%s1563 + $0x21] sm:$0xff]
        %v1970 = vld [vmem:[%s1563 + $0x31] sm:$0xff]
        %v1971 = vld [vmem:[%s1563 + $0x39] sm:$0xff]
        %v1972 = vld [vmem:[%s1563 + $0x49] sm:$0xff]
        %v1973 = vld [vmem:[%s1563 + $0x51] sm:$0xff]
        %v1974 = vld [vmem:[%s1563 + $0x61] sm:$0xff]
        %v1975 = vld [vmem:[%s1563 + $0x69] sm:$0xff]
        %v1976 = vld [vmem:[%s1563 + $0x79] sm:$0xff]
        %v1977 = vld [vmem:[%s1563 + $0x81] sm:$0xff]
        %v1978 = vld [vmem:[%s1563 + $0x91] sm:$0xff]
        %v1979 = vld [vmem:[%s1563 + $0x99] sm:$0xff]
        %v1980 = vld [vmem:[%s1563 + $0xa9] sm:$0xff]
        %v1981 = vld [vmem:[%s1563 + $0xb1] sm:$0xff]
        %v1982 = vld [vmem:[%s1563 + $0xc1] sm:$0xff]
        %v1983 = vld [vmem:[%s1563 + $0xc9] sm:$0xff]
        %v1984 = vld [vmem:[%s1563 + $0xd9] sm:$0xff]
        %v1985 = vld [vmem:[%s1563 + $0xe1] sm:$0xff]
        %v1986 = vld [vmem:[%s1563 + $0xf1] sm:$0xff]
        %v1987 = vld [vmem:[%s1563 + $0xf9] sm:$0xff]
        %v1988 = vld [vmem:[%s1563 + $0x109] sm:$0xff]
        %v1989 = vld [vmem:[%s1563 + $0x111] sm:$0xff]
        %v1990 = vld [vmem:[%s1563 + $0x121] sm:$0xff]
        %v1991 = vld [vmem:[%s1563 + $0x129] sm:$0xff]
        %v1992 = vld [vmem:[%s1563 + $0x139] sm:$0xff]
        %v1993 = vld [vmem:[%s1563 + $0x141] sm:$0xff]
        %v1994 = vld [vmem:[%s1563 + $0x151] sm:$0xff]
        %v1995 = vld [vmem:[%s1563 + $0x159] sm:$0xff]
        %v1996 = vld [vmem:[%s1563 + $0x169] sm:$0xff]
        %v1997 = vld [vmem:[%s1563 + $0x171] sm:$0xff]
        %v1998 = vlaneseq
        %v1999 = vshrl.u32 %v1998, 7
        %v2000 = vsub.s32 4, %v1999
        %v2001 = vrot.slane %v1596, %v2000
        %v2002 = vmul.f32 %v1966, %v2001
        %v2003 = vmul.f32 %v1967, %v2001
        %v2004 = vmul.f32 %v1968, %v2001
        %v2005 = vmul.f32 %v1969, %v2001
        %v2006 = vmul.f32 %v1970, %v2001
        %v2007 = vmul.f32 %v1971, %v2001
        %v2008 = vmul.f32 %v1972, %v2001
        %v2009 = vmul.f32 %v1973, %v2001
        %v2010 = vmul.f32 %v1974, %v2001
        %v2011 = vmul.f32 %v1975, %v2001
        %v2012 = vmul.f32 %v1976, %v2001
        %v2013 = vmul.f32 %v1977, %v2001
        %v2014 = vmul.f32 %v1978, %v2001
        %v2015 = vmul.f32 %v1979, %v2001
        %v2016 = vmul.f32 %v1980, %v2001
        %v2017 = vmul.f32 %v1981, %v2001
        %v2018 = vmul.f32 %v1982, %v2001
        %v2019 = vmul.f32 %v1983, %v2001
        %v2020 = vmul.f32 %v1984, %v2001
        %v2021 = vmul.f32 %v1985, %v2001
        %v2022 = vmul.f32 %v1986, %v2001
        %v2023 = vmul.f32 %v1987, %v2001
        %v2024 = vmul.f32 %v1988, %v2001
        %v2025 = vmul.f32 %v1989, %v2001
        %v2026 = vmul.f32 %v1990, %v2001
        %v2027 = vmul.f32 %v1991, %v2001
        %v2028 = vmul.f32 %v1992, %v2001
        %v2029 = vmul.f32 %v1993, %v2001
        %v2030 = vmul.f32 %v1994, %v2001
        %v2031 = vmul.f32 %v1995, %v2001
        %v2032 = vmul.f32 %v1996, %v2001
        %v2033 = vmul.f32 %v1997, %v2001
        %v2034 = vadd.f32 %v1934, %v2002
        %v2035 = vadd.f32 %v1935, %v2003
        %v2036 = vadd.f32 %v1936, %v2004
        %v2037 = vadd.f32 %v1937, %v2005
        %v2038 = vadd.f32 %v1938, %v2006
        %v2039 = vadd.f32 %v1939, %v2007
        %v2040 = vadd.f32 %v1940, %v2008
        %v2041 = vadd.f32 %v1941, %v2009
        %v2042 = vadd.f32 %v1942, %v2010
        %v2043 = vadd.f32 %v1943, %v2011
        %v2044 = vadd.f32 %v1944, %v2012
        %v2045 = vadd.f32 %v1945, %v2013
        %v2046 = vadd.f32 %v1946, %v2014
        %v2047 = vadd.f32 %v1947, %v2015
        %v2048 = vadd.f32 %v1948, %v2016
        %v2049 = vadd.f32 %v1949, %v2017
        %v2050 = vadd.f32 %v1950, %v2018
        %v2051 = vadd.f32 %v1951, %v2019
        %v2052 = vadd.f32 %v1952, %v2020
        %v2053 = vadd.f32 %v1953, %v2021
        %v2054 = vadd.f32 %v1954, %v2022
        %v2055 = vadd.f32 %v1955, %v2023
        %v2056 = vadd.f32 %v1956, %v2024
        %v2057 = vadd.f32 %v1957, %v2025
        %v2058 = vadd.f32 %v1958, %v2026
        %v2059 = vadd.f32 %v1959, %v2027
        %v2060 = vadd.f32 %v1960, %v2028
        %v2061 = vadd.f32 %v1961, %v2029
        %v2062 = vadd.f32 %v1962, %v2030
        %v2063 = vadd.f32 %v1963, %v2031
        %v2064 = vadd.f32 %v1964, %v2032
        %v2065 = vadd.f32 %v1965, %v2033
        %v2066 = vld [vmem:[%s1563 + $0x2] sm:$0xff]
        %v2067 = vld [vmem:[%s1563 + $0xa] sm:$0xff]
        %v2068 = vld [vmem:[%s1563 + $0x1a] sm:$0xff]
        %v2069 = vld [vmem:[%s1563 + $0x22] sm:$0xff]
        %v2070 = vld [vmem:[%s1563 + $0x32] sm:$0xff]
        %v2071 = vld [vmem:[%s1563 + $0x3a] sm:$0xff]
        %v2072 = vld [vmem:[%s1563 + $0x4a] sm:$0xff]
        %v2073 = vld [vmem:[%s1563 + $0x52] sm:$0xff]
        %v2074 = vld [vmem:[%s1563 + $0x62] sm:$0xff]
        %v2075 = vld [vmem:[%s1563 + $0x6a] sm:$0xff]
        %v2076 = vld [vmem:[%s1563 + $0x7a] sm:$0xff]
        %v2077 = vld [vmem:[%s1563 + $0x82] sm:$0xff]
        %v2078 = vld [vmem:[%s1563 + $0x92] sm:$0xff]
        %v2079 = vld [vmem:[%s1563 + $0x9a] sm:$0xff]
        %v2080 = vld [vmem:[%s1563 + $0xaa] sm:$0xff]
        %v2081 = vld [vmem:[%s1563 + $0xb2] sm:$0xff]
        %v2082 = vld [vmem:[%s1563 + $0xc2] sm:$0xff]
        %v2083 = vld [vmem:[%s1563 + $0xca] sm:$0xff]
        %v2084 = vld [vmem:[%s1563 + $0xda] sm:$0xff]
        %v2085 = vld [vmem:[%s1563 + $0xe2] sm:$0xff]
        %v2086 = vld [vmem:[%s1563 + $0xf2] sm:$0xff]
        %v2087 = vld [vmem:[%s1563 + $0xfa] sm:$0xff]
        %v2088 = vld [vmem:[%s1563 + $0x10a] sm:$0xff]
        %v2089 = vld [vmem:[%s1563 + $0x112] sm:$0xff]
        %v2090 = vld [vmem:[%s1563 + $0x122] sm:$0xff]
        %v2091 = vld [vmem:[%s1563 + $0x12a] sm:$0xff]
        %v2092 = vld [vmem:[%s1563 + $0x13a] sm:$0xff]
        %v2093 = vld [vmem:[%s1563 + $0x142] sm:$0xff]
        %v2094 = vld [vmem:[%s1563 + $0x152] sm:$0xff]
        %v2095 = vld [vmem:[%s1563 + $0x15a] sm:$0xff]
        %v2096 = vld [vmem:[%s1563 + $0x16a] sm:$0xff]
        %v2097 = vld [vmem:[%s1563 + $0x172] sm:$0xff]
        %v2098 = vlaneseq
        %v2099 = vshrl.u32 %v2098, 7
        %v2100 = vsub.s32 5, %v2099
        %v2101 = vrot.slane %v1596, %v2100
        %v2102 = vmul.f32 %v2066, %v2101
        %v2103 = vmul.f32 %v2067, %v2101
        %v2104 = vmul.f32 %v2068, %v2101
        %v2105 = vmul.f32 %v2069, %v2101
        %v2106 = vmul.f32 %v2070, %v2101
        %v2107 = vmul.f32 %v2071, %v2101
        %v2108 = vmul.f32 %v2072, %v2101
        %v2109 = vmul.f32 %v2073, %v2101
        %v2110 = vmul.f32 %v2074, %v2101
        %v2111 = vmul.f32 %v2075, %v2101
        %v2112 = vmul.f32 %v2076, %v2101
        %v2113 = vmul.f32 %v2077, %v2101
        %v2114 = vmul.f32 %v2078, %v2101
        %v2115 = vmul.f32 %v2079, %v2101
        %v2116 = vmul.f32 %v2080, %v2101
        %v2117 = vmul.f32 %v2081, %v2101
        %v2118 = vmul.f32 %v2082, %v2101
        %v2119 = vmul.f32 %v2083, %v2101
        %v2120 = vmul.f32 %v2084, %v2101
        %v2121 = vmul.f32 %v2085, %v2101
        %v2122 = vmul.f32 %v2086, %v2101
        %v2123 = vmul.f32 %v2087, %v2101
        %v2124 = vmul.f32 %v2088, %v2101
        %v2125 = vmul.f32 %v2089, %v2101
        %v2126 = vmul.f32 %v2090, %v2101
        %v2127 = vmul.f32 %v2091, %v2101
        %v2128 = vmul.f32 %v2092, %v2101
        %v2129 = vmul.f32 %v2093, %v2101
        %v2130 = vmul.f32 %v2094, %v2101
        %v2131 = vmul.f32 %v2095, %v2101
        %v2132 = vmul.f32 %v2096, %v2101
        %v2133 = vmul.f32 %v2097, %v2101
        %v2134 = vadd.f32 %v2034, %v2102
        %v2135 = vadd.f32 %v2035, %v2103
        %v2136 = vadd.f32 %v2036, %v2104
        %v2137 = vadd.f32 %v2037, %v2105
        %v2138 = vadd.f32 %v2038, %v2106
        %v2139 = vadd.f32 %v2039, %v2107
        %v2140 = vadd.f32 %v2040, %v2108
        %v2141 = vadd.f32 %v2041, %v2109
        %v2142 = vadd.f32 %v2042, %v2110
        %v2143 = vadd.f32 %v2043, %v2111
        %v2144 = vadd.f32 %v2044, %v2112
        %v2145 = vadd.f32 %v2045, %v2113
        %v2146 = vadd.f32 %v2046, %v2114
        %v2147 = vadd.f32 %v2047, %v2115
        %v2148 = vadd.f32 %v2048, %v2116
        %v2149 = vadd.f32 %v2049, %v2117
        %v2150 = vadd.f32 %v2050, %v2118
        %v2151 = vadd.f32 %v2051, %v2119
        %v2152 = vadd.f32 %v2052, %v2120
        %v2153 = vadd.f32 %v2053, %v2121
        %v2154 = vadd.f32 %v2054, %v2122
        %v2155 = vadd.f32 %v2055, %v2123
        %v2156 = vadd.f32 %v2056, %v2124
        %v2157 = vadd.f32 %v2057, %v2125
        %v2158 = vadd.f32 %v2058, %v2126
        %v2159 = vadd.f32 %v2059, %v2127
        %v2160 = vadd.f32 %v2060, %v2128
        %v2161 = vadd.f32 %v2061, %v2129
        %v2162 = vadd.f32 %v2062, %v2130
        %v2163 = vadd.f32 %v2063, %v2131
        %v2164 = vadd.f32 %v2064, %v2132
        %v2165 = vadd.f32 %v2065, %v2133
        %s2166 = scalar_lea.vmem [#allocation2], 48
        %v2167 = vld [vmem:[%s2166] sm:$0xff]
        %v2168 = vld [vmem:[%s2166 + $0x8] sm:$0xff]
        %v2169 = vld [vmem:[%s2166 + $0x18] sm:$0xff]
        %v2170 = vld [vmem:[%s2166 + $0x20] sm:$0xff]
        %v2171 = vld [vmem:[%s2166 + $0x30] sm:$0xff]
        %v2172 = vld [vmem:[%s2166 + $0x38] sm:$0xff]
        %v2173 = vld [vmem:[%s2166 + $0x48] sm:$0xff]
        %v2174 = vld [vmem:[%s2166 + $0x50] sm:$0xff]
        %v2175 = vld [vmem:[%s2166 + $0x60] sm:$0xff]
        %v2176 = vld [vmem:[%s2166 + $0x68] sm:$0xff]
        %v2177 = vld [vmem:[%s2166 + $0x78] sm:$0xff]
        %v2178 = vld [vmem:[%s2166 + $0x80] sm:$0xff]
        %v2179 = vld [vmem:[%s2166 + $0x90] sm:$0xff]
        %v2180 = vld [vmem:[%s2166 + $0x98] sm:$0xff]
        %v2181 = vld [vmem:[%s2166 + $0xa8] sm:$0xff]
        %v2182 = vld [vmem:[%s2166 + $0xb0] sm:$0xff]
        %v2183 = vld [vmem:[%s2166 + $0xc0] sm:$0xff]
        %v2184 = vld [vmem:[%s2166 + $0xc8] sm:$0xff]
        %v2185 = vld [vmem:[%s2166 + $0xd8] sm:$0xff]
        %v2186 = vld [vmem:[%s2166 + $0xe0] sm:$0xff]
        %v2187 = vld [vmem:[%s2166 + $0xf0] sm:$0xff]
        %v2188 = vld [vmem:[%s2166 + $0xf8] sm:$0xff]
        %v2189 = vld [vmem:[%s2166 + $0x108] sm:$0xff]
        %v2190 = vld [vmem:[%s2166 + $0x110] sm:$0xff]
        %v2191 = vld [vmem:[%s2166 + $0x120] sm:$0xff]
        %v2192 = vld [vmem:[%s2166 + $0x128] sm:$0xff]
        %v2193 = vld [vmem:[%s2166 + $0x138] sm:$0xff]
        %v2194 = vld [vmem:[%s2166 + $0x140] sm:$0xff]
        %v2195 = vld [vmem:[%s2166 + $0x150] sm:$0xff]
        %v2196 = vld [vmem:[%s2166 + $0x158] sm:$0xff]
        %v2197 = vld [vmem:[%s2166 + $0x168] sm:$0xff]
        %v2198 = vld [vmem:[%s2166 + $0x170] sm:$0xff]
        %v2199 = vlaneseq
        %v2200 = vshrl.u32 %v2199, 7
        %v2201 = vsub.s32 6, %v2200
        %v2202 = vrot.slane %v1596, %v2201
        %v2203 = vmul.f32 %v2167, %v2202
        %v2204 = vmul.f32 %v2168, %v2202
        %v2205 = vmul.f32 %v2169, %v2202
        %v2206 = vmul.f32 %v2170, %v2202
        %v2207 = vmul.f32 %v2171, %v2202
        %v2208 = vmul.f32 %v2172, %v2202
        %v2209 = vmul.f32 %v2173, %v2202
        %v2210 = vmul.f32 %v2174, %v2202
        %v2211 = vmul.f32 %v2175, %v2202
        %v2212 = vmul.f32 %v2176, %v2202
        %v2213 = vmul.f32 %v2177, %v2202
        %v2214 = vmul.f32 %v2178, %v2202
        %v2215 = vmul.f32 %v2179, %v2202
        %v2216 = vmul.f32 %v2180, %v2202
        %v2217 = vmul.f32 %v2181, %v2202
        %v2218 = vmul.f32 %v2182, %v2202
        %v2219 = vmul.f32 %v2183, %v2202
        %v2220 = vmul.f32 %v2184, %v2202
        %v2221 = vmul.f32 %v2185, %v2202
        %v2222 = vmul.f32 %v2186, %v2202
        %v2223 = vmul.f32 %v2187, %v2202
        %v2224 = vmul.f32 %v2188, %v2202
        %v2225 = vmul.f32 %v2189, %v2202
        %v2226 = vmul.f32 %v2190, %v2202
        %v2227 = vmul.f32 %v2191, %v2202
        %v2228 = vmul.f32 %v2192, %v2202
        %v2229 = vmul.f32 %v2193, %v2202
        %v2230 = vmul.f32 %v2194, %v2202
        %v2231 = vmul.f32 %v2195, %v2202
        %v2232 = vmul.f32 %v2196, %v2202
        %v2233 = vmul.f32 %v2197, %v2202
        %v2234 = vmul.f32 %v2198, %v2202
        %v2235 = vadd.f32 %v2134, %v2203
        %v2236 = vadd.f32 %v2135, %v2204
        %v2237 = vadd.f32 %v2136, %v2205
        %v2238 = vadd.f32 %v2137, %v2206
        %v2239 = vadd.f32 %v2138, %v2207
        %v2240 = vadd.f32 %v2139, %v2208
        %v2241 = vadd.f32 %v2140, %v2209
        %v2242 = vadd.f32 %v2141, %v2210
        %v2243 = vadd.f32 %v2142, %v2211
        %v2244 = vadd.f32 %v2143, %v2212
        %v2245 = vadd.f32 %v2144, %v2213
        %v2246 = vadd.f32 %v2145, %v2214
        %v2247 = vadd.f32 %v2146, %v2215
        %v2248 = vadd.f32 %v2147, %v2216
        %v2249 = vadd.f32 %v2148, %v2217
        %v2250 = vadd.f32 %v2149, %v2218
        %v2251 = vadd.f32 %v2150, %v2219
        %v2252 = vadd.f32 %v2151, %v2220
        %v2253 = vadd.f32 %v2152, %v2221
        %v2254 = vadd.f32 %v2153, %v2222
        %v2255 = vadd.f32 %v2154, %v2223
        %v2256 = vadd.f32 %v2155, %v2224
        %v2257 = vadd.f32 %v2156, %v2225
        %v2258 = vadd.f32 %v2157, %v2226
        %v2259 = vadd.f32 %v2158, %v2227
        %v2260 = vadd.f32 %v2159, %v2228
        %v2261 = vadd.f32 %v2160, %v2229
        %v2262 = vadd.f32 %v2161, %v2230
        %v2263 = vadd.f32 %v2162, %v2231
        %v2264 = vadd.f32 %v2163, %v2232
        %v2265 = vadd.f32 %v2164, %v2233
        %v2266 = vadd.f32 %v2165, %v2234
        %v2267 = vld [vmem:[%s2166 + $0x1] sm:$0xff]
        %v2268 = vld [vmem:[%s2166 + $0x9] sm:$0xff]
        %v2269 = vld [vmem:[%s2166 + $0x19] sm:$0xff]
        %v2270 = vld [vmem:[%s2166 + $0x21] sm:$0xff]
        %v2271 = vld [vmem:[%s2166 + $0x31] sm:$0xff]
        %v2272 = vld [vmem:[%s2166 + $0x39] sm:$0xff]
        %v2273 = vld [vmem:[%s2166 + $0x49] sm:$0xff]
        %v2274 = vld [vmem:[%s2166 + $0x51] sm:$0xff]
        %v2275 = vld [vmem:[%s2166 + $0x61] sm:$0xff]
        %v2276 = vld [vmem:[%s2166 + $0x69] sm:$0xff]
        %v2277 = vld [vmem:[%s2166 + $0x79] sm:$0xff]
        %v2278 = vld [vmem:[%s2166 + $0x81] sm:$0xff]
        %v2279 = vld [vmem:[%s2166 + $0x91] sm:$0xff]
        %v2280 = vld [vmem:[%s2166 + $0x99] sm:$0xff]
        %v2281 = vld [vmem:[%s2166 + $0xa9] sm:$0xff]
        %v2282 = vld [vmem:[%s2166 + $0xb1] sm:$0xff]
        %v2283 = vld [vmem:[%s2166 + $0xc1] sm:$0xff]
        %v2284 = vld [vmem:[%s2166 + $0xc9] sm:$0xff]
        %v2285 = vld [vmem:[%s2166 + $0xd9] sm:$0xff]
        %v2286 = vld [vmem:[%s2166 + $0xe1] sm:$0xff]
        %v2287 = vld [vmem:[%s2166 + $0xf1] sm:$0xff]
        %v2288 = vld [vmem:[%s2166 + $0xf9] sm:$0xff]
        %v2289 = vld [vmem:[%s2166 + $0x109] sm:$0xff]
        %v2290 = vld [vmem:[%s2166 + $0x111] sm:$0xff]
        %v2291 = vld [vmem:[%s2166 + $0x121] sm:$0xff]
        %v2292 = vld [vmem:[%s2166 + $0x129] sm:$0xff]
        %v2293 = vld [vmem:[%s2166 + $0x139] sm:$0xff]
        %v2294 = vld [vmem:[%s2166 + $0x141] sm:$0xff]
        %v2295 = vld [vmem:[%s2166 + $0x151] sm:$0xff]
        %v2296 = vld [vmem:[%s2166 + $0x159] sm:$0xff]
        %v2297 = vld [vmem:[%s2166 + $0x169] sm:$0xff]
        %v2298 = vld [vmem:[%s2166 + $0x171] sm:$0xff]
        %v2299 = vlaneseq
        %v2300 = vshrl.u32 %v2299, 7
        %v2301 = vsub.s32 7, %v2300
        %v2302 = vrot.slane %v1596, %v2301
        %v2303 = vmul.f32 %v2267, %v2302
        %v2304 = vmul.f32 %v2268, %v2302
        %v2305 = vmul.f32 %v2269, %v2302
        %v2306 = vmul.f32 %v2270, %v2302
        %v2307 = vmul.f32 %v2271, %v2302
        %v2308 = vmul.f32 %v2272, %v2302
        %v2309 = vmul.f32 %v2273, %v2302
        %v2310 = vmul.f32 %v2274, %v2302
        %v2311 = vmul.f32 %v2275, %v2302
        %v2312 = vmul.f32 %v2276, %v2302
        %v2313 = vmul.f32 %v2277, %v2302
        %v2314 = vmul.f32 %v2278, %v2302
        %v2315 = vmul.f32 %v2279, %v2302
        %v2316 = vmul.f32 %v2280, %v2302
        %v2317 = vmul.f32 %v2281, %v2302
        %v2318 = vmul.f32 %v2282, %v2302
        %v2319 = vmul.f32 %v2283, %v2302
        %v2320 = vmul.f32 %v2284, %v2302
        %v2321 = vmul.f32 %v2285, %v2302
        %v2322 = vmul.f32 %v2286, %v2302
        %v2323 = vmul.f32 %v2287, %v2302
        %v2324 = vmul.f32 %v2288, %v2302
        %v2325 = vmul.f32 %v2289, %v2302
        %v2326 = vmul.f32 %v2290, %v2302
        %v2327 = vmul.f32 %v2291, %v2302
        %v2328 = vmul.f32 %v2292, %v2302
        %v2329 = vmul.f32 %v2293, %v2302
        %v2330 = vmul.f32 %v2294, %v2302
        %v2331 = vmul.f32 %v2295, %v2302
        %v2332 = vmul.f32 %v2296, %v2302
        %v2333 = vmul.f32 %v2297, %v2302
        %v2334 = vmul.f32 %v2298, %v2302
        %v2335 = vadd.f32 %v2235, %v2303
        %v2336 = vadd.f32 %v2236, %v2304
        %v2337 = vadd.f32 %v2237, %v2305
        %v2338 = vadd.f32 %v2238, %v2306
        %v2339 = vadd.f32 %v2239, %v2307
        %v2340 = vadd.f32 %v2240, %v2308
        %v2341 = vadd.f32 %v2241, %v2309
        %v2342 = vadd.f32 %v2242, %v2310
        %v2343 = vadd.f32 %v2243, %v2311
        %v2344 = vadd.f32 %v2244, %v2312
        %v2345 = vadd.f32 %v2245, %v2313
        %v2346 = vadd.f32 %v2246, %v2314
        %v2347 = vadd.f32 %v2247, %v2315
        %v2348 = vadd.f32 %v2248, %v2316
        %v2349 = vadd.f32 %v2249, %v2317
        %v2350 = vadd.f32 %v2250, %v2318
        %v2351 = vadd.f32 %v2251, %v2319
        %v2352 = vadd.f32 %v2252, %v2320
        %v2353 = vadd.f32 %v2253, %v2321
        %v2354 = vadd.f32 %v2254, %v2322
        %v2355 = vadd.f32 %v2255, %v2323
        %v2356 = vadd.f32 %v2256, %v2324
        %v2357 = vadd.f32 %v2257, %v2325
        %v2358 = vadd.f32 %v2258, %v2326
        %v2359 = vadd.f32 %v2259, %v2327
        %v2360 = vadd.f32 %v2260, %v2328
        %v2361 = vadd.f32 %v2261, %v2329
        %v2362 = vadd.f32 %v2262, %v2330
        %v2363 = vadd.f32 %v2263, %v2331
        %v2364 = vadd.f32 %v2264, %v2332
        %v2365 = vadd.f32 %v2265, %v2333
        %v2366 = vadd.f32 %v2266, %v2334
        %v2367 = vld [vmem:[%s2166 + $0x2] sm:$0xff]
        %v2368 = vld [vmem:[%s2166 + $0xa] sm:$0xff]
        %v2369 = vld [vmem:[%s2166 + $0x1a] sm:$0xff]
        %v2370 = vld [vmem:[%s2166 + $0x22] sm:$0xff]
        %v2371 = vld [vmem:[%s2166 + $0x32] sm:$0xff]
        %v2372 = vld [vmem:[%s2166 + $0x3a] sm:$0xff]
        %v2373 = vld [vmem:[%s2166 + $0x4a] sm:$0xff]
        %v2374 = vld [vmem:[%s2166 + $0x52] sm:$0xff]
        %v2375 = vld [vmem:[%s2166 + $0x62] sm:$0xff]
        %v2376 = vld [vmem:[%s2166 + $0x6a] sm:$0xff]
        %v2377 = vld [vmem:[%s2166 + $0x7a] sm:$0xff]
        %v2378 = vld [vmem:[%s2166 + $0x82] sm:$0xff]
        %v2379 = vld [vmem:[%s2166 + $0x92] sm:$0xff]
        %v2380 = vld [vmem:[%s2166 + $0x9a] sm:$0xff]
        %v2381 = vld [vmem:[%s2166 + $0xaa] sm:$0xff]
        %v2382 = vld [vmem:[%s2166 + $0xb2] sm:$0xff]
        %v2383 = vld [vmem:[%s2166 + $0xc2] sm:$0xff]
        %v2384 = vld [vmem:[%s2166 + $0xca] sm:$0xff]
        %v2385 = vld [vmem:[%s2166 + $0xda] sm:$0xff]
        %v2386 = vld [vmem:[%s2166 + $0xe2] sm:$0xff]
        %v2387 = vld [vmem:[%s2166 + $0xf2] sm:$0xff]
        %v2388 = vld [vmem:[%s2166 + $0xfa] sm:$0xff]
        %v2389 = vld [vmem:[%s2166 + $0x10a] sm:$0xff]
        %v2390 = vld [vmem:[%s2166 + $0x112] sm:$0xff]
        %v2391 = vld [vmem:[%s2166 + $0x122] sm:$0xff]
        %v2392 = vld [vmem:[%s2166 + $0x12a] sm:$0xff]
        %v2393 = vld [vmem:[%s2166 + $0x13a] sm:$0xff]
        %v2394 = vld [vmem:[%s2166 + $0x142] sm:$0xff]
        %v2395 = vld [vmem:[%s2166 + $0x152] sm:$0xff]
        %v2396 = vld [vmem:[%s2166 + $0x15a] sm:$0xff]
        %v2397 = vld [vmem:[%s2166 + $0x16a] sm:$0xff]
        %v2398 = vld [vmem:[%s2166 + $0x172] sm:$0xff]
        %v2399 = vlaneseq
        %v2400 = vshrl.u32 %v2399, 7
        %v2401 = vsub.s32 0, %v2400
        %v2402 = vrot.slane %v1597, %v2401
        %v2403 = vmul.f32 %v2367, %v2402
        %v2404 = vmul.f32 %v2368, %v2402
        %v2405 = vmul.f32 %v2369, %v2402
        %v2406 = vmul.f32 %v2370, %v2402
        %v2407 = vmul.f32 %v2371, %v2402
        %v2408 = vmul.f32 %v2372, %v2402
        %v2409 = vmul.f32 %v2373, %v2402
        %v2410 = vmul.f32 %v2374, %v2402
        %v2411 = vmul.f32 %v2375, %v2402
        %v2412 = vmul.f32 %v2376, %v2402
        %v2413 = vmul.f32 %v2377, %v2402
        %v2414 = vmul.f32 %v2378, %v2402
        %v2415 = vmul.f32 %v2379, %v2402
        %v2416 = vmul.f32 %v2380, %v2402
        %v2417 = vmul.f32 %v2381, %v2402
        %v2418 = vmul.f32 %v2382, %v2402
        %v2419 = vmul.f32 %v2383, %v2402
        %v2420 = vmul.f32 %v2384, %v2402
        %v2421 = vmul.f32 %v2385, %v2402
        %v2422 = vmul.f32 %v2386, %v2402
        %v2423 = vmul.f32 %v2387, %v2402
        %v2424 = vmul.f32 %v2388, %v2402
        %v2425 = vmul.f32 %v2389, %v2402
        %v2426 = vmul.f32 %v2390, %v2402
        %v2427 = vmul.f32 %v2391, %v2402
        %v2428 = vmul.f32 %v2392, %v2402
        %v2429 = vmul.f32 %v2393, %v2402
        %v2430 = vmul.f32 %v2394, %v2402
        %v2431 = vmul.f32 %v2395, %v2402
        %v2432 = vmul.f32 %v2396, %v2402
        %v2433 = vmul.f32 %v2397, %v2402
        %v2434 = vmul.f32 %v2398, %v2402
        %v2435 = vadd.f32 %v2335, %v2403
        %v2436 = vadd.f32 %v2336, %v2404
        %v2437 = vadd.f32 %v2337, %v2405
        %v2438 = vadd.f32 %v2338, %v2406
        %v2439 = vadd.f32 %v2339, %v2407
        %v2440 = vadd.f32 %v2340, %v2408
        %v2441 = vadd.f32 %v2341, %v2409
        %v2442 = vadd.f32 %v2342, %v2410
        %v2443 = vadd.f32 %v2343, %v2411
        %v2444 = vadd.f32 %v2344, %v2412
        %v2445 = vadd.f32 %v2345, %v2413
        %v2446 = vadd.f32 %v2346, %v2414
        %v2447 = vadd.f32 %v2347, %v2415
        %v2448 = vadd.f32 %v2348, %v2416
        %v2449 = vadd.f32 %v2349, %v2417
        %v2450 = vadd.f32 %v2350, %v2418
        %v2451 = vadd.f32 %v2351, %v2419
        %v2452 = vadd.f32 %v2352, %v2420
        %v2453 = vadd.f32 %v2353, %v2421
        %v2454 = vadd.f32 %v2354, %v2422
        %v2455 = vadd.f32 %v2355, %v2423
        %v2456 = vadd.f32 %v2356, %v2424
        %v2457 = vadd.f32 %v2357, %v2425
        %v2458 = vadd.f32 %v2358, %v2426
        %v2459 = vadd.f32 %v2359, %v2427
        %v2460 = vadd.f32 %v2360, %v2428
        %v2461 = vadd.f32 %v2361, %v2429
        %v2462 = vadd.f32 %v2362, %v2430
        %v2463 = vadd.f32 %v2363, %v2431
        %v2464 = vadd.f32 %v2364, %v2432
        %v2465 = vadd.f32 %v2365, %v2433
        %v2466 = vadd.f32 %v2366, %v2434
        %v2467 = vld [vmem:[%s1 + $0x4] sm:$0x1]
        %v2468 = vlaneseq
        %v2469 = vshrl.u32 %v2468, 7
        %v2470 = vsub.s32 0, %v2469
        %v2471 = vrot.slane %v2467, %v2470
        %v2472 = vmul.f32 %v2435, %v2471
        %v2473 = vmul.f32 %v2436, %v2471
        %v2474 = vmul.f32 %v2437, %v2471
        %v2475 = vmul.f32 %v2438, %v2471
        %v2476 = vmul.f32 %v2439, %v2471
        %v2477 = vmul.f32 %v2440, %v2471
        %v2478 = vmul.f32 %v2441, %v2471
        %v2479 = vmul.f32 %v2442, %v2471
        %v2480 = vmul.f32 %v2443, %v2471
        %v2481 = vmul.f32 %v2444, %v2471
        %v2482 = vmul.f32 %v2445, %v2471
        %v2483 = vmul.f32 %v2446, %v2471
        %v2484 = vmul.f32 %v2447, %v2471
        %v2485 = vmul.f32 %v2448, %v2471
        %v2486 = vmul.f32 %v2449, %v2471
        %v2487 = vmul.f32 %v2450, %v2471
        %v2488 = vmul.f32 %v2451, %v2471
        %v2489 = vmul.f32 %v2452, %v2471
        %v2490 = vmul.f32 %v2453, %v2471
        %v2491 = vmul.f32 %v2454, %v2471
        %v2492 = vmul.f32 %v2455, %v2471
        %v2493 = vmul.f32 %v2456, %v2471
        %v2494 = vmul.f32 %v2457, %v2471
        %v2495 = vmul.f32 %v2458, %v2471
        %v2496 = vmul.f32 %v2459, %v2471
        %v2497 = vmul.f32 %v2460, %v2471
        %v2498 = vmul.f32 %v2461, %v2471
        %v2499 = vmul.f32 %v2462, %v2471
        %v2500 = vmul.f32 %v2463, %v2471
        %v2501 = vmul.f32 %v2464, %v2471
        %v2502 = vmul.f32 %v2465, %v2471
        %v2503 = vmul.f32 %v2466, %v2471
        %v2504 = vld [vmem:[%s1 + $0x5] sm:$0x1]
        %v2505 = vlaneseq
        %v2506 = vshrl.u32 %v2505, 7
        %v2507 = vsub.s32 0, %v2506
        %v2508 = vrot.slane %v2504, %v2507
        %v2509 = vadd.f32 %v2472, %v2508
        %v2510 = vadd.f32 %v2473, %v2508
        %v2511 = vadd.f32 %v2474, %v2508
        %v2512 = vadd.f32 %v2475, %v2508
        %v2513 = vadd.f32 %v2476, %v2508
        %v2514 = vadd.f32 %v2477, %v2508
        %v2515 = vadd.f32 %v2478, %v2508
        %v2516 = vadd.f32 %v2479, %v2508
        %v2517 = vadd.f32 %v2480, %v2508
        %v2518 = vadd.f32 %v2481, %v2508
        %v2519 = vadd.f32 %v2482, %v2508
        %v2520 = vadd.f32 %v2483, %v2508
        %v2521 = vadd.f32 %v2484, %v2508
        %v2522 = vadd.f32 %v2485, %v2508
        %v2523 = vadd.f32 %v2486, %v2508
        %v2524 = vadd.f32 %v2487, %v2508
        %v2525 = vadd.f32 %v2488, %v2508
        %v2526 = vadd.f32 %v2489, %v2508
        %v2527 = vadd.f32 %v2490, %v2508
        %v2528 = vadd.f32 %v2491, %v2508
        %v2529 = vadd.f32 %v2492, %v2508
        %v2530 = vadd.f32 %v2493, %v2508
        %v2531 = vadd.f32 %v2494, %v2508
        %v2532 = vadd.f32 %v2495, %v2508
        %v2533 = vadd.f32 %v2496, %v2508
        %v2534 = vadd.f32 %v2497, %v2508
        %v2535 = vadd.f32 %v2498, %v2508
        %v2536 = vadd.f32 %v2499, %v2508
        %v2537 = vadd.f32 %v2500, %v2508
        %v2538 = vadd.f32 %v2501, %v2508
        %v2539 = vadd.f32 %v2502, %v2508
        %v2540 = vadd.f32 %v2503, %v2508
        %v2541 = vxor.u32 %v2509, 2147483648
        %v2542 = vxor.u32 %v2510, 2147483648
        %v2543 = vxor.u32 %v2511, 2147483648
        %v2544 = vxor.u32 %v2512, 2147483648
        %v2545 = vxor.u32 %v2513, 2147483648
        %v2546 = vxor.u32 %v2514, 2147483648
        %v2547 = vxor.u32 %v2515, 2147483648
        %v2548 = vxor.u32 %v2516, 2147483648
        %v2549 = vxor.u32 %v2517, 2147483648
        %v2550 = vxor.u32 %v2518, 2147483648
        %v2551 = vxor.u32 %v2519, 2147483648
        %v2552 = vxor.u32 %v2520, 2147483648
        %v2553 = vxor.u32 %v2521, 2147483648
        %v2554 = vxor.u32 %v2522, 2147483648
        %v2555 = vxor.u32 %v2523, 2147483648
        %v2556 = vxor.u32 %v2524, 2147483648
        %v2557 = vxor.u32 %v2525, 2147483648
        %v2558 = vxor.u32 %v2526, 2147483648
        %v2559 = vxor.u32 %v2527, 2147483648
        %v2560 = vxor.u32 %v2528, 2147483648
        %v2561 = vxor.u32 %v2529, 2147483648
        %v2562 = vxor.u32 %v2530, 2147483648
        %v2563 = vxor.u32 %v2531, 2147483648
        %v2564 = vxor.u32 %v2532, 2147483648
        %v2565 = vxor.u32 %v2533, 2147483648
        %v2566 = vxor.u32 %v2534, 2147483648
        %v2567 = vxor.u32 %v2535, 2147483648
        %v2568 = vxor.u32 %v2536, 2147483648
        %v2569 = vxor.u32 %v2537, 2147483648
        %v2570 = vxor.u32 %v2538, 2147483648
        %v2571 = vxor.u32 %v2539, 2147483648
        %v2572 = vxor.u32 %v2540, 2147483648
        %v2573 = vmul.f32 %v2541, 1.442695
        %v2574 = vpow.pop %v2573
        %v2575 = vmul.f32 %v2542, 1.442695
        %v2576 = vpow.pop %v2575
        %v2577 = vmul.f32 %v2543, 1.442695
        %v2578 = vpow.pop %v2577
        %v2579 = vmul.f32 %v2544, 1.442695
        %v2580 = vpow.pop %v2579
        %v2581 = vmul.f32 %v2545, 1.442695
        %v2582 = vpow.pop %v2581
        %v2583 = vmul.f32 %v2546, 1.442695
        %v2584 = vpow.pop %v2583
        %v2585 = vmul.f32 %v2547, 1.442695
        %v2586 = vpow.pop %v2585
        %v2587 = vmul.f32 %v2548, 1.442695
        %v2588 = vpow.pop %v2587
        %v2589 = vmul.f32 %v2549, 1.442695
        %v2590 = vpow.pop %v2589
        %v2591 = vmul.f32 %v2550, 1.442695
        %v2592 = vpow.pop %v2591
        %v2593 = vmul.f32 %v2551, 1.442695
        %v2594 = vpow.pop %v2593
        %v2595 = vmul.f32 %v2552, 1.442695
        %v2596 = vpow.pop %v2595
        %v2597 = vmul.f32 %v2553, 1.442695
        %v2598 = vpow.pop %v2597
        %v2599 = vmul.f32 %v2554, 1.442695
        %v2600 = vpow.pop %v2599
        %v2601 = vmul.f32 %v2555, 1.442695
        %v2602 = vpow.pop %v2601
        %v2603 = vmul.f32 %v2556, 1.442695
        %v2604 = vpow.pop %v2603
        %v2605 = vmul.f32 %v2557, 1.442695
        %v2606 = vpow.pop %v2605
        %v2607 = vmul.f32 %v2558, 1.442695
        %v2608 = vpow.pop %v2607
        %v2609 = vmul.f32 %v2559, 1.442695
        %v2610 = vpow.pop %v2609
        %v2611 = vmul.f32 %v2560, 1.442695
        %v2612 = vpow.pop %v2611
        %v2613 = vmul.f32 %v2561, 1.442695
        %v2614 = vpow.pop %v2613
        %v2615 = vmul.f32 %v2562, 1.442695
        %v2616 = vpow.pop %v2615
        %v2617 = vmul.f32 %v2563, 1.442695
        %v2618 = vpow.pop %v2617
        %v2619 = vmul.f32 %v2564, 1.442695
        %v2620 = vpow.pop %v2619
        %v2621 = vmul.f32 %v2565, 1.442695
        %v2622 = vpow.pop %v2621
        %v2623 = vmul.f32 %v2566, 1.442695
        %v2624 = vpow.pop %v2623
        %v2625 = vmul.f32 %v2567, 1.442695
        %v2626 = vpow.pop %v2625
        %v2627 = vmul.f32 %v2568, 1.442695
        %v2628 = vpow.pop %v2627
        %v2629 = vmul.f32 %v2569, 1.442695
        %v2630 = vpow.pop %v2629
        %v2631 = vmul.f32 %v2570, 1.442695
        %v2632 = vpow.pop %v2631
        %v2633 = vmul.f32 %v2571, 1.442695
        %v2634 = vpow.pop %v2633
        %v2635 = vmul.f32 %v2572, 1.442695
        %v2636 = vpow.pop %v2635
        %v2637 = vadd.f32 %v2574, 1.0
        %v2638 = vadd.f32 %v2576, 1.0
        %v2639 = vadd.f32 %v2578, 1.0
        %v2640 = vadd.f32 %v2580, 1.0
        %v2641 = vadd.f32 %v2582, 1.0
        %v2642 = vadd.f32 %v2584, 1.0
        %v2643 = vadd.f32 %v2586, 1.0
        %v2644 = vadd.f32 %v2588, 1.0
        %v2645 = vadd.f32 %v2590, 1.0
        %v2646 = vadd.f32 %v2592, 1.0
        %v2647 = vadd.f32 %v2594, 1.0
        %v2648 = vadd.f32 %v2596, 1.0
        %v2649 = vadd.f32 %v2598, 1.0
        %v2650 = vadd.f32 %v2600, 1.0
        %v2651 = vadd.f32 %v2602, 1.0
        %v2652 = vadd.f32 %v2604, 1.0
        %v2653 = vadd.f32 %v2606, 1.0
        %v2654 = vadd.f32 %v2608, 1.0
        %v2655 = vadd.f32 %v2610, 1.0
        %v2656 = vadd.f32 %v2612, 1.0
        %v2657 = vadd.f32 %v2614, 1.0
        %v2658 = vadd.f32 %v2616, 1.0
        %v2659 = vadd.f32 %v2618, 1.0
        %v2660 = vadd.f32 %v2620, 1.0
        %v2661 = vadd.f32 %v2622, 1.0
        %v2662 = vadd.f32 %v2624, 1.0
        %v2663 = vadd.f32 %v2626, 1.0
        %v2664 = vadd.f32 %v2628, 1.0
        %v2665 = vadd.f32 %v2630, 1.0
        %v2666 = vadd.f32 %v2632, 1.0
        %v2667 = vadd.f32 %v2634, 1.0
        %v2668 = vadd.f32 %v2636, 1.0
        %v2669 = vrcp.pop %v2637
        %v2670 = vmul.f32 1.0, %v2669
        %v2671 = vrcp.pop %v2638
        %v2672 = vmul.f32 1.0, %v2671
        %v2673 = vrcp.pop %v2639
        %v2674 = vmul.f32 1.0, %v2673
        %v2675 = vrcp.pop %v2640
        %v2676 = vmul.f32 1.0, %v2675
        %v2677 = vrcp.pop %v2641
        %v2678 = vmul.f32 1.0, %v2677
        %v2679 = vrcp.pop %v2642
        %v2680 = vmul.f32 1.0, %v2679
        %v2681 = vrcp.pop %v2643
        %v2682 = vmul.f32 1.0, %v2681
        %v2683 = vrcp.pop %v2644
        %v2684 = vmul.f32 1.0, %v2683
        %v2685 = vrcp.pop %v2645
        %v2686 = vmul.f32 1.0, %v2685
        %v2687 = vrcp.pop %v2646
        %v2688 = vmul.f32 1.0, %v2687
        %v2689 = vrcp.pop %v2647
        %v2690 = vmul.f32 1.0, %v2689
        %v2691 = vrcp.pop %v2648
        %v2692 = vmul.f32 1.0, %v2691
        %v2693 = vrcp.pop %v2649
        %v2694 = vmul.f32 1.0, %v2693
        %v2695 = vrcp.pop %v2650
        %v2696 = vmul.f32 1.0, %v2695
        %v2697 = vrcp.pop %v2651
        %v2698 = vmul.f32 1.0, %v2697
        %v2699 = vrcp.pop %v2652
        %v2700 = vmul.f32 1.0, %v2699
        %v2701 = vrcp.pop %v2653
        %v2702 = vmul.f32 1.0, %v2701
        %v2703 = vrcp.pop %v2654
        %v2704 = vmul.f32 1.0, %v2703
        %v2705 = vrcp.pop %v2655
        %v2706 = vmul.f32 1.0, %v2705
        %v2707 = vrcp.pop %v2656
        %v2708 = vmul.f32 1.0, %v2707
        %v2709 = vrcp.pop %v2657
        %v2710 = vmul.f32 1.0, %v2709
        %v2711 = vrcp.pop %v2658
        %v2712 = vmul.f32 1.0, %v2711
        %v2713 = vrcp.pop %v2659
        %v2714 = vmul.f32 1.0, %v2713
        %v2715 = vrcp.pop %v2660
        %v2716 = vmul.f32 1.0, %v2715
        %v2717 = vrcp.pop %v2661
        %v2718 = vmul.f32 1.0, %v2717
        %v2719 = vrcp.pop %v2662
        %v2720 = vmul.f32 1.0, %v2719
        %v2721 = vrcp.pop %v2663
        %v2722 = vmul.f32 1.0, %v2721
        %v2723 = vrcp.pop %v2664
        %v2724 = vmul.f32 1.0, %v2723
        %v2725 = vrcp.pop %v2665
        %v2726 = vmul.f32 1.0, %v2725
        %v2727 = vrcp.pop %v2666
        %v2728 = vmul.f32 1.0, %v2727
        %v2729 = vrcp.pop %v2667
        %v2730 = vmul.f32 1.0, %v2729
        %v2731 = vrcp.pop %v2668
        %v2732 = vmul.f32 1.0, %v2731
        %v2733 = vmul.f32 %v2509, %v2670
        %v2734 = vmul.f32 %v2510, %v2672
        %v2735 = vmul.f32 %v2511, %v2674
        %v2736 = vmul.f32 %v2512, %v2676
        %v2737 = vmul.f32 %v2513, %v2678
        %v2738 = vmul.f32 %v2514, %v2680
        %v2739 = vmul.f32 %v2515, %v2682
        %v2740 = vmul.f32 %v2516, %v2684
        %v2741 = vmul.f32 %v2517, %v2686
        %v2742 = vmul.f32 %v2518, %v2688
        %v2743 = vmul.f32 %v2519, %v2690
        %v2744 = vmul.f32 %v2520, %v2692
        %v2745 = vmul.f32 %v2521, %v2694
        %v2746 = vmul.f32 %v2522, %v2696
        %v2747 = vmul.f32 %v2523, %v2698
        %v2748 = vmul.f32 %v2524, %v2700
        %v2749 = vmul.f32 %v2525, %v2702
        %v2750 = vmul.f32 %v2526, %v2704
        %v2751 = vmul.f32 %v2527, %v2706
        %v2752 = vmul.f32 %v2528, %v2708
        %v2753 = vmul.f32 %v2529, %v2710
        %v2754 = vmul.f32 %v2530, %v2712
        %v2755 = vmul.f32 %v2531, %v2714
        %v2756 = vmul.f32 %v2532, %v2716
        %v2757 = vmul.f32 %v2533, %v2718
        %v2758 = vmul.f32 %v2534, %v2720
        %v2759 = vmul.f32 %v2535, %v2722
        %v2760 = vmul.f32 %v2536, %v2724
        %v2761 = vmul.f32 %v2537, %v2726
        %v2762 = vmul.f32 %v2538, %v2728
        %v2763 = vmul.f32 %v2539, %v2730
        %v2764 = vmul.f32 %v2540, %v2732
        %v2765 = vpack.c.bf16 %v2734, %v2733
        %v2766 = vpack.c.bf16 %v2736, %v2735
        %v2767 = vpack.c.bf16 %v2738, %v2737
        %v2768 = vpack.c.bf16 %v2740, %v2739
        %v2769 = vpack.c.bf16 %v2742, %v2741
        %v2770 = vpack.c.bf16 %v2744, %v2743
        %v2771 = vpack.c.bf16 %v2746, %v2745
        %v2772 = vpack.c.bf16 %v2748, %v2747
        %v2773 = vpack.c.bf16 %v2750, %v2749
        %v2774 = vpack.c.bf16 %v2752, %v2751
        %v2775 = vpack.c.bf16 %v2754, %v2753
        %v2776 = vpack.c.bf16 %v2756, %v2755
        %v2777 = vpack.c.bf16 %v2758, %v2757
        %v2778 = vpack.c.bf16 %v2760, %v2759
        %v2779 = vpack.c.bf16 %v2762, %v2761
        %v2780 = vpack.c.bf16 %v2764, %v2763
        %2781 = vmatprep.subr.bf16.mxu0 0
        %2782 = vmatpush1.bf16.msra.mxu0 %v2765
        %2783 = vmatprep.subr.bf16.mxu0 0
        %2784 = vmatpush1.bf16.msra.mxu0 %v2766
        %2785 = vmatprep.subr.bf16.mxu0 0
        %2786 = vmatpush1.bf16.msra.mxu0 %v2767
        %2787 = vmatprep.subr.bf16.mxu0 0
        %2788 = vmatpush1.bf16.msra.mxu0 %v2768
        %2789 = vmatprep.subr.bf16.mxu0 0
        %2790 = vmatpush1.bf16.msra.mxu0 %v2769
        %2791 = vmatprep.subr.bf16.mxu0 0
        %2792 = vmatpush1.bf16.msra.mxu0 %v2770
        %2793 = vmatprep.subr.bf16.mxu0 0
        %2794 = vmatpush1.bf16.msra.mxu0 %v2771
        %2795 = vmatprep.subr.bf16.mxu0 0
        %2796 = vmatpush1.bf16.msra.mxu0 %v2772
        %2797 = vmatprep.subr.bf16.mxu0 0
        %2798 = vmatpush1.bf16.msra.mxu0 %v2773
        %2799 = vmatprep.subr.bf16.mxu0 0
        %2800 = vmatpush1.bf16.msra.mxu0 %v2774
        %2801 = vmatprep.subr.bf16.mxu0 0
        %2802 = vmatpush1.bf16.msra.mxu0 %v2775
        %2803 = vmatprep.subr.bf16.mxu0 0
        %2804 = vmatpush1.bf16.msra.mxu0 %v2776
        %2805 = vmatprep.subr.bf16.mxu0 0
        %2806 = vmatpush1.bf16.msra.mxu0 %v2777
        %2807 = vmatprep.subr.bf16.mxu0 0
        %2808 = vmatpush1.bf16.msra.mxu0 %v2778
        %2809 = vmatprep.subr.bf16.mxu0 0
        %2810 = vmatpush1.bf16.msra.mxu0 %v2779
        %2811 = vmatprep.subr.bf16.mxu0 0
        %2812 = vmatpush1.bf16.msra.mxu0 %v2780
        %2813 = vmatprep.mubr.bf16.mxu0 998259584
        %2814 = vmatmul.mubr.bf16.gmra.mrb[0].mxu0 998259584
        %v2815 = vpop.f32.mrb[0].mxu0
        %v2816 = vadd.f32 0.0, %v2815
        %v2817 = vpop.f32.mrb[0].mxu0
        %v2818 = vpop.f32.mrb[0].mxu0
        %v2819 = vpop.f32.mrb[0].mxu0
        %2820 = vdwg.mxu0
        %v2821 = vpack.c.bf16 %v2816, %v2816
        %v2822 = vld [vmem:[%s4] sm:$0xf]
        %v2823 = vld [vmem:[%s4 + $0x4] sm:$0xf]
        %v2824 = vld [vmem:[%s4 + $0x8] sm:$0xf]
        %v2825 = vld [vmem:[%s4 + $0xc] sm:$0xf]
        %v2826 = vld [vmem:[%s4 + $0x10] sm:$0xf]
        %v2827 = vld [vmem:[%s4 + $0x14] sm:$0xf]
        %v2828 = vld [vmem:[%s4 + $0x18] sm:$0xf]
        %v2829 = vld [vmem:[%s4 + $0x1c] sm:$0xf]
        %v2830 = vld [vmem:[%s1 + $0x6] sm:$0x1]
        %v2839 = vunpack.c.l.b16 %v2822
        %v2840 = vunpack.c.l.b16 %v2823
        %v2841 = vunpack.c.l.b16 %v2824
        %v2842 = vunpack.c.l.b16 %v2825
        %v2843 = vunpack.c.l.b16 %v2826
        %v2844 = vunpack.c.l.b16 %v2827
        %v2845 = vunpack.c.l.b16 %v2828
        %v2846 = vunpack.c.l.b16 %v2829
        %v2847 = vpack.c.b16 %v2840, %v2839
        %v2848 = vpack.c.b16 %v2842, %v2841
        %v2849 = vpack.c.b16 %v2844, %v2843
        %v2850 = vpack.c.b16 %v2846, %v2845
        %v2856 = vsel %vm1507, %v2821, 0
        %2858 = vmatprep.subr.bf16.mxu0 0
        %2859 = vmatpush1.bf16.msra.mxu0 %v2847
        %2860 = vmatprep.subr.bf16.mxu0 0
        %2861 = vmatpush1.bf16.msra.mxu0 %v2848
        %2862 = vmatprep.subr.bf16.mxu0 0
        %2863 = vmatpush1.bf16.msra.mxu0 %v2849
        %2864 = vmatprep.subr.bf16.mxu0 0
        %2865 = vmatpush1.bf16.msra.mxu0 %v2850
        %2866 = vmatprep.subr.bf16.mxu0 0
        %2867 = vmatpush1.bf16.msra.mxu0 0
        %2868 = vmatprep.subr.bf16.mxu0 0
        %2869 = vmatpush1.bf16.msra.mxu0 0
        %2870 = vmatprep.subr.bf16.mxu0 0
        %2871 = vmatpush1.bf16.msra.mxu0 0
        %2872 = vmatprep.subr.bf16.mxu0 0
        %2873 = vmatpush1.bf16.msra.mxu0 0
        %2874 = vmatprep.subr.bf16.mxu0 0
        %2875 = vmatpush1.bf16.msra.mxu0 0
        %2876 = vmatprep.subr.bf16.mxu0 0
        %2877 = vmatpush1.bf16.msra.mxu0 0
        %2878 = vmatprep.subr.bf16.mxu0 0
        %2879 = vmatpush1.bf16.msra.mxu0 0
        %2880 = vmatprep.subr.bf16.mxu0 0
        %2881 = vmatpush1.bf16.msra.mxu0 0
        %2882 = vmatprep.subr.bf16.mxu0 0
        %2883 = vmatpush1.bf16.msra.mxu0 0
        %2884 = vmatprep.subr.bf16.mxu0 0
        %2885 = vmatpush1.bf16.msra.mxu0 0
        %2886 = vmatprep.subr.bf16.mxu0 0
        %2887 = vmatpush1.bf16.msra.mxu0 0
        %2888 = vmatprep.subr.bf16.mxu0 0
        %2889 = vmatpush1.bf16.msra.mxu0 0
        %2890 = vmatprep.mubr.bf16.mxu0 0
        %2891 = vmatmul.mubr.bf16.gmra.mrb[0].mxu0 %v2856
        %v2892 = vpop.f32.mrb[0].mxu0
        %v2893 = vadd.f32 %v2830, %v2892
        %v2894 = vpop.f32.mrb[0].mxu0
        %v2895 = vpop.f32.mrb[0].mxu0
        %v2896 = vpop.f32.mrb[0].mxu0
        %2897 = vdwg.mxu0
        %v2898 = vxor.u32 %v2893, 2147483648
        %v2899 = vmul.f32 %v2898, 1.442695
        %v2900 = vpow.pop %v2899
        %v2901 = vadd.f32 %v2900, 1.0
        %v2902 = vrcp.pop %v2901
        %v2903 = vmul.f32 1.0, %v2902
        %v2904 = vmul.f32 %v2893, %v2903
        %v2905 = vpack.c.bf16 %v2904, %v2904
        %v2906 = vld [vmem:[%s5] sm:$0xf]
        %v2907 = vld [vmem:[%s1 + $0x7] sm:$0x1]
        %vm2908 = vcmask 64512
        %v2910 = vsel %vm2908, %v2905, 0
        %vm2912 = vcmask 1043456
        %v2914 = vsel %vm2912, %v2906, 0
        %2916 = vmatprep.subr.bf16.mxu0 0
        %2917 = vmatpush1.bf16.msra.mxu0 %v2914
        %2918 = vmatprep.subr.bf16.mxu0 0
        %2919 = vmatpush1.bf16.msra.mxu0 0
        %2920 = vmatprep.subr.bf16.mxu0 0
        %2921 = vmatpush1.bf16.msra.mxu0 0
        %2922 = vmatprep.subr.bf16.mxu0 0
        %2923 = vmatpush1.bf16.msra.mxu0 0
        %2924 = vmatprep.subr.bf16.mxu0 0
        %2925 = vmatpush1.bf16.msra.mxu0 0
        %2926 = vmatprep.subr.bf16.mxu0 0
        %2927 = vmatpush1.bf16.msra.mxu0 0
        %2928 = vmatprep.subr.bf16.mxu0 0
        %2929 = vmatpush1.bf16.msra.mxu0 0
        %2930 = vmatprep.subr.bf16.mxu0 0
        %2931 = vmatpush1.bf16.msra.mxu0 0
        %2932 = vmatprep.subr.bf16.mxu0 0
        %2933 = vmatpush1.bf16.msra.mxu0 0
        %2934 = vmatprep.subr.bf16.mxu0 0
        %2935 = vmatpush1.bf16.msra.mxu0 0
        %2936 = vmatprep.subr.bf16.mxu0 0
        %2937 = vmatpush1.bf16.msra.mxu0 0
        %2938 = vmatprep.subr.bf16.mxu0 0
        %2939 = vmatpush1.bf16.msra.mxu0 0
        %2940 = vmatprep.subr.bf16.mxu0 0
        %2941 = vmatpush1.bf16.msra.mxu0 0
        %2942 = vmatprep.subr.bf16.mxu0 0
        %2943 = vmatpush1.bf16.msra.mxu0 0
        %2944 = vmatprep.subr.bf16.mxu0 0
        %2945 = vmatpush1.bf16.msra.mxu0 0
        %2946 = vmatprep.subr.bf16.mxu0 0
        %2947 = vmatpush1.bf16.msra.mxu0 0
        %2948 = vmatprep.mubr.bf16.mxu0 0
        %2949 = vmatmul.mubr.bf16.gmra.mrb[0].mxu0 %v2910
        %v2950 = vpop.f32.mrb[0].mxu0
        %v2951 = vadd.f32 %v2907, %v2950
        %v2952 = vpop.f32.mrb[0].mxu0
        %v2953 = vpop.f32.mrb[0].mxu0
        %v2954 = vpop.f32.mrb[0].mxu0
        %2955 = vdwg.mxu0
        %v2956 = vxor.u32 %v2951, 2147483648
        %v2957 = vmul.f32 %v2956, 1.442695
        %v2958 = vpow.pop %v2957
        %v2959 = vadd.f32 %v2958, 1.0
        %v2960 = vrcp.pop %v2959
        %v2961 = vmul.f32 1.0, %v2960
        %v2962 = vlaneseq
        %v2963 = vshrl.u32 %v2962, 7
        %v2964 = vsub.s32 0, %v2963
        %v2965 = vrot.slane %v2961, %v2964
        %v2966 = vmul.f32 %v2733, %v2965
        %v2967 = vmul.f32 %v2734, %v2965
        %v2968 = vmul.f32 %v2735, %v2965
        %v2969 = vmul.f32 %v2736, %v2965
        %v2970 = vmul.f32 %v2737, %v2965
        %v2971 = vmul.f32 %v2738, %v2965
        %v2972 = vmul.f32 %v2739, %v2965
        %v2973 = vmul.f32 %v2740, %v2965
        %v2974 = vmul.f32 %v2741, %v2965
        %v2975 = vmul.f32 %v2742, %v2965
        %v2976 = vmul.f32 %v2743, %v2965
        %v2977 = vmul.f32 %v2744, %v2965
        %v2978 = vmul.f32 %v2745, %v2965
        %v2979 = vmul.f32 %v2746, %v2965
        %v2980 = vmul.f32 %v2747, %v2965
        %v2981 = vmul.f32 %v2748, %v2965
        %v2982 = vmul.f32 %v2749, %v2965
        %v2983 = vmul.f32 %v2750, %v2965
        %v2984 = vmul.f32 %v2751, %v2965
        %v2985 = vmul.f32 %v2752, %v2965
        %v2986 = vmul.f32 %v2753, %v2965
        %v2987 = vmul.f32 %v2754, %v2965
        %v2988 = vmul.f32 %v2755, %v2965
        %v2989 = vmul.f32 %v2756, %v2965
        %v2990 = vmul.f32 %v2757, %v2965
        %v2991 = vmul.f32 %v2758, %v2965
        %v2992 = vmul.f32 %v2759, %v2965
        %v2993 = vmul.f32 %v2760, %v2965
        %v2994 = vmul.f32 %v2761, %v2965
        %v2995 = vmul.f32 %v2762, %v2965
        %v2996 = vmul.f32 %v2763, %v2965
        %v2997 = vmul.f32 %v2764, %v2965
        %v2998 = vpack.c.bf16 %v2967, %v2966
        %v2999 = vpack.c.bf16 %v2969, %v2968
        %v3000 = vpack.c.bf16 %v2971, %v2970
        %v3001 = vpack.c.bf16 %v2973, %v2972
        %v3002 = vpack.c.bf16 %v2975, %v2974
        %v3003 = vpack.c.bf16 %v2977, %v2976
        %v3004 = vpack.c.bf16 %v2979, %v2978
        %v3005 = vpack.c.bf16 %v2981, %v2980
        %v3006 = vpack.c.bf16 %v2983, %v2982
        %v3007 = vpack.c.bf16 %v2985, %v2984
        %v3008 = vpack.c.bf16 %v2987, %v2986
        %v3009 = vpack.c.bf16 %v2989, %v2988
        %v3010 = vpack.c.bf16 %v2991, %v2990
        %v3011 = vpack.c.bf16 %v2993, %v2992
        %v3012 = vpack.c.bf16 %v2995, %v2994
        %v3013 = vpack.c.bf16 %v2997, %v2996
        %v3014 = vld [vmem:[%s6] sm:$0xf]
        %v3015 = vld [vmem:[%s6 + $0x4] sm:$0xf]
        %v3016 = vld [vmem:[%s6 + $0x8] sm:$0xf]
        %v3017 = vld [vmem:[%s6 + $0xc] sm:$0xf]
        %v3018 = vld [vmem:[%s6 + $0x10] sm:$0xf]
        %v3019 = vld [vmem:[%s6 + $0x14] sm:$0xf]
        %v3020 = vld [vmem:[%s6 + $0x18] sm:$0xf]
        %v3021 = vld [vmem:[%s6 + $0x1c] sm:$0xf]
        %v3030 = vunpack.c.l.b16 %v3014
        %v3031 = vunpack.c.l.b16 %v3015
        %v3032 = vunpack.c.l.b16 %v3016
        %v3033 = vunpack.c.l.b16 %v3017
        %v3034 = vunpack.c.l.b16 %v3018
        %v3035 = vunpack.c.l.b16 %v3019
        %v3036 = vunpack.c.l.b16 %v3020
        %v3037 = vunpack.c.l.b16 %v3021
        %v3038 = vpack.c.b16 %v3031, %v3030
        %v3039 = vpack.c.b16 %v3033, %v3032
        %v3040 = vpack.c.b16 %v3035, %v3034
        %v3041 = vpack.c.b16 %v3037, %v3036
        %v3047 = vsel %vm1507, %v2998, 0
        %v3050 = vsel %vm1507, %v2999, 0
        %v3053 = vsel %vm1507, %v3000, 0
        %v3056 = vsel %vm1507, %v3001, 0
        %v3059 = vsel %vm1507, %v3002, 0
        %v3062 = vsel %vm1507, %v3003, 0
        %v3065 = vsel %vm1507, %v3004, 0
        %v3068 = vsel %vm1507, %v3005, 0
        %v3071 = vsel %vm1507, %v3006, 0
        %v3074 = vsel %vm1507, %v3007, 0
        %v3077 = vsel %vm1507, %v3008, 0
        %v3080 = vsel %vm1507, %v3009, 0
        %v3083 = vsel %vm1507, %v3010, 0
        %v3086 = vsel %vm1507, %v3011, 0
        %v3089 = vsel %vm1507, %v3012, 0
        %v3092 = vsel %vm1507, %v3013, 0
        %3094 = vmatprep.subr.bf16.mxu0 0
        %3095 = vmatpush1.bf16.msra.mxu0 %v3038
        %3096 = vmatprep.subr.bf16.mxu0 0
        %3097 = vmatpush1.bf16.msra.mxu0 %v3039
        %3098 = vmatprep.subr.bf16.mxu0 0
        %3099 = vmatpush1.bf16.msra.mxu0 %v3040
        %3100 = vmatprep.subr.bf16.mxu0 0
        %3101 = vmatpush1.bf16.msra.mxu0 %v3041
        %3102 = vmatprep.subr.bf16.mxu0 0
        %3103 = vmatpush1.bf16.msra.mxu0 0
        %3104 = vmatprep.subr.bf16.mxu0 0
        %3105 = vmatpush1.bf16.msra.mxu0 0
        %3106 = vmatprep.subr.bf16.mxu0 0
        %3107 = vmatpush1.bf16.msra.mxu0 0
        %3108 = vmatprep.subr.bf16.mxu0 0
        %3109 = vmatpush1.bf16.msra.mxu0 0
        %3110 = vmatprep.subr.bf16.mxu0 0
        %3111 = vmatpush1.bf16.msra.mxu0 0
        %3112 = vmatprep.subr.bf16.mxu0 0
        %3113 = vmatpush1.bf16.msra.mxu0 0
        %3114 = vmatprep.subr.bf16.mxu0 0
        %3115 = vmatpush1.bf16.msra.mxu0 0
        %3116 = vmatprep.subr.bf16.mxu0 0
        %3117 = vmatpush1.bf16.msra.mxu0 0
        %3118 = vmatprep.subr.bf16.mxu0 0
        %3119 = vmatpush1.bf16.msra.mxu0 0
        %3120 = vmatprep.subr.bf16.mxu0 0
        %3121 = vmatpush1.bf16.msra.mxu0 0
        %3122 = vmatprep.subr.bf16.mxu0 0
        %3123 = vmatpush1.bf16.msra.mxu0 0
        %3124 = vmatprep.subr.bf16.mxu0 0
        %3125 = vmatpush1.bf16.msra.mxu0 0
        %3126 = vmatprep.mubr.bf16.mxu0 0
        %3127 = vmatmul.mubr.bf16.gmra.mrb[0].mxu0 %v3047
        %v3128 = vpop.f32.mrb[0].mxu0
        %v3129 = vadd.f32 0.0, %v3128
        %v3130 = vpop.f32.mrb[0].mxu0
        %v3131 = vpop.f32.mrb[0].mxu0
        %v3132 = vadd.f32 0.0, %v3131
        %v3133 = vpop.f32.mrb[0].mxu0
        %3134 = vmatprep.mubr.bf16.mxu0 0
        %3135 = vmatmul.mubr.bf16.gmra.mrb[0].mxu0 %v3050
        %v3136 = vpop.f32.mrb[0].mxu0
        %v3137 = vadd.f32 0.0, %v3136
        %v3138 = vpop.f32.mrb[0].mxu0
        %v3139 = vpop.f32.mrb[0].mxu0
        %v3140 = vadd.f32 0.0, %v3139
        %v3141 = vpop.f32.mrb[0].mxu0
        %3142 = vmatprep.mubr.bf16.mxu0 0
        %3143 = vmatmul.mubr.bf16.gmra.mrb[0].mxu0 %v3053
        %v3144 = vpop.f32.mrb[0].mxu0
        %v3145 = vadd.f32 0.0, %v3144
        %v3146 = vpop.f32.mrb[0].mxu0
        %v3147 = vpop.f32.mrb[0].mxu0
        %v3148 = vadd.f32 0.0, %v3147
        %v3149 = vpop.f32.mrb[0].mxu0
        %3150 = vmatprep.mubr.bf16.mxu0 0
        %3151 = vmatmul.mubr.bf16.gmra.mrb[0].mxu0 %v3056
        %v3152 = vpop.f32.mrb[0].mxu0
        %v3153 = vadd.f32 0.0, %v3152
        %v3154 = vpop.f32.mrb[0].mxu0
        %v3155 = vpop.f32.mrb[0].mxu0
        %v3156 = vadd.f32 0.0, %v3155
        %v3157 = vpop.f32.mrb[0].mxu0
        %3158 = vmatprep.mubr.bf16.mxu0 0
        %3159 = vmatmul.mubr.bf16.gmra.mrb[0].mxu0 %v3059
        %v3160 = vpop.f32.mrb[0].mxu0
        %v3161 = vadd.f32 0.0, %v3160
        %v3162 = vpop.f32.mrb[0].mxu0
        %v3163 = vpop.f32.mrb[0].mxu0
        %v3164 = vadd.f32 0.0, %v3163
        %v3165 = vpop.f32.mrb[0].mxu0
        %3166 = vmatprep.mubr.bf16.mxu0 0
        %3167 = vmatmul.mubr.bf16.gmra.mrb[0].mxu0 %v3062
        %v3168 = vpop.f32.mrb[0].mxu0
        %v3169 = vadd.f32 0.0, %v3168
        %v3170 = vpop.f32.mrb[0].mxu0
        %v3171 = vpop.f32.mrb[0].mxu0
        %v3172 = vadd.f32 0.0, %v3171
        %v3173 = vpop.f32.mrb[0].mxu0
        %3174 = vmatprep.mubr.bf16.mxu0 0
        %3175 = vmatmul.mubr.bf16.gmra.mrb[0].mxu0 %v3065
        %v3176 = vpop.f32.mrb[0].mxu0
        %v3177 = vadd.f32 0.0, %v3176
        %v3178 = vpop.f32.mrb[0].mxu0
        %v3179 = vpop.f32.mrb[0].mxu0
        %v3180 = vadd.f32 0.0, %v3179
        %v3181 = vpop.f32.mrb[0].mxu0
        %3182 = vmatprep.mubr.bf16.mxu0 0
        %3183 = vmatmul.mubr.bf16.gmra.mrb[0].mxu0 %v3068
        %v3184 = vpop.f32.mrb[0].mxu0
        %v3185 = vadd.f32 0.0, %v3184
        %v3186 = vpop.f32.mrb[0].mxu0
        %v3187 = vpop.f32.mrb[0].mxu0
        %v3188 = vadd.f32 0.0, %v3187
        %v3189 = vpop.f32.mrb[0].mxu0
        %3190 = vmatprep.mubr.bf16.mxu0 0
        %3191 = vmatmul.mubr.bf16.gmra.mrb[0].mxu0 %v3071
        %v3192 = vpop.f32.mrb[0].mxu0
        %v3193 = vadd.f32 0.0, %v3192
        %v3194 = vpop.f32.mrb[0].mxu0
        %v3195 = vpop.f32.mrb[0].mxu0
        %v3196 = vadd.f32 0.0, %v3195
        %v3197 = vpop.f32.mrb[0].mxu0
        %3198 = vmatprep.mubr.bf16.mxu0 0
        %3199 = vmatmul.mubr.bf16.gmra.mrb[0].mxu0 %v3074
        %v3200 = vpop.f32.mrb[0].mxu0
        %v3201 = vadd.f32 0.0, %v3200
        %v3202 = vpop.f32.mrb[0].mxu0
        %v3203 = vpop.f32.mrb[0].mxu0
        %v3204 = vadd.f32 0.0, %v3203
        %v3205 = vpop.f32.mrb[0].mxu0
        %3206 = vmatprep.mubr.bf16.mxu0 0
        %3207 = vmatmul.mubr.bf16.gmra.mrb[0].mxu0 %v3077
        %v3208 = vpop.f32.mrb[0].mxu0
        %v3209 = vadd.f32 0.0, %v3208
        %v3210 = vpop.f32.mrb[0].mxu0
        %v3211 = vpop.f32.mrb[0].mxu0
        %v3212 = vadd.f32 0.0, %v3211
        %v3213 = vpop.f32.mrb[0].mxu0
        %3214 = vmatprep.mubr.bf16.mxu0 0
        %3215 = vmatmul.mubr.bf16.gmra.mrb[0].mxu0 %v3080
        %v3216 = vpop.f32.mrb[0].mxu0
        %v3217 = vadd.f32 0.0, %v3216
        %v3218 = vpop.f32.mrb[0].mxu0
        %v3219 = vpop.f32.mrb[0].mxu0
        %v3220 = vadd.f32 0.0, %v3219
        %v3221 = vpop.f32.mrb[0].mxu0
        %3222 = vmatprep.mubr.bf16.mxu0 0
        %3223 = vmatmul.mubr.bf16.gmra.mrb[0].mxu0 %v3083
        %v3224 = vpop.f32.mrb[0].mxu0
        %v3225 = vadd.f32 0.0, %v3224
        %v3226 = vpop.f32.mrb[0].mxu0
        %v3227 = vpop.f32.mrb[0].mxu0
        %v3228 = vadd.f32 0.0, %v3227
        %v3229 = vpop.f32.mrb[0].mxu0
        %3230 = vmatprep.mubr.bf16.mxu0 0
        %3231 = vmatmul.mubr.bf16.gmra.mrb[0].mxu0 %v3086
        %v3232 = vpop.f32.mrb[0].mxu0
        %v3233 = vadd.f32 0.0, %v3232
        %v3234 = vpop.f32.mrb[0].mxu0
        %v3235 = vpop.f32.mrb[0].mxu0
        %v3236 = vadd.f32 0.0, %v3235
        %v3237 = vpop.f32.mrb[0].mxu0
        %3238 = vmatprep.mubr.bf16.mxu0 0
        %3239 = vmatmul.mubr.bf16.gmra.mrb[0].mxu0 %v3089
        %v3240 = vpop.f32.mrb[0].mxu0
        %v3241 = vadd.f32 0.0, %v3240
        %v3242 = vpop.f32.mrb[0].mxu0
        %v3243 = vpop.f32.mrb[0].mxu0
        %v3244 = vadd.f32 0.0, %v3243
        %v3245 = vpop.f32.mrb[0].mxu0
        %3246 = vmatprep.mubr.bf16.mxu0 0
        %3247 = vmatmul.mubr.bf16.gmra.mrb[0].mxu0 %v3092
        %v3248 = vpop.f32.mrb[0].mxu0
        %v3249 = vadd.f32 0.0, %v3248
        %v3250 = vpop.f32.mrb[0].mxu0
        %v3251 = vpop.f32.mrb[0].mxu0
        %v3252 = vadd.f32 0.0, %v3251
        %v3253 = vpop.f32.mrb[0].mxu0
        %3254 = vdwg.mxu0
        %v3255 = vld [vmem:[%s1 + $0x8] sm:$0x1]
        %v3256 = vlaneseq
        %v3257 = vshrl.u32 %v3256, 7
        %v3258 = vsub.s32 0, %v3257
        %v3259 = vrot.slane %v3255, %v3258
        %v3260 = vmul.f32 %v3129, %v3259
        %v3261 = vmul.f32 %v3132, %v3259
        %v3262 = vmul.f32 %v3137, %v3259
        %v3263 = vmul.f32 %v3140, %v3259
        %v3264 = vmul.f32 %v3145, %v3259
        %v3265 = vmul.f32 %v3148, %v3259
        %v3266 = vmul.f32 %v3153, %v3259
        %v3267 = vmul.f32 %v3156, %v3259
        %v3268 = vmul.f32 %v3161, %v3259
        %v3269 = vmul.f32 %v3164, %v3259
        %v3270 = vmul.f32 %v3169, %v3259
        %v3271 = vmul.f32 %v3172, %v3259
        %v3272 = vmul.f32 %v3177, %v3259
        %v3273 = vmul.f32 %v3180, %v3259
        %v3274 = vmul.f32 %v3185, %v3259
        %v3275 = vmul.f32 %v3188, %v3259
        %v3276 = vmul.f32 %v3193, %v3259
        %v3277 = vmul.f32 %v3196, %v3259
        %v3278 = vmul.f32 %v3201, %v3259
        %v3279 = vmul.f32 %v3204, %v3259
        %v3280 = vmul.f32 %v3209, %v3259
        %v3281 = vmul.f32 %v3212, %v3259
        %v3282 = vmul.f32 %v3217, %v3259
        %v3283 = vmul.f32 %v3220, %v3259
        %v3284 = vmul.f32 %v3225, %v3259
        %v3285 = vmul.f32 %v3228, %v3259
        %v3286 = vmul.f32 %v3233, %v3259
        %v3287 = vmul.f32 %v3236, %v3259
        %v3288 = vmul.f32 %v3241, %v3259
        %v3289 = vmul.f32 %v3244, %v3259
        %v3290 = vmul.f32 %v3249, %v3259
        %v3291 = vmul.f32 %v3252, %v3259
        %v3292 = vld [vmem:[%s1 + $0x9] sm:$0x1]
        %v3293 = vlaneseq
        %v3294 = vshrl.u32 %v3293, 7
        %v3295 = vsub.s32 0, %v3294
        %v3296 = vrot.slane %v3292, %v3295
        %v3297 = vadd.f32 %v3260, %v3296
        %v3298 = vadd.f32 %v3261, %v3296
        %v3299 = vadd.f32 %v3262, %v3296
        %v3300 = vadd.f32 %v3263, %v3296
        %v3301 = vadd.f32 %v3264, %v3296
        %v3302 = vadd.f32 %v3265, %v3296
        %v3303 = vadd.f32 %v3266, %v3296
        %v3304 = vadd.f32 %v3267, %v3296
        %v3305 = vadd.f32 %v3268, %v3296
        %v3306 = vadd.f32 %v3269, %v3296
        %v3307 = vadd.f32 %v3270, %v3296
        %v3308 = vadd.f32 %v3271, %v3296
        %v3309 = vadd.f32 %v3272, %v3296
        %v3310 = vadd.f32 %v3273, %v3296
        %v3311 = vadd.f32 %v3274, %v3296
        %v3312 = vadd.f32 %v3275, %v3296
        %v3313 = vadd.f32 %v3276, %v3296
        %v3314 = vadd.f32 %v3277, %v3296
        %v3315 = vadd.f32 %v3278, %v3296
        %v3316 = vadd.f32 %v3279, %v3296
        %v3317 = vadd.f32 %v3280, %v3296
        %v3318 = vadd.f32 %v3281, %v3296
        %v3319 = vadd.f32 %v3282, %v3296
        %v3320 = vadd.f32 %v3283, %v3296
        %v3321 = vadd.f32 %v3284, %v3296
        %v3322 = vadd.f32 %v3285, %v3296
        %v3323 = vadd.f32 %v3286, %v3296
        %v3324 = vadd.f32 %v3287, %v3296
        %v3325 = vadd.f32 %v3288, %v3296
        %v3326 = vadd.f32 %v3289, %v3296
        %v3327 = vadd.f32 %v3290, %v3296
        %v3328 = vadd.f32 %v3291, %v3296
        %v3329 = vadd.f32 %v3297, %v936
        %v3330 = vadd.f32 %v3298, %v937
        %v3331 = vadd.f32 %v3299, %v938
        %v3332 = vadd.f32 %v3300, %v939
        %v3333 = vadd.f32 %v3301, %v940
        %v3334 = vadd.f32 %v3302, %v941
        %v3335 = vadd.f32 %v3303, %v942
        %v3336 = vadd.f32 %v3304, %v943
        %v3337 = vadd.f32 %v3305, %v944
        %v3338 = vadd.f32 %v3306, %v945
        %v3339 = vadd.f32 %v3307, %v946
        %v3340 = vadd.f32 %v3308, %v947
        %v3341 = vadd.f32 %v3309, %v948
        %v3342 = vadd.f32 %v3310, %v949
        %v3343 = vadd.f32 %v3311, %v950
        %v3344 = vadd.f32 %v3312, %v951
        %v3345 = vadd.f32 %v3313, %v952
        %v3346 = vadd.f32 %v3314, %v953
        %v3347 = vadd.f32 %v3315, %v954
        %v3348 = vadd.f32 %v3316, %v955
        %v3349 = vadd.f32 %v3317, %v956
        %v3350 = vadd.f32 %v3318, %v957
        %v3351 = vadd.f32 %v3319, %v958
        %v3352 = vadd.f32 %v3320, %v959
        %v3353 = vadd.f32 %v3321, %v960
        %v3354 = vadd.f32 %v3322, %v961
        %v3355 = vadd.f32 %v3323, %v962
        %v3356 = vadd.f32 %v3324, %v963
        %v3357 = vadd.f32 %v3325, %v964
        %v3358 = vadd.f32 %v3326, %v965
        %v3359 = vadd.f32 %v3327, %v966
        %v3360 = vadd.f32 %v3328, %v967
        %v3361 = vpack.c.bf16 %v3330, %v3329
        %v3362 = vpack.c.bf16 %v3332, %v3331
        %v3363 = vpack.c.bf16 %v3334, %v3333
        %v3364 = vpack.c.bf16 %v3336, %v3335
        %v3365 = vpack.c.bf16 %v3338, %v3337
        %v3366 = vpack.c.bf16 %v3340, %v3339
        %v3367 = vpack.c.bf16 %v3342, %v3341
        %v3368 = vpack.c.bf16 %v3344, %v3343
        %v3369 = vpack.c.bf16 %v3346, %v3345
        %v3370 = vpack.c.bf16 %v3348, %v3347
        %v3371 = vpack.c.bf16 %v3350, %v3349
        %v3372 = vpack.c.bf16 %v3352, %v3351
        %v3373 = vpack.c.bf16 %v3354, %v3353
        %v3374 = vpack.c.bf16 %v3356, %v3355
        %v3375 = vpack.c.bf16 %v3358, %v3357
        %v3376 = vpack.c.bf16 %v3360, %v3359
        %v3377 = vld [vmem:[%s7] sm:$0xf]
        %v3378 = vld [vmem:[%s7 + $0x4] sm:$0xf]
        %v3379 = vld [vmem:[%s7 + $0x8] sm:$0xf]
        %v3380 = vld [vmem:[%s7 + $0xc] sm:$0xf]
        %v3381 = vld [vmem:[%s7 + $0x10] sm:$0xf]
        %v3382 = vld [vmem:[%s7 + $0x14] sm:$0xf]
        %v3383 = vld [vmem:[%s7 + $0x18] sm:$0xf]
        %v3384 = vld [vmem:[%s7 + $0x1c] sm:$0xf]
        %v3385 = vld [vmem:[%s7 + $0x20] sm:$0xf]
        %v3386 = vld [vmem:[%s7 + $0x24] sm:$0xf]
        %v3387 = vld [vmem:[%s7 + $0x28] sm:$0xf]
        %v3388 = vld [vmem:[%s7 + $0x2c] sm:$0xf]
        %v3389 = vld [vmem:[%s7 + $0x30] sm:$0xf]
        %v3390 = vld [vmem:[%s7 + $0x34] sm:$0xf]
        %v3391 = vld [vmem:[%s7 + $0x38] sm:$0xf]
        %v3392 = vld [vmem:[%s7 + $0x3c] sm:$0xf]
        %v3409 = vunpack.c.l.b16 %v3377
        %v3410 = vunpack.c.l.b16 %v3378
        %v3411 = vunpack.c.l.b16 %v3379
        %v3412 = vunpack.c.l.b16 %v3380
        %v3413 = vunpack.c.l.b16 %v3381
        %v3414 = vunpack.c.l.b16 %v3382
        %v3415 = vunpack.c.l.b16 %v3383
        %v3416 = vunpack.c.l.b16 %v3384
        %v3417 = vunpack.c.l.b16 %v3385
        %v3418 = vunpack.c.l.b16 %v3386
        %v3419 = vunpack.c.l.b16 %v3387
        %v3420 = vunpack.c.l.b16 %v3388
        %v3421 = vunpack.c.l.b16 %v3389
        %v3422 = vunpack.c.l.b16 %v3390
        %v3423 = vunpack.c.l.b16 %v3391
        %v3424 = vunpack.c.l.b16 %v3392
        %v3425 = vpack.c.b16 %v3410, %v3409
        %v3426 = vpack.c.b16 %v3412, %v3411
        %v3427 = vpack.c.b16 %v3414, %v3413
        %v3428 = vpack.c.b16 %v3416, %v3415
        %v3429 = vpack.c.b16 %v3418, %v3417
        %v3430 = vpack.c.b16 %v3420, %v3419
        %v3431 = vpack.c.b16 %v3422, %v3421
        %v3432 = vpack.c.b16 %v3424, %v3423
        %3441 = vmatprep.subr.bf16.mxu0 0
        %3442 = vmatpush1.bf16.msra.mxu0 %v3425
        %3443 = vmatprep.subr.bf16.mxu0 0
        %3444 = vmatpush1.bf16.msra.mxu0 %v3426
        %3445 = vmatprep.subr.bf16.mxu0 0
        %3446 = vmatpush1.bf16.msra.mxu0 %v3427
        %3447 = vmatprep.subr.bf16.mxu0 0
        %3448 = vmatpush1.bf16.msra.mxu0 %v3428
        %3449 = vmatprep.subr.bf16.mxu0 0
        %3450 = vmatpush1.bf16.msra.mxu0 %v3429
        %3451 = vmatprep.subr.bf16.mxu0 0
        %3452 = vmatpush1.bf16.msra.mxu0 %v3430
        %3453 = vmatprep.subr.bf16.mxu0 0
        %3454 = vmatpush1.bf16.msra.mxu0 %v3431
        %3455 = vmatprep.subr.bf16.mxu0 0
        %3456 = vmatpush1.bf16.msra.mxu0 %v3432
        %3457 = vmatprep.subr.bf16.mxu0 0
        %3458 = vmatpush1.bf16.msra.mxu0 0
        %3459 = vmatprep.subr.bf16.mxu0 0
        %3460 = vmatpush1.bf16.msra.mxu0 0
        %3461 = vmatprep.subr.bf16.mxu0 0
        %3462 = vmatpush1.bf16.msra.mxu0 0
        %3463 = vmatprep.subr.bf16.mxu0 0
        %3464 = vmatpush1.bf16.msra.mxu0 0
        %3465 = vmatprep.subr.bf16.mxu0 0
        %3466 = vmatpush1.bf16.msra.mxu0 0
        %3467 = vmatprep.subr.bf16.mxu0 0
        %3468 = vmatpush1.bf16.msra.mxu0 0
        %3469 = vmatprep.subr.bf16.mxu0 0
        %3470 = vmatpush1.bf16.msra.mxu0 0
        %3471 = vmatprep.subr.bf16.mxu0 0
        %3472 = vmatpush1.bf16.msra.mxu0 0
        %3473 = vmatprep.mubr.bf16.mxu0 0
        %3474 = vmatmul.mubr.bf16.gmra.mrb[0].mxu0 %v3361
        %v3475 = vpop.f32.mrb[0].mxu0
        %v3476 = vadd.f32 0.0, %v3475
        %v3477 = vpop.f32.mrb[0].mxu0
        %v3478 = vpop.f32.mrb[0].mxu0
        %v3479 = vadd.f32 0.0, %v3478
        %v3480 = vpop.f32.mrb[0].mxu0
        %3481 = vmatprep.mubr.bf16.mxu0 0
        %3482 = vmatmul.mubr.bf16.gmra.mrb[0].mxu0 %v3362
        %v3483 = vpop.f32.mrb[0].mxu0
        %v3484 = vadd.f32 0.0, %v3483
        %v3485 = vpop.f32.mrb[0].mxu0
        %v3486 = vpop.f32.mrb[0].mxu0
        %v3487 = vadd.f32 0.0, %v3486
        %v3488 = vpop.f32.mrb[0].mxu0
        %3489 = vmatprep.mubr.bf16.mxu0 0
        %3490 = vmatmul.mubr.bf16.gmra.mrb[0].mxu0 %v3363
        %v3491 = vpop.f32.mrb[0].mxu0
        %v3492 = vadd.f32 0.0, %v3491
        %v3493 = vpop.f32.mrb[0].mxu0
        %v3494 = vpop.f32.mrb[0].mxu0
        %v3495 = vadd.f32 0.0, %v3494
        %v3496 = vpop.f32.mrb[0].mxu0
        %3497 = vmatprep.mubr.bf16.mxu0 0
        %3498 = vmatmul.mubr.bf16.gmra.mrb[0].mxu0 %v3364
        %v3499 = vpop.f32.mrb[0].mxu0
        %v3500 = vadd.f32 0.0, %v3499
        %v3501 = vpop.f32.mrb[0].mxu0
        %v3502 = vpop.f32.mrb[0].mxu0
        %v3503 = vadd.f32 0.0, %v3502
        %v3504 = vpop.f32.mrb[0].mxu0
        %3505 = vmatprep.mubr.bf16.mxu0 0
        %3506 = vmatmul.mubr.bf16.gmra.mrb[0].mxu0 %v3365
        %v3507 = vpop.f32.mrb[0].mxu0
        %v3508 = vadd.f32 0.0, %v3507
        %v3509 = vpop.f32.mrb[0].mxu0
        %v3510 = vpop.f32.mrb[0].mxu0
        %v3511 = vadd.f32 0.0, %v3510
        %v3512 = vpop.f32.mrb[0].mxu0
        %3513 = vmatprep.mubr.bf16.mxu0 0
        %3514 = vmatmul.mubr.bf16.gmra.mrb[0].mxu0 %v3366
        %v3515 = vpop.f32.mrb[0].mxu0
        %v3516 = vadd.f32 0.0, %v3515
        %v3517 = vpop.f32.mrb[0].mxu0
        %v3518 = vpop.f32.mrb[0].mxu0
        %v3519 = vadd.f32 0.0, %v3518
        %v3520 = vpop.f32.mrb[0].mxu0
        %3521 = vmatprep.mubr.bf16.mxu0 0
        %3522 = vmatmul.mubr.bf16.gmra.mrb[0].mxu0 %v3367
        %v3523 = vpop.f32.mrb[0].mxu0
        %v3524 = vadd.f32 0.0, %v3523
        %v3525 = vpop.f32.mrb[0].mxu0
        %v3526 = vpop.f32.mrb[0].mxu0
        %v3527 = vadd.f32 0.0, %v3526
        %v3528 = vpop.f32.mrb[0].mxu0
        %3529 = vmatprep.mubr.bf16.mxu0 0
        %3530 = vmatmul.mubr.bf16.gmra.mrb[0].mxu0 %v3368
        %v3531 = vpop.f32.mrb[0].mxu0
        %v3532 = vadd.f32 0.0, %v3531
        %v3533 = vpop.f32.mrb[0].mxu0
        %v3534 = vpop.f32.mrb[0].mxu0
        %v3535 = vadd.f32 0.0, %v3534
        %v3536 = vpop.f32.mrb[0].mxu0
        %3537 = vmatprep.mubr.bf16.mxu0 0
        %3538 = vmatmul.mubr.bf16.gmra.mrb[0].mxu0 %v3369
        %v3539 = vpop.f32.mrb[0].mxu0
        %v3540 = vadd.f32 0.0, %v3539
        %v3541 = vpop.f32.mrb[0].mxu0
        %v3542 = vpop.f32.mrb[0].mxu0
        %v3543 = vadd.f32 0.0, %v3542
        %v3544 = vpop.f32.mrb[0].mxu0
        %3545 = vmatprep.mubr.bf16.mxu0 0
        %3546 = vmatmul.mubr.bf16.gmra.mrb[0].mxu0 %v3370
        %v3547 = vpop.f32.mrb[0].mxu0
        %v3548 = vadd.f32 0.0, %v3547
        %v3549 = vpop.f32.mrb[0].mxu0
        %v3550 = vpop.f32.mrb[0].mxu0
        %v3551 = vadd.f32 0.0, %v3550
        %v3552 = vpop.f32.mrb[0].mxu0
        %3553 = vmatprep.mubr.bf16.mxu0 0
        %3554 = vmatmul.mubr.bf16.gmra.mrb[0].mxu0 %v3371
        %v3555 = vpop.f32.mrb[0].mxu0
        %v3556 = vadd.f32 0.0, %v3555
        %v3557 = vpop.f32.mrb[0].mxu0
        %v3558 = vpop.f32.mrb[0].mxu0
        %v3559 = vadd.f32 0.0, %v3558
        %v3560 = vpop.f32.mrb[0].mxu0
        %3561 = vmatprep.mubr.bf16.mxu0 0
        %3562 = vmatmul.mubr.bf16.gmra.mrb[0].mxu0 %v3372
        %v3563 = vpop.f32.mrb[0].mxu0
        %v3564 = vadd.f32 0.0, %v3563
        %v3565 = vpop.f32.mrb[0].mxu0
        %v3566 = vpop.f32.mrb[0].mxu0
        %v3567 = vadd.f32 0.0, %v3566
        %v3568 = vpop.f32.mrb[0].mxu0
        %3569 = vmatprep.mubr.bf16.mxu0 0
        %3570 = vmatmul.mubr.bf16.gmra.mrb[0].mxu0 %v3373
        %v3571 = vpop.f32.mrb[0].mxu0
        %v3572 = vadd.f32 0.0, %v3571
        %v3573 = vpop.f32.mrb[0].mxu0
        %v3574 = vpop.f32.mrb[0].mxu0
        %v3575 = vadd.f32 0.0, %v3574
        %v3576 = vpop.f32.mrb[0].mxu0
        %3577 = vmatprep.mubr.bf16.mxu0 0
        %3578 = vmatmul.mubr.bf16.gmra.mrb[0].mxu0 %v3374
        %v3579 = vpop.f32.mrb[0].mxu0
        %v3580 = vadd.f32 0.0, %v3579
        %v3581 = vpop.f32.mrb[0].mxu0
        %v3582 = vpop.f32.mrb[0].mxu0
        %v3583 = vadd.f32 0.0, %v3582
        %v3584 = vpop.f32.mrb[0].mxu0
        %3585 = vmatprep.mubr.bf16.mxu0 0
        %3586 = vmatmul.mubr.bf16.gmra.mrb[0].mxu0 %v3375
        %v3587 = vpop.f32.mrb[0].mxu0
        %v3588 = vadd.f32 0.0, %v3587
        %v3589 = vpop.f32.mrb[0].mxu0
        %v3590 = vpop.f32.mrb[0].mxu0
        %v3591 = vadd.f32 0.0, %v3590
        %v3592 = vpop.f32.mrb[0].mxu0
        %3593 = vmatprep.mubr.bf16.mxu0 0
        %3594 = vmatmul.mubr.bf16.gmra.mrb[0].mxu0 %v3376
        %v3595 = vpop.f32.mrb[0].mxu0
        %v3596 = vadd.f32 0.0, %v3595
        %v3597 = vpop.f32.mrb[0].mxu0
        %v3598 = vpop.f32.mrb[0].mxu0
        %v3599 = vadd.f32 0.0, %v3598
        %v3600 = vpop.f32.mrb[0].mxu0
        %3601 = vdwg.mxu0
        %v3602 = vld [vmem:[%s1 + $0xa] sm:$0x1]
        %v3603 = vlaneseq
        %v3604 = vshrl.u32 %v3603, 7
        %v3605 = vsub.s32 0, %v3604
        %v3606 = vrot.slane %v3602, %v3605
        %v3607 = vmul.f32 %v3476, %v3606
        %v3608 = vmul.f32 %v3479, %v3606
        %v3609 = vmul.f32 %v3484, %v3606
        %v3610 = vmul.f32 %v3487, %v3606
        %v3611 = vmul.f32 %v3492, %v3606
        %v3612 = vmul.f32 %v3495, %v3606
        %v3613 = vmul.f32 %v3500, %v3606
        %v3614 = vmul.f32 %v3503, %v3606
        %v3615 = vmul.f32 %v3508, %v3606
        %v3616 = vmul.f32 %v3511, %v3606
        %v3617 = vmul.f32 %v3516, %v3606
        %v3618 = vmul.f32 %v3519, %v3606
        %v3619 = vmul.f32 %v3524, %v3606
        %v3620 = vmul.f32 %v3527, %v3606
        %v3621 = vmul.f32 %v3532, %v3606
        %v3622 = vmul.f32 %v3535, %v3606
        %v3623 = vmul.f32 %v3540, %v3606
        %v3624 = vmul.f32 %v3543, %v3606
        %v3625 = vmul.f32 %v3548, %v3606
        %v3626 = vmul.f32 %v3551, %v3606
        %v3627 = vmul.f32 %v3556, %v3606
        %v3628 = vmul.f32 %v3559, %v3606
        %v3629 = vmul.f32 %v3564, %v3606
        %v3630 = vmul.f32 %v3567, %v3606
        %v3631 = vmul.f32 %v3572, %v3606
        %v3632 = vmul.f32 %v3575, %v3606
        %v3633 = vmul.f32 %v3580, %v3606
        %v3634 = vmul.f32 %v3583, %v3606
        %v3635 = vmul.f32 %v3588, %v3606
        %v3636 = vmul.f32 %v3591, %v3606
        %v3637 = vmul.f32 %v3596, %v3606
        %v3638 = vmul.f32 %v3599, %v3606
        %v3639 = vld [vmem:[%s1 + $0xb] sm:$0x1]
        %v3640 = vlaneseq
        %v3641 = vshrl.u32 %v3640, 7
        %v3642 = vsub.s32 0, %v3641
        %v3643 = vrot.slane %v3639, %v3642
        %v3644 = vadd.f32 %v3607, %v3643
        %v3645 = vadd.f32 %v3608, %v3643
        %v3646 = vadd.f32 %v3609, %v3643
        %v3647 = vadd.f32 %v3610, %v3643
        %v3648 = vadd.f32 %v3611, %v3643
        %v3649 = vadd.f32 %v3612, %v3643
        %v3650 = vadd.f32 %v3613, %v3643
        %v3651 = vadd.f32 %v3614, %v3643
        %v3652 = vadd.f32 %v3615, %v3643
        %v3653 = vadd.f32 %v3616, %v3643
        %v3654 = vadd.f32 %v3617, %v3643
        %v3655 = vadd.f32 %v3618, %v3643
        %v3656 = vadd.f32 %v3619, %v3643
        %v3657 = vadd.f32 %v3620, %v3643
        %v3658 = vadd.f32 %v3621, %v3643
        %v3659 = vadd.f32 %v3622, %v3643
        %v3660 = vadd.f32 %v3623, %v3643
        %v3661 = vadd.f32 %v3624, %v3643
        %v3662 = vadd.f32 %v3625, %v3643
        %v3663 = vadd.f32 %v3626, %v3643
        %v3664 = vadd.f32 %v3627, %v3643
        %v3665 = vadd.f32 %v3628, %v3643
        %v3666 = vadd.f32 %v3629, %v3643
        %v3667 = vadd.f32 %v3630, %v3643
        %v3668 = vadd.f32 %v3631, %v3643
        %v3669 = vadd.f32 %v3632, %v3643
        %v3670 = vadd.f32 %v3633, %v3643
        %v3671 = vadd.f32 %v3634, %v3643
        %v3672 = vadd.f32 %v3635, %v3643
        %v3673 = vadd.f32 %v3636, %v3643
        %v3674 = vadd.f32 %v3637, %v3643
        %v3675 = vadd.f32 %v3638, %v3643
        %v3676 = vxor.u32 %v3644, 2147483648
        %v3677 = vxor.u32 %v3645, 2147483648
        %v3678 = vxor.u32 %v3646, 2147483648
        %v3679 = vxor.u32 %v3647, 2147483648
        %v3680 = vxor.u32 %v3648, 2147483648
        %v3681 = vxor.u32 %v3649, 2147483648
        %v3682 = vxor.u32 %v3650, 2147483648
        %v3683 = vxor.u32 %v3651, 2147483648
        %v3684 = vxor.u32 %v3652, 2147483648
        %v3685 = vxor.u32 %v3653, 2147483648
        %v3686 = vxor.u32 %v3654, 2147483648
        %v3687 = vxor.u32 %v3655, 2147483648
        %v3688 = vxor.u32 %v3656, 2147483648
        %v3689 = vxor.u32 %v3657, 2147483648
        %v3690 = vxor.u32 %v3658, 2147483648
        %v3691 = vxor.u32 %v3659, 2147483648
        %v3692 = vxor.u32 %v3660, 2147483648
        %v3693 = vxor.u32 %v3661, 2147483648
        %v3694 = vxor.u32 %v3662, 2147483648
        %v3695 = vxor.u32 %v3663, 2147483648
        %v3696 = vxor.u32 %v3664, 2147483648
        %v3697 = vxor.u32 %v3665, 2147483648
        %v3698 = vxor.u32 %v3666, 2147483648
        %v3699 = vxor.u32 %v3667, 2147483648
        %v3700 = vxor.u32 %v3668, 2147483648
        %v3701 = vxor.u32 %v3669, 2147483648
        %v3702 = vxor.u32 %v3670, 2147483648
        %v3703 = vxor.u32 %v3671, 2147483648
        %v3704 = vxor.u32 %v3672, 2147483648
        %v3705 = vxor.u32 %v3673, 2147483648
        %v3706 = vxor.u32 %v3674, 2147483648
        %v3707 = vxor.u32 %v3675, 2147483648
        %v3708 = vmul.f32 %v3676, 1.442695
        %v3709 = vpow.pop %v3708
        %v3710 = vmul.f32 %v3677, 1.442695
        %v3711 = vpow.pop %v3710
        %v3712 = vmul.f32 %v3678, 1.442695
        %v3713 = vpow.pop %v3712
        %v3714 = vmul.f32 %v3679, 1.442695
        %v3715 = vpow.pop %v3714
        %v3716 = vmul.f32 %v3680, 1.442695
        %v3717 = vpow.pop %v3716
        %v3718 = vmul.f32 %v3681, 1.442695
        %v3719 = vpow.pop %v3718
        %v3720 = vmul.f32 %v3682, 1.442695
        %v3721 = vpow.pop %v3720
        %v3722 = vmul.f32 %v3683, 1.442695
        %v3723 = vpow.pop %v3722
        %v3724 = vmul.f32 %v3684, 1.442695
        %v3725 = vpow.pop %v3724
        %v3726 = vmul.f32 %v3685, 1.442695
        %v3727 = vpow.pop %v3726
        %v3728 = vmul.f32 %v3686, 1.442695
        %v3729 = vpow.pop %v3728
        %v3730 = vmul.f32 %v3687, 1.442695
        %v3731 = vpow.pop %v3730
        %v3732 = vmul.f32 %v3688, 1.442695
        %v3733 = vpow.pop %v3732
        %v3734 = vmul.f32 %v3689, 1.442695
        %v3735 = vpow.pop %v3734
        %v3736 = vmul.f32 %v3690, 1.442695
        %v3737 = vpow.pop %v3736
        %v3738 = vmul.f32 %v3691, 1.442695
        %v3739 = vpow.pop %v3738
        %v3740 = vmul.f32 %v3692, 1.442695
        %v3741 = vpow.pop %v3740
        %v3742 = vmul.f32 %v3693, 1.442695
        %v3743 = vpow.pop %v3742
        %v3744 = vmul.f32 %v3694, 1.442695
        %v3745 = vpow.pop %v3744
        %v3746 = vmul.f32 %v3695, 1.442695
        %v3747 = vpow.pop %v3746
        %v3748 = vmul.f32 %v3696, 1.442695
        %v3749 = vpow.pop %v3748
        %v3750 = vmul.f32 %v3697, 1.442695
        %v3751 = vpow.pop %v3750
        %v3752 = vmul.f32 %v3698, 1.442695
        %v3753 = vpow.pop %v3752
        %v3754 = vmul.f32 %v3699, 1.442695
        %v3755 = vpow.pop %v3754
        %v3756 = vmul.f32 %v3700, 1.442695
        %v3757 = vpow.pop %v3756
        %v3758 = vmul.f32 %v3701, 1.442695
        %v3759 = vpow.pop %v3758
        %v3760 = vmul.f32 %v3702, 1.442695
        %v3761 = vpow.pop %v3760
        %v3762 = vmul.f32 %v3703, 1.442695
        %v3763 = vpow.pop %v3762
        %v3764 = vmul.f32 %v3704, 1.442695
        %v3765 = vpow.pop %v3764
        %v3766 = vmul.f32 %v3705, 1.442695
        %v3767 = vpow.pop %v3766
        %v3768 = vmul.f32 %v3706, 1.442695
        %v3769 = vpow.pop %v3768
        %v3770 = vmul.f32 %v3707, 1.442695
        %v3771 = vpow.pop %v3770
        %v3772 = vadd.f32 %v3709, 1.0
        %v3773 = vadd.f32 %v3711, 1.0
        %v3774 = vadd.f32 %v3713, 1.0
        %v3775 = vadd.f32 %v3715, 1.0
        %v3776 = vadd.f32 %v3717, 1.0
        %v3777 = vadd.f32 %v3719, 1.0
        %v3778 = vadd.f32 %v3721, 1.0
        %v3779 = vadd.f32 %v3723, 1.0
        %v3780 = vadd.f32 %v3725, 1.0
        %v3781 = vadd.f32 %v3727, 1.0
        %v3782 = vadd.f32 %v3729, 1.0
        %v3783 = vadd.f32 %v3731, 1.0
        %v3784 = vadd.f32 %v3733, 1.0
        %v3785 = vadd.f32 %v3735, 1.0
        %v3786 = vadd.f32 %v3737, 1.0
        %v3787 = vadd.f32 %v3739, 1.0
        %v3788 = vadd.f32 %v3741, 1.0
        %v3789 = vadd.f32 %v3743, 1.0
        %v3790 = vadd.f32 %v3745, 1.0
        %v3791 = vadd.f32 %v3747, 1.0
        %v3792 = vadd.f32 %v3749, 1.0
        %v3793 = vadd.f32 %v3751, 1.0
        %v3794 = vadd.f32 %v3753, 1.0
        %v3795 = vadd.f32 %v3755, 1.0
        %v3796 = vadd.f32 %v3757, 1.0
        %v3797 = vadd.f32 %v3759, 1.0
        %v3798 = vadd.f32 %v3761, 1.0
        %v3799 = vadd.f32 %v3763, 1.0
        %v3800 = vadd.f32 %v3765, 1.0
        %v3801 = vadd.f32 %v3767, 1.0
        %v3802 = vadd.f32 %v3769, 1.0
        %v3803 = vadd.f32 %v3771, 1.0
        %v3804 = vrcp.pop %v3772
        %v3805 = vmul.f32 1.0, %v3804
        %v3806 = vrcp.pop %v3773
        %v3807 = vmul.f32 1.0, %v3806
        %v3808 = vrcp.pop %v3774
        %v3809 = vmul.f32 1.0, %v3808
        %v3810 = vrcp.pop %v3775
        %v3811 = vmul.f32 1.0, %v3810
        %v3812 = vrcp.pop %v3776
        %v3813 = vmul.f32 1.0, %v3812
        %v3814 = vrcp.pop %v3777
        %v3815 = vmul.f32 1.0, %v3814
        %v3816 = vrcp.pop %v3778
        %v3817 = vmul.f32 1.0, %v3816
        %v3818 = vrcp.pop %v3779
        %v3819 = vmul.f32 1.0, %v3818
        %v3820 = vrcp.pop %v3780
        %v3821 = vmul.f32 1.0, %v3820
        %v3822 = vrcp.pop %v3781
        %v3823 = vmul.f32 1.0, %v3822
        %v3824 = vrcp.pop %v3782
        %v3825 = vmul.f32 1.0, %v3824
        %v3826 = vrcp.pop %v3783
        %v3827 = vmul.f32 1.0, %v3826
        %v3828 = vrcp.pop %v3784
        %v3829 = vmul.f32 1.0, %v3828
        %v3830 = vrcp.pop %v3785
        %v3831 = vmul.f32 1.0, %v3830
        %v3832 = vrcp.pop %v3786
        %v3833 = vmul.f32 1.0, %v3832
        %v3834 = vrcp.pop %v3787
        %v3835 = vmul.f32 1.0, %v3834
        %v3836 = vrcp.pop %v3788
        %v3837 = vmul.f32 1.0, %v3836
        %v3838 = vrcp.pop %v3789
        %v3839 = vmul.f32 1.0, %v3838
        %v3840 = vrcp.pop %v3790
        %v3841 = vmul.f32 1.0, %v3840
        %v3842 = vrcp.pop %v3791
        %v3843 = vmul.f32 1.0, %v3842
        %v3844 = vrcp.pop %v3792
        %v3845 = vmul.f32 1.0, %v3844
        %v3846 = vrcp.pop %v3793
        %v3847 = vmul.f32 1.0, %v3846
        %v3848 = vrcp.pop %v3794
        %v3849 = vmul.f32 1.0, %v3848
        %v3850 = vrcp.pop %v3795
        %v3851 = vmul.f32 1.0, %v3850
        %v3852 = vrcp.pop %v3796
        %v3853 = vmul.f32 1.0, %v3852
        %v3854 = vrcp.pop %v3797
        %v3855 = vmul.f32 1.0, %v3854
        %v3856 = vrcp.pop %v3798
        %v3857 = vmul.f32 1.0, %v3856
        %v3858 = vrcp.pop %v3799
        %v3859 = vmul.f32 1.0, %v3858
        %v3860 = vrcp.pop %v3800
        %v3861 = vmul.f32 1.0, %v3860
        %v3862 = vrcp.pop %v3801
        %v3863 = vmul.f32 1.0, %v3862
        %v3864 = vrcp.pop %v3802
        %v3865 = vmul.f32 1.0, %v3864
        %v3866 = vrcp.pop %v3803
        %v3867 = vmul.f32 1.0, %v3866
        %v3868 = vmul.f32 %v3644, %v3805
        %v3869 = vmul.f32 %v3645, %v3807
        %v3870 = vmul.f32 %v3646, %v3809
        %v3871 = vmul.f32 %v3647, %v3811
        %v3872 = vmul.f32 %v3648, %v3813
        %v3873 = vmul.f32 %v3649, %v3815
        %v3874 = vmul.f32 %v3650, %v3817
        %v3875 = vmul.f32 %v3651, %v3819
        %v3876 = vmul.f32 %v3652, %v3821
        %v3877 = vmul.f32 %v3653, %v3823
        %v3878 = vmul.f32 %v3654, %v3825
        %v3879 = vmul.f32 %v3655, %v3827
        %v3880 = vmul.f32 %v3656, %v3829
        %v3881 = vmul.f32 %v3657, %v3831
        %v3882 = vmul.f32 %v3658, %v3833
        %v3883 = vmul.f32 %v3659, %v3835
        %v3884 = vmul.f32 %v3660, %v3837
        %v3885 = vmul.f32 %v3661, %v3839
        %v3886 = vmul.f32 %v3662, %v3841
        %v3887 = vmul.f32 %v3663, %v3843
        %v3888 = vmul.f32 %v3664, %v3845
        %v3889 = vmul.f32 %v3665, %v3847
        %v3890 = vmul.f32 %v3666, %v3849
        %v3891 = vmul.f32 %v3667, %v3851
        %v3892 = vmul.f32 %v3668, %v3853
        %v3893 = vmul.f32 %v3669, %v3855
        %v3894 = vmul.f32 %v3670, %v3857
        %v3895 = vmul.f32 %v3671, %v3859
        %v3896 = vmul.f32 %v3672, %v3861
        %v3897 = vmul.f32 %v3673, %v3863
        %v3898 = vmul.f32 %v3674, %v3865
        %v3899 = vmul.f32 %v3675, %v3867
        %v3900 = vpack.c.bf16 %v3869, %v3868
        %v3901 = vpack.c.bf16 %v3871, %v3870
        %v3902 = vpack.c.bf16 %v3873, %v3872
        %v3903 = vpack.c.bf16 %v3875, %v3874
        %v3904 = vpack.c.bf16 %v3877, %v3876
        %v3905 = vpack.c.bf16 %v3879, %v3878
        %v3906 = vpack.c.bf16 %v3881, %v3880
        %v3907 = vpack.c.bf16 %v3883, %v3882
        %v3908 = vpack.c.bf16 %v3885, %v3884
        %v3909 = vpack.c.bf16 %v3887, %v3886
        %v3910 = vpack.c.bf16 %v3889, %v3888
        %v3911 = vpack.c.bf16 %v3891, %v3890
        %v3912 = vpack.c.bf16 %v3893, %v3892
        %v3913 = vpack.c.bf16 %v3895, %v3894
        %v3914 = vpack.c.bf16 %v3897, %v3896
        %v3915 = vpack.c.bf16 %v3899, %v3898
        %3916 = vmatprep.subr.bf16.mxu0 0
        %3917 = vmatpush1.bf16.msra.mxu0 %v3900
        %3918 = vmatprep.subr.bf16.mxu0 0
        %3919 = vmatpush1.bf16.msra.mxu0 %v3901
        %3920 = vmatprep.subr.bf16.mxu0 0
        %3921 = vmatpush1.bf16.msra.mxu0 %v3902
        %3922 = vmatprep.subr.bf16.mxu0 0
        %3923 = vmatpush1.bf16.msra.mxu0 %v3903
        %3924 = vmatprep.subr.bf16.mxu0 0
        %3925 = vmatpush1.bf16.msra.mxu0 %v3904
        %3926 = vmatprep.subr.bf16.mxu0 0
        %3927 = vmatpush1.bf16.msra.mxu0 %v3905
        %3928 = vmatprep.subr.bf16.mxu0 0
        %3929 = vmatpush1.bf16.msra.mxu0 %v3906
        %3930 = vmatprep.subr.bf16.mxu0 0
        %3931 = vmatpush1.bf16.msra.mxu0 %v3907
        %3932 = vmatprep.subr.bf16.mxu0 0
        %3933 = vmatpush1.bf16.msra.mxu0 %v3908
        %3934 = vmatprep.subr.bf16.mxu0 0
        %3935 = vmatpush1.bf16.msra.mxu0 %v3909
        %3936 = vmatprep.subr.bf16.mxu0 0
        %3937 = vmatpush1.bf16.msra.mxu0 %v3910
        %3938 = vmatprep.subr.bf16.mxu0 0
        %3939 = vmatpush1.bf16.msra.mxu0 %v3911
        %3940 = vmatprep.subr.bf16.mxu0 0
        %3941 = vmatpush1.bf16.msra.mxu0 %v3912
        %3942 = vmatprep.subr.bf16.mxu0 0
        %3943 = vmatpush1.bf16.msra.mxu0 %v3913
        %3944 = vmatprep.subr.bf16.mxu0 0
        %3945 = vmatpush1.bf16.msra.mxu0 %v3914
        %3946 = vmatprep.subr.bf16.mxu0 0
        %3947 = vmatpush1.bf16.msra.mxu0 %v3915
        %3948 = vmatprep.mubr.bf16.mxu0 998259584
        %3949 = vmatmul.mubr.bf16.gmra.mrb[0].mxu0 998259584
        %v3950 = vpop.f32.mrb[0].mxu0
        %v3951 = vadd.f32 0.0, %v3950
        %v3952 = vpop.f32.mrb[0].mxu0
        %v3953 = vpop.f32.mrb[0].mxu0
        %v3954 = vpop.f32.mrb[0].mxu0
        %3955 = vdwg.mxu0
        %v3956 = vpack.c.bf16 %v3951, %v3951
        %v3957 = vld [vmem:[%s8] sm:$0xf]
        %v3958 = vld [vmem:[%s8 + $0x4] sm:$0xf]
        %v3959 = vld [vmem:[%s8 + $0x8] sm:$0xf]
        %v3960 = vld [vmem:[%s8 + $0xc] sm:$0xf]
        %v3961 = vld [vmem:[%s8 + $0x10] sm:$0xf]
        %v3962 = vld [vmem:[%s8 + $0x14] sm:$0xf]
        %v3963 = vld [vmem:[%s8 + $0x18] sm:$0xf]
        %v3964 = vld [vmem:[%s8 + $0x1c] sm:$0xf]
        %v3965 = vld [vmem:[%s8 + $0x20] sm:$0xf]
        %v3966 = vld [vmem:[%s8 + $0x24] sm:$0xf]
        %v3967 = vld [vmem:[%s8 + $0x28] sm:$0xf]
        %v3968 = vld [vmem:[%s8 + $0x2c] sm:$0xf]
        %v3969 = vld [vmem:[%s8 + $0x30] sm:$0xf]
        %v3970 = vld [vmem:[%s8 + $0x34] sm:$0xf]
        %v3971 = vld [vmem:[%s8 + $0x38] sm:$0xf]
        %v3972 = vld [vmem:[%s8 + $0x3c] sm:$0xf]
        %v3973 = vld [vmem:[%s1 + $0xc] sm:$0x1]
        %v3990 = vunpack.c.l.b16 %v3957
        %v3991 = vunpack.c.l.b16 %v3958
        %v3992 = vunpack.c.l.b16 %v3959
        %v3993 = vunpack.c.l.b16 %v3960
        %v3994 = vunpack.c.l.b16 %v3961
        %v3995 = vunpack.c.l.b16 %v3962
        %v3996 = vunpack.c.l.b16 %v3963
        %v3997 = vunpack.c.l.b16 %v3964
        %v3998 = vunpack.c.l.b16 %v3965
        %v3999 = vunpack.c.l.b16 %v3966
        %v4000 = vunpack.c.l.b16 %v3967
        %v4001 = vunpack.c.l.b16 %v3968
        %v4002 = vunpack.c.l.b16 %v3969
        %v4003 = vunpack.c.l.b16 %v3970
        %v4004 = vunpack.c.l.b16 %v3971
        %v4005 = vunpack.c.l.b16 %v3972
        %v4006 = vpack.c.b16 %v3991, %v3990
        %v4007 = vpack.c.b16 %v3993, %v3992
        %v4008 = vpack.c.b16 %v3995, %v3994
        %v4009 = vpack.c.b16 %v3997, %v3996
        %v4010 = vpack.c.b16 %v3999, %v3998
        %v4011 = vpack.c.b16 %v4001, %v4000
        %v4012 = vpack.c.b16 %v4003, %v4002
        %v4013 = vpack.c.b16 %v4005, %v4004
        %4022 = vmatprep.subr.bf16.mxu0 0
        %4023 = vmatpush1.bf16.msra.mxu0 %v4006
        %4024 = vmatprep.subr.bf16.mxu0 0
        %4025 = vmatpush1.bf16.msra.mxu0 %v4007
        %4026 = vmatprep.subr.bf16.mxu0 0
        %4027 = vmatpush1.bf16.msra.mxu0 %v4008
        %4028 = vmatprep.subr.bf16.mxu0 0
        %4029 = vmatpush1.bf16.msra.mxu0 %v4009
        %4030 = vmatprep.subr.bf16.mxu0 0
        %4031 = vmatpush1.bf16.msra.mxu0 %v4010
        %4032 = vmatprep.subr.bf16.mxu0 0
        %4033 = vmatpush1.bf16.msra.mxu0 %v4011
        %4034 = vmatprep.subr.bf16.mxu0 0
        %4035 = vmatpush1.bf16.msra.mxu0 %v4012
        %4036 = vmatprep.subr.bf16.mxu0 0
        %4037 = vmatpush1.bf16.msra.mxu0 %v4013
        %4038 = vmatprep.subr.bf16.mxu0 0
        %4039 = vmatpush1.bf16.msra.mxu0 0
        %4040 = vmatprep.subr.bf16.mxu0 0
        %4041 = vmatpush1.bf16.msra.mxu0 0
        %4042 = vmatprep.subr.bf16.mxu0 0
        %4043 = vmatpush1.bf16.msra.mxu0 0
        %4044 = vmatprep.subr.bf16.mxu0 0
        %4045 = vmatpush1.bf16.msra.mxu0 0
        %4046 = vmatprep.subr.bf16.mxu0 0
        %4047 = vmatpush1.bf16.msra.mxu0 0
        %4048 = vmatprep.subr.bf16.mxu0 0
        %4049 = vmatpush1.bf16.msra.mxu0 0
        %4050 = vmatprep.subr.bf16.mxu0 0
        %4051 = vmatpush1.bf16.msra.mxu0 0
        %4052 = vmatprep.subr.bf16.mxu0 0
        %4053 = vmatpush1.bf16.msra.mxu0 0
        %4054 = vmatprep.mubr.bf16.mxu0 0
        %4055 = vmatmul.mubr.bf16.gmra.mrb[0].mxu0 %v3956
        %v4056 = vpop.f32.mrb[0].mxu0
        %v4057 = vadd.f32 %v3973, %v4056
        %v4058 = vpop.f32.mrb[0].mxu0
        %v4059 = vpop.f32.mrb[0].mxu0
        %v4060 = vpop.f32.mrb[0].mxu0
        %4061 = vdwg.mxu0
        %vm4062 = vcmask 8192
        %4063 = vst.msk [vmem:[%s324] sm:$0x1] %vm4062, %v4057
        %s4064 = sand.u32 %s225, 1
        %s4065 = scalar_lea.sflag [#allocation4], %s4064
        %s4066 = sand.u32 %s225, 1
        %s4067 = scalar_lea.vmem [#allocation3], %s4066
        // Predicated region
        $region57: #{tampering_efficientnet_forward.1} parent=55 // pred_check
          %p4068 = pneg %p235
        $region58: #{tampering_efficientnet_forward.1} parent=55 // pred_check_branch
          %4070 = sbr.rel (%p4068) target = $region60
        $region59: #{tampering_efficientnet_forward.1} parent=55 // pred_region
          %s4072 = ssub.s32 16, 16
          %4073 = vsyncadd %s4065, %s4072
          %s4074 = smul.addr %s23, 16
          %s4075 = scalar_lea.hbm %s9, %s4074
          %s4077 = sshll.u32 %s4067, 4
          %s4078 = int_to_ptr.vmem [resolvable:$true] %s4077
          %4080 = dma.vmem_to_hbm [thread:$0]  %s4078, 16, %s4075, %s4065
        $region60: #{tampering_efficientnet_forward.1} parent=55 // pred_fallthru
          _
      $region56: #{tampering_efficientnet_forward.1} parent=5 // pred_fallthru
        _
      %p4081 = scmp.le.s32.totalorder 2, %s18
      // Predicated region
      $region61: #{tampering_efficientnet_forward.1} parent=5 // pred_check
        %p4082 = pneg %p4081
      $region62: #{tampering_efficientnet_forward.1} parent=5 // pred_check_branch
        %4084 = sbr.rel (%p4082) target = $region64
      $region63: #{tampering_efficientnet_forward.1} parent=5 // pred_region
        %s4085 = ssub.s32 %s18, 2
        // Predicated region
        $region65: #{tampering_efficientnet_forward.1} parent=63 // pred_check
          %p4086 = pneg %p241
        $region66: #{tampering_efficientnet_forward.1} parent=63 // pred_check_branch
          %4088 = sbr.rel (%p4086) target = $region68
        $region67: #{tampering_efficientnet_forward.1} parent=63 // pred_region
          %s4089 = sand.u32 %s226, 1
          %s4090 = scalar_lea.sflag [#allocation4], %s4089
          %s4091 = sand.u32 %s226, 1
          %s4092 = scalar_lea.vmem [#allocation3], %s4091
          %4093 = dma.done %s4090, 16
        $region68: #{tampering_efficientnet_forward.1} parent=63 // pred_fallthru
          _
      $region64: #{tampering_efficientnet_forward.1} parent=5 // pred_fallthru
        _
    $region6: #{tampering_efficientnet_forward.1} parent=1 // loop_footer
      %s22 = sadd.s32 1, %s18
    $region7: #{tampering_efficientnet_forward.1} parent=1 // loop_footer_branch
      %17 = sbr.rel target = $region3
    $region8: #{tampering_efficientnet_forward.1} parent=1 // loop_exit
      _
    %4094 = vsyncpa [#allocation4], 1
    %s4095 = scalar_lea.sflag [#allocation4], 1
    %4096 = vsyncpa %s4095, 1

</llo_original>
